<compile_context>
chip_gen: v7x
topology: tpu7x:2x2x1
jax: 0.10.0
libtpu: 0.0.40
codegen_flags: <defaults>
</compile_context>

<pallas_src>
import jax
import jax.numpy as jnp
from jax import lax
from jax.experimental import pallas as pl
from jax.experimental.pallas import tpu as pltpu


def _round_up(x, m):
    return ((x + m - 1) // m) * m


# Fused gate-column layout (width 8H):  [ i_f | i_b | f_f | f_b | g_f | g_b | o_f | o_b ]
_GATE_SCALE = (0.5, 0.5, 1.0, 0.5)   # PyTorch gate order (i, f, g, o); 0.5 folded for sigmoids


# --------------------------------- fused network kernel ---------------------------------
def _make_kernel(T, Bp, H, Fp, L):
    TWO_H = 2 * H
    G = 8 * H

    def kernel(*refs):
        x_ref = refs[0]
        w_refs = refs[1:1 + L]            # per-layer packed [W_ih ; W_hh]  (bf16)
        bias_ref = refs[1 + L]            # (L+1, 8H) f32: fused biases + [w_lin|b_lin]
        y_ref = refs[2 + L]
        gx_scr, hf_scr, hb_scr = refs[3 + L:6 + L]

        bias_all = bias_ref[...]                                   # (L+1, 8H) f32

        # Per-lane constants (computed once; comparisons only).
        lane = lax.broadcasted_iota(jnp.int32, (Bp, G), 1)
        is_bwd = (lane >= H) & (lane < TWO_H)
        for k in range(1, 4):
            is_bwd = is_bwd | ((lane >= (2 * k + 1) * H) & (lane < (2 * k + 2) * H))
        is_g = (lane >= 4 * H) & (lane < 6 * H)
        post_scale = jnp.where(is_g, 1.0, 0.5).astype(jnp.float32)
        post_bias = jnp.where(is_g, 0.0, 0.5).astype(jnp.float32)

        for l in range(L):
            w_ref = w_refs[l]
            b = bias_all[l:l + 1, :]                               # (1, 8H)

            # ---- Hoisted input projection: one/two big MXU matmuls per layer ----
            if l == 0:
                gx = jnp.dot(x_ref[...], w_ref[0:Fp, :],
                             preferred_element_type=jnp.float32) + b
                whh = w_ref[Fp:Fp + TWO_H, :]                      # (2H, 8H) block-diag bf16
            else:
                hf_in = hf_scr[...].astype(jnp.bfloat16)           # prev-layer fwd outs
                hb_in = hb_scr[...].astype(jnp.bfloat16)           # prev-layer bwd outs
                gx = (jnp.dot(hf_in, w_ref[0:H, :], preferred_element_type=jnp.float32)
                      + jnp.dot(hb_in, w_ref[H:TWO_H, :], preferred_element_type=jnp.float32)
                      + b)
                whh = w_ref[TWO_H:2 * TWO_H, :]

            # Time-reverse the backward-direction gate lanes once (outside the serial
            # recurrence) so the time loop reads a single contiguous row block.
            for t in range(T):
                tb = T - 1 - t
                gx_scr[t * Bp:(t + 1) * Bp, :] = jnp.where(
                    is_bwd, gx[tb * Bp:(tb + 1) * Bp, :], gx[t * Bp:(t + 1) * Bp, :])

            # ---- Serial recurrence: both directions fused into one (Bp, 2H) state ----
            h = jnp.zeros((Bp, TWO_H), jnp.float32)
            c = jnp.zeros((Bp, TWO_H), jnp.float32)
            for t in range(T):
                pre = gx_scr[t * Bp:(t + 1) * Bp, :] + jnp.dot(
                    h.astype(jnp.bfloat16), whh, preferred_element_type=jnp.float32)
                act = jnp.tanh(pre) * post_scale + post_bias       # 1 EUP pass, all gates
                i_g = act[:, 0 * TWO_H:1 * TWO_H]
                f_g = act[:, 1 * TWO_H:2 * TWO_H]
                g_g = act[:, 2 * TWO_H:3 * TWO_H]
                o_g = act[:, 3 * TWO_H:4 * TWO_H]
                c = f_g * c + i_g * g_g
                h = o_g * jnp.tanh(c)
                hf_scr[t * Bp:(t + 1) * Bp, :] = h[:, 0:H]                   # fwd h(t)
                hb_scr[(T - 1 - t) * Bp:(T - t) * Bp, :] = h[:, H:TWO_H]     # bwd h(T-1-t)

        # ---- Head: 0.5*(h_f(T-1) + h_b(T-1)) @ W_lin^T + b_lin ----
        h_mean = 0.5 * (hf_scr[(T - 1) * Bp:T * Bp, :] + hb_scr[(T - 1) * Bp:T * Bp, :])
        w_lin = bias_all[L:L + 1, 0:H]
        b_lin = bias_all[L:L + 1, H:H + 1]
        y = jnp.sum(h_mean * w_lin, axis=-1, keepdims=True) + b_lin
        y_ref[...] = y.astype(y_ref.dtype)

    return kernel


# ------------------------------------- forward wrapper ----------------------------------
def radar_bilstm_forward(x, packed):
    """x: (B, T, n_features) batch_first, like the PyTorch module.  Returns (B, 1)."""
    B, T, F = x.shape
    H, L, Fp = packed["n_hidden"], packed["n_layers"], packed["fp"]
    Bp = _round_up(B, 8)                                           # full sublane batch

    x_tm = jnp.transpose(x, (1, 0, 2)).astype(jnp.float32)         # (T, B, F) time-major
    x_tm = jnp.pad(x_tm, ((0, 0), (0, Bp - B), (0, Fp - F)))       # (T, Bp, Fp)
    x2d = x_tm.reshape(T * Bp, Fp).astype(jnp.bfloat16)

    vmem = pl.BlockSpec(memory_space=pltpu.MemorySpace.VMEM)
    kernel = _make_kernel(T, Bp, H, Fp, L)
    # NOTE: total VMEM use is well under the scoped default; re-tile per batch chunk
    # (or raise vmem_limit_bytes) only if B is scaled up dramatically.
    y_p = pl.pallas_call(
        kernel,
        out_shape=jax.ShapeDtypeStruct((Bp, 1), jnp.float32),
        in_specs=[vmem] * (L + 2),
        out_specs=vmem,
        scratch_shapes=[
            pltpu.VMEM((T * Bp, 8 * H), jnp.float32),   # gx (bwd lanes time-reversed)
            pltpu.VMEM((T * Bp, H), jnp.float32),       # per-layer fwd hidden states
            pltpu.VMEM((T * Bp, H), jnp.float32),       # per-layer bwd hidden states
        ],
    )(x2d, *packed["w"], packed["bias"])
    return y_p[:B]


# -------------------------------------- parameter init ----------------------------------
def init_params(key, n_features, n_hidden, n_layers):
    """Raw PyTorch-layout params: U(-1/sqrt(H), 1/sqrt(H)) like nn.LSTM / nn.Linear."""
    k = 1.0 / float(n_hidden) ** 0.5

    def u(sk, shape):
        return jax.random.uniform(sk, shape, jnp.float32, -k, k)

    layers = []
    for l in range(n_layers):
        d_in = n_features if l == 0 else 2 * n_hidden
        ks = jax.random.split(jax.random.fold_in(key, l), 8)
        layers.append(dict(
            w_ih_f=u(ks[0], (4 * n_hidden, d_in)),
            w_hh_f=u(ks[1], (4 * n_hidden, n_hidden)),
            b_ih_f=u(ks[2], (4 * n_hidden,)),
            b_hh_f=u(ks[3], (4 * n_hidden,)),
            w_ih_b=u(ks[4], (4 * n_hidden, d_in)),
            w_hh_b=u(ks[5], (4 * n_hidden, n_hidden)),
            b_ih_b=u(ks[6], (4 * n_hidden,)),
            b_hh_b=u(ks[7], (4 * n_hidden,)),
        ))
    k1, k2 = jax.random.split(jax.random.fold_in(key, 10_000))
    return dict(n_features=n_features, n_hidden=n_hidden, n_layers=n_layers,
                lstm=layers, w_lin=u(k1, (1, n_hidden)), b_lin=u(k2, (1,)))


def pack_params(raw):
    """One-time packing into the fused, direction-interleaved, pre-scaled kernel layout."""
    H, L, F = raw["n_hidden"], raw["n_layers"], raw["n_features"]
    Fp = _round_up(F, 16)                       # bf16 sublane-tile aligned row split

    def fuse_cols(w_f, w_b):
        # w_*: (D_in, 4H) with PyTorch gate order (i,f,g,o) along columns →
        # (D_in, 8H) in layout [i_f,i_b,f_f,f_b,g_f,g_b,o_f,o_b], sigmoid gates *0.5.
        cols = []
        for g, s in enumerate(_GATE_SCALE):
            cols.append(s * w_f[:, g * H:(g + 1) * H])
            cols.append(s * w_b[:, g * H:(g + 1) * H])
        return jnp.concatenate(cols, axis=1)

    w_packed, biases = [], []
    for l in range(L):
        p = raw["lstm"][l]
        wih = fuse_cols(p["w_ih_f"].T, p["w_ih_b"].T)              # (D_in, 8H)
        zf = jnp.zeros_like(p["w_hh_f"].T)                         # (H, 4H)
        whh = fuse_cols(jnp.concatenate([p["w_hh_f"].T, zf], axis=0),
                        jnp.concatenate([zf, p["w_hh_b"].T], axis=0))   # (2H, 8H) block-diag
        if l == 0:
            wih = jnp.pad(wih, ((0, Fp - wih.shape[0]), (0, 0)))
        w_packed.append(jnp.concatenate([wih, whh], axis=0).astype(jnp.bfloat16))
        biases.append(fuse_cols((p["b_ih_f"] + p["b_hh_f"])[None, :],
                                (p["b_ih_b"] + p["b_hh_b"])[None, :]))  # (1, 8H), b_ih+b_hh

    head = jnp.zeros((1, 8 * H), jnp.float32)
    head = head.at[0, 0:H].set(raw["w_lin"][0])
    head = head.at[0, H].set(raw["b_lin"][0])
    bias_buf = jnp.concatenate(biases + [head], axis=0).astype(jnp.float32)   # (L+1, 8H)

    return dict(n_hidden=H, n_layers=L, n_features=F, fp=Fp, w=w_packed, bias=bias_buf)


# -------------------------------------- pure-JAX reference ------------------------------
def _reference_forward(x, raw):
    B, T, F = x.shape
    H = raw["n_hidden"]
    xin = jnp.transpose(x, (1, 0, 2)).astype(jnp.float32)          # (T, B, D)
    hf = hb = None
    for l in range(raw["n_layers"]):
        p = raw["lstm"][l]

        def run(seq, w_ih, w_hh, b_ih, b_hh):
            wi, wh, b = w_ih.T, w_hh.T, b_ih + b_hh

            def cell(carry, x_t):
                h, c = carry
                z = x_t @ wi + h @ wh + b
                i = jax.nn.sigmoid(z[:, 0:H])
                f = jax.nn.sigmoid(z[:, H:2 * H])
                g = jnp.tanh(z[:, 2 * H:3 * H])
                o = jax.nn.sigmoid(z[:, 3 * H:4 * H])
                c = f * c + i * g
                h = o * jnp.tanh(c)
                return (h, c), h

            init = (jnp.zeros((B, H), jnp.float32), jnp.zeros((B, H), jnp.float32))
            return lax.scan(cell, init, seq)[1]

        hf = run(xin, p["w_ih_f"], p["w_hh_f"], p["b_ih_f"], p["b_hh_f"])
        hb = run(xin[::-1], p["w_ih_b"], p["w_hh_b"], p["b_ih_b"], p["b_hh_b"])[::-1]
        xin = jnp.concatenate([hf, hb], axis=-1)
    h_mean = 0.5 * (hf[-1] + hb[-1])
    return h_mean @ raw["w_lin"].T + raw["b_lin"]


if __name__ == "__main__":
    # Small shapes consistent with the module's forward: (batch, seq, features)
    B, T, F, H, L = 2, 8, 16, 32, 3
    key = jax.random.PRNGKey(0)
    kx, kp = jax.random.split(key)
    x = jax.random.normal(kx, (B, T, F), dtype=jnp.float32)

    raw = init_params(kp, n_features=F, n_hidden=H, n_layers=L)
    packed = pack_params(raw)

    y = jax.block_until_ready(radar_bilstm_forward(x, packed))
    assert y.shape == (B, 1) and y.dtype == jnp.float32

    y_ref = jax.block_until_ready(_reference_forward(x, raw))
    # bf16 MXU operands (with f32 accumulation and f32 cell state) introduce a small
    # drift vs. the pure-f32 reference, hence the relaxed tolerance.
    assert jnp.allclose(y, y_ref, rtol=2e-2, atol=2e-2), (y, y_ref)

    print("KERNEL_OK")
</pallas_src>

<mosaic_0001>
module attributes {stable_mosaic.version = 11 : i64} {
  func.func @kernel(%arg0: memref<64x16xbf16, #tpu.memory_space<vmem>>, %arg1: memref<80x256xbf16, #tpu.memory_space<vmem>>, %arg2: memref<128x256xbf16, #tpu.memory_space<vmem>>, %arg3: memref<128x256xbf16, #tpu.memory_space<vmem>>, %arg4: memref<4x256xf32, #tpu.memory_space<vmem>>, %arg5: memref<8x1xf32, #tpu.memory_space<vmem>>, %arg6: memref<64x256xf32, #tpu.memory_space<vmem>>, %arg7: memref<64x32xf32, #tpu.memory_space<vmem>>, %arg8: memref<64x32xf32, #tpu.memory_space<vmem>>) attributes {dimension_semantics = [], scalar_prefetch = 0 : i64, scratch_operands = 3 : i64, tpu.core_type = #tpu.core_type<tc>} {
    %c0 = arith.constant 0 : index
    %c0_0 = arith.constant 0 : index
    %0 = vector.load %arg4[%c0, %c0_0] : memref<4x256xf32, #tpu.memory_space<vmem>>, vector<4x256xf32>
    %1 = tpu.iota {dimensions = array<i32: 1>} : vector<8x256xi32>
    %c32_i32 = arith.constant 32 : i32
    %2 = vector.broadcast %c32_i32 : i32 to vector<8x256xi32>
    %3 = arith.cmpi sge, %1, %2 : vector<8x256xi32>
    %c64_i32 = arith.constant 64 : i32
    %4 = vector.broadcast %c64_i32 : i32 to vector<8x256xi32>
    %5 = arith.cmpi slt, %1, %4 : vector<8x256xi32>
    %6 = arith.andi %3, %5 : vector<8x256xi1>
    %c96_i32 = arith.constant 96 : i32
    %7 = vector.broadcast %c96_i32 : i32 to vector<8x256xi32>
    %8 = arith.cmpi sge, %1, %7 : vector<8x256xi32>
    %c128_i32 = arith.constant 128 : i32
    %9 = vector.broadcast %c128_i32 : i32 to vector<8x256xi32>
    %10 = arith.cmpi slt, %1, %9 : vector<8x256xi32>
    %11 = arith.andi %8, %10 : vector<8x256xi1>
    %12 = arith.ori %6, %11 : vector<8x256xi1>
    %c160_i32 = arith.constant 160 : i32
    %13 = vector.broadcast %c160_i32 : i32 to vector<8x256xi32>
    %14 = arith.cmpi sge, %1, %13 : vector<8x256xi32>
    %c192_i32 = arith.constant 192 : i32
    %15 = vector.broadcast %c192_i32 : i32 to vector<8x256xi32>
    %16 = arith.cmpi slt, %1, %15 : vector<8x256xi32>
    %17 = arith.andi %14, %16 : vector<8x256xi1>
    %18 = arith.ori %12, %17 : vector<8x256xi1>
    %c224_i32 = arith.constant 224 : i32
    %19 = vector.broadcast %c224_i32 : i32 to vector<8x256xi32>
    %20 = arith.cmpi sge, %1, %19 : vector<8x256xi32>
    %c256_i32 = arith.constant 256 : i32
    %21 = vector.broadcast %c256_i32 : i32 to vector<8x256xi32>
    %22 = arith.cmpi slt, %1, %21 : vector<8x256xi32>
    %23 = arith.andi %20, %22 : vector<8x256xi1>
    %24 = arith.ori %18, %23 : vector<8x256xi1>
    %c128_i32_1 = arith.constant 128 : i32
    %25 = vector.broadcast %c128_i32_1 : i32 to vector<8x256xi32>
    %26 = arith.cmpi sge, %1, %25 : vector<8x256xi32>
    %c192_i32_2 = arith.constant 192 : i32
    %27 = vector.broadcast %c192_i32_2 : i32 to vector<8x256xi32>
    %28 = arith.cmpi slt, %1, %27 : vector<8x256xi32>
    %29 = arith.andi %26, %28 : vector<8x256xi1>
    %cst = arith.constant 1.000000e+00 : f32
    %cst_3 = arith.constant 5.000000e-01 : f32
    %30 = vector.broadcast %cst : f32 to vector<8x256xf32>
    %31 = vector.broadcast %cst_3 : f32 to vector<8x256xf32>
    %32 = arith.select %29, %30, %31 : vector<8x256xi1>, vector<8x256xf32>
    %cst_4 = arith.constant 0.000000e+00 : f32
    %cst_5 = arith.constant 5.000000e-01 : f32
    %33 = vector.broadcast %cst_4 : f32 to vector<8x256xf32>
    %34 = vector.broadcast %cst_5 : f32 to vector<8x256xf32>
    %35 = arith.select %29, %33, %34 : vector<8x256xi1>, vector<8x256xf32>
    %36 = vector.extract_strided_slice %0 {offsets = [0, 0], sizes = [1, 256], strides = [1, 1]} : vector<4x256xf32> to vector<1x256xf32>
    %c0_6 = arith.constant 0 : index
    %c0_7 = arith.constant 0 : index
    %37 = vector.load %arg0[%c0_6, %c0_7] : memref<64x16xbf16, #tpu.memory_space<vmem>>, vector<64x16xbf16>
    %c0_8 = arith.constant 0 : index
    %c0_9 = arith.constant 0 : index
    %38 = vector.load %arg1[%c0_8, %c0_9] : memref<80x256xbf16, #tpu.memory_space<vmem>>, vector<16x256xbf16>
    %cst_10 = arith.constant dense<0.000000e+00> : vector<64x256xf32>
    %39 = tpu.matmul %37, %38, %cst_10 {dimension_numbers = #tpu.dot_dimension_numbers<[1], [0], [0], [1], [0, 0, 1, 1], [], []>} : vector<64x16xbf16>, vector<16x256xbf16>, vector<64x256xf32> -> vector<64x256xf32>
    %40 = vector.broadcast %36 : vector<1x256xf32> to vector<64x256xf32>
    %41 = arith.addf %39, %40 : vector<64x256xf32>
    %c16 = arith.constant 16 : index
    %c0_11 = arith.constant 0 : index
    %42 = vector.load %arg1[%c16, %c0_11] : memref<80x256xbf16, #tpu.memory_space<vmem>>, vector<64x256xbf16>
    %43 = vector.extract_strided_slice %41 {offsets = [56, 0], sizes = [8, 256], strides = [1, 1]} : vector<64x256xf32> to vector<8x256xf32>
    %44 = vector.extract_strided_slice %41 {offsets = [0, 0], sizes = [8, 256], strides = [1, 1]} : vector<64x256xf32> to vector<8x256xf32>
    %45 = arith.select %24, %43, %44 : vector<8x256xi1>, vector<8x256xf32>
    %c0_12 = arith.constant 0 : index
    %c0_13 = arith.constant 0 : index
    %46 = vector.load %arg6[%c0_12, %c0_13] : memref<64x256xf32, #tpu.memory_space<vmem>>, vector<8x256xf32>
    tpu.vector_store %arg6[%c0_12, %c0_13], %45 {strides = array<i32>} : memref<64x256xf32, #tpu.memory_space<vmem>>, vector<8x256xf32>,
    %47 = vector.extract_strided_slice %41 {offsets = [48, 0], sizes = [8, 256], strides = [1, 1]} : vector<64x256xf32> to vector<8x256xf32>
    %48 = vector.extract_strided_slice %41 {offsets = [8, 0], sizes = [8, 256], strides = [1, 1]} : vector<64x256xf32> to vector<8x256xf32>
    %49 = arith.select %24, %47, %48 : vector<8x256xi1>, vector<8x256xf32>
    %c8 = arith.constant 8 : index
    %c0_14 = arith.constant 0 : index
    %50 = vector.load %arg6[%c8, %c0_14] : memref<64x256xf32, #tpu.memory_space<vmem>>, vector<8x256xf32>
    tpu.vector_store %arg6[%c8, %c0_14], %49 {strides = array<i32>} : memref<64x256xf32, #tpu.memory_space<vmem>>, vector<8x256xf32>,
    %51 = vector.extract_strided_slice %41 {offsets = [40, 0], sizes = [8, 256], strides = [1, 1]} : vector<64x256xf32> to vector<8x256xf32>
    %52 = vector.extract_strided_slice %41 {offsets = [16, 0], sizes = [8, 256], strides = [1, 1]} : vector<64x256xf32> to vector<8x256xf32>
    %53 = arith.select %24, %51, %52 : vector<8x256xi1>, vector<8x256xf32>
    %c16_15 = arith.constant 16 : index
    %c0_16 = arith.constant 0 : index
    %54 = vector.load %arg6[%c16_15, %c0_16] : memref<64x256xf32, #tpu.memory_space<vmem>>, vector<8x256xf32>
    tpu.vector_store %arg6[%c16_15, %c0_16], %53 {strides = array<i32>} : memref<64x256xf32, #tpu.memory_space<vmem>>, vector<8x256xf32>,
    %55 = vector.extract_strided_slice %41 {offsets = [32, 0], sizes = [8, 256], strides = [1, 1]} : vector<64x256xf32> to vector<8x256xf32>
    %56 = vector.extract_strided_slice %41 {offsets = [24, 0], sizes = [8, 256], strides = [1, 1]} : vector<64x256xf32> to vector<8x256xf32>
    %57 = arith.select %24, %55, %56 : vector<8x256xi1>, vector<8x256xf32>
    %c24 = arith.constant 24 : index
    %c0_17 = arith.constant 0 : index
    %58 = vector.load %arg6[%c24, %c0_17] : memref<64x256xf32, #tpu.memory_space<vmem>>, vector<8x256xf32>
    tpu.vector_store %arg6[%c24, %c0_17], %57 {strides = array<i32>} : memref<64x256xf32, #tpu.memory_space<vmem>>, vector<8x256xf32>,
    %59 = vector.extract_strided_slice %41 {offsets = [24, 0], sizes = [8, 256], strides = [1, 1]} : vector<64x256xf32> to vector<8x256xf32>
    %60 = vector.extract_strided_slice %41 {offsets = [32, 0], sizes = [8, 256], strides = [1, 1]} : vector<64x256xf32> to vector<8x256xf32>
    %61 = arith.select %24, %59, %60 : vector<8x256xi1>, vector<8x256xf32>
    %c32 = arith.constant 32 : index
    %c0_18 = arith.constant 0 : index
    %62 = vector.load %arg6[%c32, %c0_18] : memref<64x256xf32, #tpu.memory_space<vmem>>, vector<8x256xf32>
    tpu.vector_store %arg6[%c32, %c0_18], %61 {strides = array<i32>} : memref<64x256xf32, #tpu.memory_space<vmem>>, vector<8x256xf32>,
    %63 = vector.extract_strided_slice %41 {offsets = [16, 0], sizes = [8, 256], strides = [1, 1]} : vector<64x256xf32> to vector<8x256xf32>
    %64 = vector.extract_strided_slice %41 {offsets = [40, 0], sizes = [8, 256], strides = [1, 1]} : vector<64x256xf32> to vector<8x256xf32>
    %65 = arith.select %24, %63, %64 : vector<8x256xi1>, vector<8x256xf32>
    %c40 = arith.constant 40 : index
    %c0_19 = arith.constant 0 : index
    %66 = vector.load %arg6[%c40, %c0_19] : memref<64x256xf32, #tpu.memory_space<vmem>>, vector<8x256xf32>
    tpu.vector_store %arg6[%c40, %c0_19], %65 {strides = array<i32>} : memref<64x256xf32, #tpu.memory_space<vmem>>, vector<8x256xf32>,
    %67 = vector.extract_strided_slice %41 {offsets = [8, 0], sizes = [8, 256], strides = [1, 1]} : vector<64x256xf32> to vector<8x256xf32>
    %68 = vector.extract_strided_slice %41 {offsets = [48, 0], sizes = [8, 256], strides = [1, 1]} : vector<64x256xf32> to vector<8x256xf32>
    %69 = arith.select %24, %67, %68 : vector<8x256xi1>, vector<8x256xf32>
    %c48 = arith.constant 48 : index
    %c0_20 = arith.constant 0 : index
    %70 = vector.load %arg6[%c48, %c0_20] : memref<64x256xf32, #tpu.memory_space<vmem>>, vector<8x256xf32>
    tpu.vector_store %arg6[%c48, %c0_20], %69 {strides = array<i32>} : memref<64x256xf32, #tpu.memory_space<vmem>>, vector<8x256xf32>,
    %71 = vector.extract_strided_slice %41 {offsets = [0, 0], sizes = [8, 256], strides = [1, 1]} : vector<64x256xf32> to vector<8x256xf32>
    %72 = vector.extract_strided_slice %41 {offsets = [56, 0], sizes = [8, 256], strides = [1, 1]} : vector<64x256xf32> to vector<8x256xf32>
    %73 = arith.select %24, %71, %72 : vector<8x256xi1>, vector<8x256xf32>
    %c56 = arith.constant 56 : index
    %c0_21 = arith.constant 0 : index
    %74 = vector.load %arg6[%c56, %c0_21] : memref<64x256xf32, #tpu.memory_space<vmem>>, vector<8x256xf32>
    tpu.vector_store %arg6[%c56, %c0_21], %73 {strides = array<i32>} : memref<64x256xf32, #tpu.memory_space<vmem>>, vector<8x256xf32>,
    %cst_22 = arith.constant 0.000000e+00 : f32
    %75 = vector.broadcast %cst_22 : f32 to vector<8x64xf32>
    %cst_23 = arith.constant 0.000000e+00 : f32
    %76 = vector.broadcast %cst_23 : f32 to vector<8x64xf32>
    %c0_24 = arith.constant 0 : index
    %c0_25 = arith.constant 0 : index
    %77 = vector.load %arg6[%c0_24, %c0_25] : memref<64x256xf32, #tpu.memory_space<vmem>>, vector<8x256xf32>
    %78 = arith.truncf %75 : vector<8x64xf32> to vector<8x64xbf16>
    %cst_26 = arith.constant dense<0.000000e+00> : vector<8x256xf32>
    %79 = tpu.matmul %78, %42, %cst_26 {dimension_numbers = #tpu.dot_dimension_numbers<[1], [0], [0], [1], [0, 0, 1, 1], [], []>} : vector<8x64xbf16>, vector<64x256xbf16>, vector<8x256xf32> -> vector<8x256xf32>
    %80 = arith.addf %77, %79 : vector<8x256xf32>
    %81 = math.tanh %80 : vector<8x256xf32>
    %82 = arith.mulf %81, %32 : vector<8x256xf32>
    %83 = arith.addf %82, %35 : vector<8x256xf32>
    %84 = vector.extract_strided_slice %83 {offsets = [0, 0], sizes = [8, 64], strides = [1, 1]} : vector<8x256xf32> to vector<8x64xf32>
    %85 = vector.extract_strided_slice %83 {offsets = [0, 64], sizes = [8, 64], strides = [1, 1]} : vector<8x256xf32> to vector<8x64xf32>
    %86 = vector.extract_strided_slice %83 {offsets = [0, 128], sizes = [8, 64], strides = [1, 1]} : vector<8x256xf32> to vector<8x64xf32>
    %87 = vector.extract_strided_slice %83 {offsets = [0, 192], sizes = [8, 64], strides = [1, 1]} : vector<8x256xf32> to vector<8x64xf32>
    %88 = arith.mulf %85, %76 : vector<8x64xf32>
    %89 = arith.mulf %84, %86 : vector<8x64xf32>
    %90 = arith.addf %88, %89 : vector<8x64xf32>
    %91 = math.tanh %90 : vector<8x64xf32>
    %92 = arith.mulf %87, %91 : vector<8x64xf32>
    %93 = vector.extract_strided_slice %92 {offsets = [0, 0], sizes = [8, 32], strides = [1, 1]} : vector<8x64xf32> to vector<8x32xf32>
    %c0_27 = arith.constant 0 : index
    %c0_28 = arith.constant 0 : index
    %94 = vector.load %arg7[%c0_27, %c0_28] : memref<64x32xf32, #tpu.memory_space<vmem>>, vector<8x32xf32>
    tpu.vector_store %arg7[%c0_27, %c0_28], %93 {strides = array<i32>} : memref<64x32xf32, #tpu.memory_space<vmem>>, vector<8x32xf32>,
    %95 = vector.extract_strided_slice %92 {offsets = [0, 32], sizes = [8, 32], strides = [1, 1]} : vector<8x64xf32> to vector<8x32xf32>
    %c56_29 = arith.constant 56 : index
    %c0_30 = arith.constant 0 : index
    %96 = vector.load %arg8[%c56_29, %c0_30] : memref<64x32xf32, #tpu.memory_space<vmem>>, vector<8x32xf32>
    tpu.vector_store %arg8[%c56_29, %c0_30], %95 {strides = array<i32>} : memref<64x32xf32, #tpu.memory_space<vmem>>, vector<8x32xf32>,
    %c8_31 = arith.constant 8 : index
    %c0_32 = arith.constant 0 : index
    %97 = vector.load %arg6[%c8_31, %c0_32] : memref<64x256xf32, #tpu.memory_space<vmem>>, vector<8x256xf32>
    %98 = arith.truncf %92 : vector<8x64xf32> to vector<8x64xbf16>
    %cst_33 = arith.constant dense<0.000000e+00> : vector<8x256xf32>
    %99 = tpu.matmul %98, %42, %cst_33 {dimension_numbers = #tpu.dot_dimension_numbers<[1], [0], [0], [1], [0, 0, 1, 1], [], []>} : vector<8x64xbf16>, vector<64x256xbf16>, vector<8x256xf32> -> vector<8x256xf32>
    %100 = arith.addf %97, %99 : vector<8x256xf32>
    %101 = math.tanh %100 : vector<8x256xf32>
    %102 = arith.mulf %101, %32 : vector<8x256xf32>
    %103 = arith.addf %102, %35 : vector<8x256xf32>
    %104 = vector.extract_strided_slice %103 {offsets = [0, 0], sizes = [8, 64], strides = [1, 1]} : vector<8x256xf32> to vector<8x64xf32>
    %105 = vector.extract_strided_slice %103 {offsets = [0, 64], sizes = [8, 64], strides = [1, 1]} : vector<8x256xf32> to vector<8x64xf32>
    %106 = vector.extract_strided_slice %103 {offsets = [0, 128], sizes = [8, 64], strides = [1, 1]} : vector<8x256xf32> to vector<8x64xf32>
    %107 = vector.extract_strided_slice %103 {offsets = [0, 192], sizes = [8, 64], strides = [1, 1]} : vector<8x256xf32> to vector<8x64xf32>
    %108 = arith.mulf %105, %90 : vector<8x64xf32>
    %109 = arith.mulf %104, %106 : vector<8x64xf32>
    %110 = arith.addf %108, %109 : vector<8x64xf32>
    %111 = math.tanh %110 : vector<8x64xf32>
    %112 = arith.mulf %107, %111 : vector<8x64xf32>
    %113 = vector.extract_strided_slice %112 {offsets = [0, 0], sizes = [8, 32], strides = [1, 1]} : vector<8x64xf32> to vector<8x32xf32>
    %c8_34 = arith.constant 8 : index
    %c0_35 = arith.constant 0 : index
    %114 = vector.load %arg7[%c8_34, %c0_35] : memref<64x32xf32, #tpu.memory_space<vmem>>, vector<8x32xf32>
    tpu.vector_store %arg7[%c8_34, %c0_35], %113 {strides = array<i32>} : memref<64x32xf32, #tpu.memory_space<vmem>>, vector<8x32xf32>,
    %115 = vector.extract_strided_slice %112 {offsets = [0, 32], sizes = [8, 32], strides = [1, 1]} : vector<8x64xf32> to vector<8x32xf32>
    %c48_36 = arith.constant 48 : index
    %c0_37 = arith.constant 0 : index
    %116 = vector.load %arg8[%c48_36, %c0_37] : memref<64x32xf32, #tpu.memory_space<vmem>>, vector<8x32xf32>
    tpu.vector_store %arg8[%c48_36, %c0_37], %115 {strides = array<i32>} : memref<64x32xf32, #tpu.memory_space<vmem>>, vector<8x32xf32>,
    %c16_38 = arith.constant 16 : index
    %c0_39 = arith.constant 0 : index
    %117 = vector.load %arg6[%c16_38, %c0_39] : memref<64x256xf32, #tpu.memory_space<vmem>>, vector<8x256xf32>
    %118 = arith.truncf %112 : vector<8x64xf32> to vector<8x64xbf16>
    %cst_40 = arith.constant dense<0.000000e+00> : vector<8x256xf32>
    %119 = tpu.matmul %118, %42, %cst_40 {dimension_numbers = #tpu.dot_dimension_numbers<[1], [0], [0], [1], [0, 0, 1, 1], [], []>} : vector<8x64xbf16>, vector<64x256xbf16>, vector<8x256xf32> -> vector<8x256xf32>
    %120 = arith.addf %117, %119 : vector<8x256xf32>
    %121 = math.tanh %120 : vector<8x256xf32>
    %122 = arith.mulf %121, %32 : vector<8x256xf32>
    %123 = arith.addf %122, %35 : vector<8x256xf32>
    %124 = vector.extract_strided_slice %123 {offsets = [0, 0], sizes = [8, 64], strides = [1, 1]} : vector<8x256xf32> to vector<8x64xf32>
    %125 = vector.extract_strided_slice %123 {offsets = [0, 64], sizes = [8, 64], strides = [1, 1]} : vector<8x256xf32> to vector<8x64xf32>
    %126 = vector.extract_strided_slice %123 {offsets = [0, 128], sizes = [8, 64], strides = [1, 1]} : vector<8x256xf32> to vector<8x64xf32>
    %127 = vector.extract_strided_slice %123 {offsets = [0, 192], sizes = [8, 64], strides = [1, 1]} : vector<8x256xf32> to vector<8x64xf32>
    %128 = arith.mulf %125, %110 : vector<8x64xf32>
    %129 = arith.mulf %124, %126 : vector<8x64xf32>
    %130 = arith.addf %128, %129 : vector<8x64xf32>
    %131 = math.tanh %130 : vector<8x64xf32>
    %132 = arith.mulf %127, %131 : vector<8x64xf32>
    %133 = vector.extract_strided_slice %132 {offsets = [0, 0], sizes = [8, 32], strides = [1, 1]} : vector<8x64xf32> to vector<8x32xf32>
    %c16_41 = arith.constant 16 : index
    %c0_42 = arith.constant 0 : index
    %134 = vector.load %arg7[%c16_41, %c0_42] : memref<64x32xf32, #tpu.memory_space<vmem>>, vector<8x32xf32>
    tpu.vector_store %arg7[%c16_41, %c0_42], %133 {strides = array<i32>} : memref<64x32xf32, #tpu.memory_space<vmem>>, vector<8x32xf32>,
    %135 = vector.extract_strided_slice %132 {offsets = [0, 32], sizes = [8, 32], strides = [1, 1]} : vector<8x64xf32> to vector<8x32xf32>
    %c40_43 = arith.constant 40 : index
    %c0_44 = arith.constant 0 : index
    %136 = vector.load %arg8[%c40_43, %c0_44] : memref<64x32xf32, #tpu.memory_space<vmem>>, vector<8x32xf32>
    tpu.vector_store %arg8[%c40_43, %c0_44], %135 {strides = array<i32>} : memref<64x32xf32, #tpu.memory_space<vmem>>, vector<8x32xf32>,
    %c24_45 = arith.constant 24 : index
    %c0_46 = arith.constant 0 : index
    %137 = vector.load %arg6[%c24_45, %c0_46] : memref<64x256xf32, #tpu.memory_space<vmem>>, vector<8x256xf32>
    %138 = arith.truncf %132 : vector<8x64xf32> to vector<8x64xbf16>
    %cst_47 = arith.constant dense<0.000000e+00> : vector<8x256xf32>
    %139 = tpu.matmul %138, %42, %cst_47 {dimension_numbers = #tpu.dot_dimension_numbers<[1], [0], [0], [1], [0, 0, 1, 1], [], []>} : vector<8x64xbf16>, vector<64x256xbf16>, vector<8x256xf32> -> vector<8x256xf32>
    %140 = arith.addf %137, %139 : vector<8x256xf32>
    %141 = math.tanh %140 : vector<8x256xf32>
    %142 = arith.mulf %141, %32 : vector<8x256xf32>
    %143 = arith.addf %142, %35 : vector<8x256xf32>
    %144 = vector.extract_strided_slice %143 {offsets = [0, 0], sizes = [8, 64], strides = [1, 1]} : vector<8x256xf32> to vector<8x64xf32>
    %145 = vector.extract_strided_slice %143 {offsets = [0, 64], sizes = [8, 64], strides = [1, 1]} : vector<8x256xf32> to vector<8x64xf32>
    %146 = vector.extract_strided_slice %143 {offsets = [0, 128], sizes = [8, 64], strides = [1, 1]} : vector<8x256xf32> to vector<8x64xf32>
    %147 = vector.extract_strided_slice %143 {offsets = [0, 192], sizes = [8, 64], strides = [1, 1]} : vector<8x256xf32> to vector<8x64xf32>
    %148 = arith.mulf %145, %130 : vector<8x64xf32>
    %149 = arith.mulf %144, %146 : vector<8x64xf32>
    %150 = arith.addf %148, %149 : vector<8x64xf32>
    %151 = math.tanh %150 : vector<8x64xf32>
    %152 = arith.mulf %147, %151 : vector<8x64xf32>
    %153 = vector.extract_strided_slice %152 {offsets = [0, 0], sizes = [8, 32], strides = [1, 1]} : vector<8x64xf32> to vector<8x32xf32>
    %c24_48 = arith.constant 24 : index
    %c0_49 = arith.constant 0 : index
    %154 = vector.load %arg7[%c24_48, %c0_49] : memref<64x32xf32, #tpu.memory_space<vmem>>, vector<8x32xf32>
    tpu.vector_store %arg7[%c24_48, %c0_49], %153 {strides = array<i32>} : memref<64x32xf32, #tpu.memory_space<vmem>>, vector<8x32xf32>,
    %155 = vector.extract_strided_slice %152 {offsets = [0, 32], sizes = [8, 32], strides = [1, 1]} : vector<8x64xf32> to vector<8x32xf32>
    %c32_50 = arith.constant 32 : index
    %c0_51 = arith.constant 0 : index
    %156 = vector.load %arg8[%c32_50, %c0_51] : memref<64x32xf32, #tpu.memory_space<vmem>>, vector<8x32xf32>
    tpu.vector_store %arg8[%c32_50, %c0_51], %155 {strides = array<i32>} : memref<64x32xf32, #tpu.memory_space<vmem>>, vector<8x32xf32>,
    %c32_52 = arith.constant 32 : index
    %c0_53 = arith.constant 0 : index
    %157 = vector.load %arg6[%c32_52, %c0_53] : memref<64x256xf32, #tpu.memory_space<vmem>>, vector<8x256xf32>
    %158 = arith.truncf %152 : vector<8x64xf32> to vector<8x64xbf16>
    %cst_54 = arith.constant dense<0.000000e+00> : vector<8x256xf32>
    %159 = tpu.matmul %158, %42, %cst_54 {dimension_numbers = #tpu.dot_dimension_numbers<[1], [0], [0], [1], [0, 0, 1, 1], [], []>} : vector<8x64xbf16>, vector<64x256xbf16>, vector<8x256xf32> -> vector<8x256xf32>
    %160 = arith.addf %157, %159 : vector<8x256xf32>
    %161 = math.tanh %160 : vector<8x256xf32>
    %162 = arith.mulf %161, %32 : vector<8x256xf32>
    %163 = arith.addf %162, %35 : vector<8x256xf32>
    %164 = vector.extract_strided_slice %163 {offsets = [0, 0], sizes = [8, 64], strides = [1, 1]} : vector<8x256xf32> to vector<8x64xf32>
    %165 = vector.extract_strided_slice %163 {offsets = [0, 64], sizes = [8, 64], strides = [1, 1]} : vector<8x256xf32> to vector<8x64xf32>
    %166 = vector.extract_strided_slice %163 {offsets = [0, 128], sizes = [8, 64], strides = [1, 1]} : vector<8x256xf32> to vector<8x64xf32>
    %167 = vector.extract_strided_slice %163 {offsets = [0, 192], sizes = [8, 64], strides = [1, 1]} : vector<8x256xf32> to vector<8x64xf32>
    %168 = arith.mulf %165, %150 : vector<8x64xf32>
    %169 = arith.mulf %164, %166 : vector<8x64xf32>
    %170 = arith.addf %168, %169 : vector<8x64xf32>
    %171 = math.tanh %170 : vector<8x64xf32>
    %172 = arith.mulf %167, %171 : vector<8x64xf32>
    %173 = vector.extract_strided_slice %172 {offsets = [0, 0], sizes = [8, 32], strides = [1, 1]} : vector<8x64xf32> to vector<8x32xf32>
    %c32_55 = arith.constant 32 : index
    %c0_56 = arith.constant 0 : index
    %174 = vector.load %arg7[%c32_55, %c0_56] : memref<64x32xf32, #tpu.memory_space<vmem>>, vector<8x32xf32>
    tpu.vector_store %arg7[%c32_55, %c0_56], %173 {strides = array<i32>} : memref<64x32xf32, #tpu.memory_space<vmem>>, vector<8x32xf32>,
    %175 = vector.extract_strided_slice %172 {offsets = [0, 32], sizes = [8, 32], strides = [1, 1]} : vector<8x64xf32> to vector<8x32xf32>
    %c24_57 = arith.constant 24 : index
    %c0_58 = arith.constant 0 : index
    %176 = vector.load %arg8[%c24_57, %c0_58] : memref<64x32xf32, #tpu.memory_space<vmem>>, vector<8x32xf32>
    tpu.vector_store %arg8[%c24_57, %c0_58], %175 {strides = array<i32>} : memref<64x32xf32, #tpu.memory_space<vmem>>, vector<8x32xf32>,
    %c40_59 = arith.constant 40 : index
    %c0_60 = arith.constant 0 : index
    %177 = vector.load %arg6[%c40_59, %c0_60] : memref<64x256xf32, #tpu.memory_space<vmem>>, vector<8x256xf32>
    %178 = arith.truncf %172 : vector<8x64xf32> to vector<8x64xbf16>
    %cst_61 = arith.constant dense<0.000000e+00> : vector<8x256xf32>
    %179 = tpu.matmul %178, %42, %cst_61 {dimension_numbers = #tpu.dot_dimension_numbers<[1], [0], [0], [1], [0, 0, 1, 1], [], []>} : vector<8x64xbf16>, vector<64x256xbf16>, vector<8x256xf32> -> vector<8x256xf32>
    %180 = arith.addf %177, %179 : vector<8x256xf32>
    %181 = math.tanh %180 : vector<8x256xf32>
    %182 = arith.mulf %181, %32 : vector<8x256xf32>
    %183 = arith.addf %182, %35 : vector<8x256xf32>
    %184 = vector.extract_strided_slice %183 {offsets = [0, 0], sizes = [8, 64], strides = [1, 1]} : vector<8x256xf32> to vector<8x64xf32>
    %185 = vector.extract_strided_slice %183 {offsets = [0, 64], sizes = [8, 64], strides = [1, 1]} : vector<8x256xf32> to vector<8x64xf32>
    %186 = vector.extract_strided_slice %183 {offsets = [0, 128], sizes = [8, 64], strides = [1, 1]} : vector<8x256xf32> to vector<8x64xf32>
    %187 = vector.extract_strided_slice %183 {offsets = [0, 192], sizes = [8, 64], strides = [1, 1]} : vector<8x256xf32> to vector<8x64xf32>
    %188 = arith.mulf %185, %170 : vector<8x64xf32>
    %189 = arith.mulf %184, %186 : vector<8x64xf32>
    %190 = arith.addf %188, %189 : vector<8x64xf32>
    %191 = math.tanh %190 : vector<8x64xf32>
    %192 = arith.mulf %187, %191 : vector<8x64xf32>
    %193 = vector.extract_strided_slice %192 {offsets = [0, 0], sizes = [8, 32], strides = [1, 1]} : vector<8x64xf32> to vector<8x32xf32>
    %c40_62 = arith.constant 40 : index
    %c0_63 = arith.constant 0 : index
    %194 = vector.load %arg7[%c40_62, %c0_63] : memref<64x32xf32, #tpu.memory_space<vmem>>, vector<8x32xf32>
    tpu.vector_store %arg7[%c40_62, %c0_63], %193 {strides = array<i32>} : memref<64x32xf32, #tpu.memory_space<vmem>>, vector<8x32xf32>,
    %195 = vector.extract_strided_slice %192 {offsets = [0, 32], sizes = [8, 32], strides = [1, 1]} : vector<8x64xf32> to vector<8x32xf32>
    %c16_64 = arith.constant 16 : index
    %c0_65 = arith.constant 0 : index
    %196 = vector.load %arg8[%c16_64, %c0_65] : memref<64x32xf32, #tpu.memory_space<vmem>>, vector<8x32xf32>
    tpu.vector_store %arg8[%c16_64, %c0_65], %195 {strides = array<i32>} : memref<64x32xf32, #tpu.memory_space<vmem>>, vector<8x32xf32>,
    %c48_66 = arith.constant 48 : index
    %c0_67 = arith.constant 0 : index
    %197 = vector.load %arg6[%c48_66, %c0_67] : memref<64x256xf32, #tpu.memory_space<vmem>>, vector<8x256xf32>
    %198 = arith.truncf %192 : vector<8x64xf32> to vector<8x64xbf16>
    %cst_68 = arith.constant dense<0.000000e+00> : vector<8x256xf32>
    %199 = tpu.matmul %198, %42, %cst_68 {dimension_numbers = #tpu.dot_dimension_numbers<[1], [0], [0], [1], [0, 0, 1, 1], [], []>} : vector<8x64xbf16>, vector<64x256xbf16>, vector<8x256xf32> -> vector<8x256xf32>
    %200 = arith.addf %197, %199 : vector<8x256xf32>
    %201 = math.tanh %200 : vector<8x256xf32>
    %202 = arith.mulf %201, %32 : vector<8x256xf32>
    %203 = arith.addf %202, %35 : vector<8x256xf32>
    %204 = vector.extract_strided_slice %203 {offsets = [0, 0], sizes = [8, 64], strides = [1, 1]} : vector<8x256xf32> to vector<8x64xf32>
    %205 = vector.extract_strided_slice %203 {offsets = [0, 64], sizes = [8, 64], strides = [1, 1]} : vector<8x256xf32> to vector<8x64xf32>
    %206 = vector.extract_strided_slice %203 {offsets = [0, 128], sizes = [8, 64], strides = [1, 1]} : vector<8x256xf32> to vector<8x64xf32>
    %207 = vector.extract_strided_slice %203 {offsets = [0, 192], sizes = [8, 64], strides = [1, 1]} : vector<8x256xf32> to vector<8x64xf32>
    %208 = arith.mulf %205, %190 : vector<8x64xf32>
    %209 = arith.mulf %204, %206 : vector<8x64xf32>
    %210 = arith.addf %208, %209 : vector<8x64xf32>
    %211 = math.tanh %210 : vector<8x64xf32>
    %212 = arith.mulf %207, %211 : vector<8x64xf32>
    %213 = vector.extract_strided_slice %212 {offsets = [0, 0], sizes = [8, 32], strides = [1, 1]} : vector<8x64xf32> to vector<8x32xf32>
    %c48_69 = arith.constant 48 : index
    %c0_70 = arith.constant 0 : index
    %214 = vector.load %arg7[%c48_69, %c0_70] : memref<64x32xf32, #tpu.memory_space<vmem>>, vector<8x32xf32>
    tpu.vector_store %arg7[%c48_69, %c0_70], %213 {strides = array<i32>} : memref<64x32xf32, #tpu.memory_space<vmem>>, vector<8x32xf32>,
    %215 = vector.extract_strided_slice %212 {offsets = [0, 32], sizes = [8, 32], strides = [1, 1]} : vector<8x64xf32> to vector<8x32xf32>
    %c8_71 = arith.constant 8 : index
    %c0_72 = arith.constant 0 : index
    %216 = vector.load %arg8[%c8_71, %c0_72] : memref<64x32xf32, #tpu.memory_space<vmem>>, vector<8x32xf32>
    tpu.vector_store %arg8[%c8_71, %c0_72], %215 {strides = array<i32>} : memref<64x32xf32, #tpu.memory_space<vmem>>, vector<8x32xf32>,
    %c56_73 = arith.constant 56 : index
    %c0_74 = arith.constant 0 : index
    %217 = vector.load %arg6[%c56_73, %c0_74] : memref<64x256xf32, #tpu.memory_space<vmem>>, vector<8x256xf32>
    %218 = arith.truncf %212 : vector<8x64xf32> to vector<8x64xbf16>
    %cst_75 = arith.constant dense<0.000000e+00> : vector<8x256xf32>
    %219 = tpu.matmul %218, %42, %cst_75 {dimension_numbers = #tpu.dot_dimension_numbers<[1], [0], [0], [1], [0, 0, 1, 1], [], []>} : vector<8x64xbf16>, vector<64x256xbf16>, vector<8x256xf32> -> vector<8x256xf32>
    %220 = arith.addf %217, %219 : vector<8x256xf32>
    %221 = math.tanh %220 : vector<8x256xf32>
    %222 = arith.mulf %221, %32 : vector<8x256xf32>
    %223 = arith.addf %222, %35 : vector<8x256xf32>
    %224 = vector.extract_strided_slice %223 {offsets = [0, 0], sizes = [8, 64], strides = [1, 1]} : vector<8x256xf32> to vector<8x64xf32>
    %225 = vector.extract_strided_slice %223 {offsets = [0, 64], sizes = [8, 64], strides = [1, 1]} : vector<8x256xf32> to vector<8x64xf32>
    %226 = vector.extract_strided_slice %223 {offsets = [0, 128], sizes = [8, 64], strides = [1, 1]} : vector<8x256xf32> to vector<8x64xf32>
    %227 = vector.extract_strided_slice %223 {offsets = [0, 192], sizes = [8, 64], strides = [1, 1]} : vector<8x256xf32> to vector<8x64xf32>
    %228 = arith.mulf %225, %210 : vector<8x64xf32>
    %229 = arith.mulf %224, %226 : vector<8x64xf32>
    %230 = arith.addf %228, %229 : vector<8x64xf32>
    %231 = math.tanh %230 : vector<8x64xf32>
    %232 = arith.mulf %227, %231 : vector<8x64xf32>
    %233 = vector.extract_strided_slice %232 {offsets = [0, 0], sizes = [8, 32], strides = [1, 1]} : vector<8x64xf32> to vector<8x32xf32>
    %c56_76 = arith.constant 56 : index
    %c0_77 = arith.constant 0 : index
    %234 = vector.load %arg7[%c56_76, %c0_77] : memref<64x32xf32, #tpu.memory_space<vmem>>, vector<8x32xf32>
    tpu.vector_store %arg7[%c56_76, %c0_77], %233 {strides = array<i32>} : memref<64x32xf32, #tpu.memory_space<vmem>>, vector<8x32xf32>,
    %235 = vector.extract_strided_slice %232 {offsets = [0, 32], sizes = [8, 32], strides = [1, 1]} : vector<8x64xf32> to vector<8x32xf32>
    %c0_78 = arith.constant 0 : index
    %c0_79 = arith.constant 0 : index
    %236 = vector.load %arg8[%c0_78, %c0_79] : memref<64x32xf32, #tpu.memory_space<vmem>>, vector<8x32xf32>
    tpu.vector_store %arg8[%c0_78, %c0_79], %235 {strides = array<i32>} : memref<64x32xf32, #tpu.memory_space<vmem>>, vector<8x32xf32>,
    %237 = vector.extract_strided_slice %0 {offsets = [1, 0], sizes = [1, 256], strides = [1, 1]} : vector<4x256xf32> to vector<1x256xf32>
    %c0_80 = arith.constant 0 : index
    %c0_81 = arith.constant 0 : index
    %238 = vector.load %arg7[%c0_80, %c0_81] : memref<64x32xf32, #tpu.memory_space<vmem>>, vector<64x32xf32>
    %239 = arith.truncf %238 : vector<64x32xf32> to vector<64x32xbf16>
    %c0_82 = arith.constant 0 : index
    %c0_83 = arith.constant 0 : index
    %240 = vector.load %arg8[%c0_82, %c0_83] : memref<64x32xf32, #tpu.memory_space<vmem>>, vector<64x32xf32>
    %241 = arith.truncf %240 : vector<64x32xf32> to vector<64x32xbf16>
    %c0_84 = arith.constant 0 : index
    %c0_85 = arith.constant 0 : index
    %242 = vector.load %arg2[%c0_84, %c0_85] : memref<128x256xbf16, #tpu.memory_space<vmem>>, vector<32x256xbf16>
    %cst_86 = arith.constant dense<0.000000e+00> : vector<64x256xf32>
    %243 = tpu.matmul %239, %242, %cst_86 {dimension_numbers = #tpu.dot_dimension_numbers<[1], [0], [0], [1], [0, 0, 1, 1], [], []>} : vector<64x32xbf16>, vector<32x256xbf16>, vector<64x256xf32> -> vector<64x256xf32>
    %c32_87 = arith.constant 32 : index
    %c0_88 = arith.constant 0 : index
    %244 = vector.load %arg2[%c32_87, %c0_88] : memref<128x256xbf16, #tpu.memory_space<vmem>>, vector<32x256xbf16>
    %cst_89 = arith.constant dense<0.000000e+00> : vector<64x256xf32>
    %245 = tpu.matmul %241, %244, %cst_89 {dimension_numbers = #tpu.dot_dimension_numbers<[1], [0], [0], [1], [0, 0, 1, 1], [], []>} : vector<64x32xbf16>, vector<32x256xbf16>, vector<64x256xf32> -> vector<64x256xf32>
    %246 = arith.addf %243, %245 : vector<64x256xf32>
    %247 = vector.broadcast %237 : vector<1x256xf32> to vector<64x256xf32>
    %248 = arith.addf %246, %247 : vector<64x256xf32>
    %c64 = arith.constant 64 : index
    %c0_90 = arith.constant 0 : index
    %249 = vector.load %arg2[%c64, %c0_90] : memref<128x256xbf16, #tpu.memory_space<vmem>>, vector<64x256xbf16>
    %250 = vector.extract_strided_slice %248 {offsets = [56, 0], sizes = [8, 256], strides = [1, 1]} : vector<64x256xf32> to vector<8x256xf32>
    %251 = vector.extract_strided_slice %248 {offsets = [0, 0], sizes = [8, 256], strides = [1, 1]} : vector<64x256xf32> to vector<8x256xf32>
    %252 = arith.select %24, %250, %251 : vector<8x256xi1>, vector<8x256xf32>
    %c0_91 = arith.constant 0 : index
    %c0_92 = arith.constant 0 : index
    %253 = vector.load %arg6[%c0_91, %c0_92] : memref<64x256xf32, #tpu.memory_space<vmem>>, vector<8x256xf32>
    tpu.vector_store %arg6[%c0_91, %c0_92], %252 {strides = array<i32>} : memref<64x256xf32, #tpu.memory_space<vmem>>, vector<8x256xf32>,
    %254 = vector.extract_strided_slice %248 {offsets = [48, 0], sizes = [8, 256], strides = [1, 1]} : vector<64x256xf32> to vector<8x256xf32>
    %255 = vector.extract_strided_slice %248 {offsets = [8, 0], sizes = [8, 256], strides = [1, 1]} : vector<64x256xf32> to vector<8x256xf32>
    %256 = arith.select %24, %254, %255 : vector<8x256xi1>, vector<8x256xf32>
    %c8_93 = arith.constant 8 : index
    %c0_94 = arith.constant 0 : index
    %257 = vector.load %arg6[%c8_93, %c0_94] : memref<64x256xf32, #tpu.memory_space<vmem>>, vector<8x256xf32>
    tpu.vector_store %arg6[%c8_93, %c0_94], %256 {strides = array<i32>} : memref<64x256xf32, #tpu.memory_space<vmem>>, vector<8x256xf32>,
    %258 = vector.extract_strided_slice %248 {offsets = [40, 0], sizes = [8, 256], strides = [1, 1]} : vector<64x256xf32> to vector<8x256xf32>
    %259 = vector.extract_strided_slice %248 {offsets = [16, 0], sizes = [8, 256], strides = [1, 1]} : vector<64x256xf32> to vector<8x256xf32>
    %260 = arith.select %24, %258, %259 : vector<8x256xi1>, vector<8x256xf32>
    %c16_95 = arith.constant 16 : index
    %c0_96 = arith.constant 0 : index
    %261 = vector.load %arg6[%c16_95, %c0_96] : memref<64x256xf32, #tpu.memory_space<vmem>>, vector<8x256xf32>
    tpu.vector_store %arg6[%c16_95, %c0_96], %260 {strides = array<i32>} : memref<64x256xf32, #tpu.memory_space<vmem>>, vector<8x256xf32>,
    %262 = vector.extract_strided_slice %248 {offsets = [32, 0], sizes = [8, 256], strides = [1, 1]} : vector<64x256xf32> to vector<8x256xf32>
    %263 = vector.extract_strided_slice %248 {offsets = [24, 0], sizes = [8, 256], strides = [1, 1]} : vector<64x256xf32> to vector<8x256xf32>
    %264 = arith.select %24, %262, %263 : vector<8x256xi1>, vector<8x256xf32>
    %c24_97 = arith.constant 24 : index
    %c0_98 = arith.constant 0 : index
    %265 = vector.load %arg6[%c24_97, %c0_98] : memref<64x256xf32, #tpu.memory_space<vmem>>, vector<8x256xf32>
    tpu.vector_store %arg6[%c24_97, %c0_98], %264 {strides = array<i32>} : memref<64x256xf32, #tpu.memory_space<vmem>>, vector<8x256xf32>,
    %266 = vector.extract_strided_slice %248 {offsets = [24, 0], sizes = [8, 256], strides = [1, 1]} : vector<64x256xf32> to vector<8x256xf32>
    %267 = vector.extract_strided_slice %248 {offsets = [32, 0], sizes = [8, 256], strides = [1, 1]} : vector<64x256xf32> to vector<8x256xf32>
    %268 = arith.select %24, %266, %267 : vector<8x256xi1>, vector<8x256xf32>
    %c32_99 = arith.constant 32 : index
    %c0_100 = arith.constant 0 : index
    %269 = vector.load %arg6[%c32_99, %c0_100] : memref<64x256xf32, #tpu.memory_space<vmem>>, vector<8x256xf32>
    tpu.vector_store %arg6[%c32_99, %c0_100], %268 {strides = array<i32>} : memref<64x256xf32, #tpu.memory_space<vmem>>, vector<8x256xf32>,
    %270 = vector.extract_strided_slice %248 {offsets = [16, 0], sizes = [8, 256], strides = [1, 1]} : vector<64x256xf32> to vector<8x256xf32>
    %271 = vector.extract_strided_slice %248 {offsets = [40, 0], sizes = [8, 256], strides = [1, 1]} : vector<64x256xf32> to vector<8x256xf32>
    %272 = arith.select %24, %270, %271 : vector<8x256xi1>, vector<8x256xf32>
    %c40_101 = arith.constant 40 : index
    %c0_102 = arith.constant 0 : index
    %273 = vector.load %arg6[%c40_101, %c0_102] : memref<64x256xf32, #tpu.memory_space<vmem>>, vector<8x256xf32>
    tpu.vector_store %arg6[%c40_101, %c0_102], %272 {strides = array<i32>} : memref<64x256xf32, #tpu.memory_space<vmem>>, vector<8x256xf32>,
    %274 = vector.extract_strided_slice %248 {offsets = [8, 0], sizes = [8, 256], strides = [1, 1]} : vector<64x256xf32> to vector<8x256xf32>
    %275 = vector.extract_strided_slice %248 {offsets = [48, 0], sizes = [8, 256], strides = [1, 1]} : vector<64x256xf32> to vector<8x256xf32>
    %276 = arith.select %24, %274, %275 : vector<8x256xi1>, vector<8x256xf32>
    %c48_103 = arith.constant 48 : index
    %c0_104 = arith.constant 0 : index
    %277 = vector.load %arg6[%c48_103, %c0_104] : memref<64x256xf32, #tpu.memory_space<vmem>>, vector<8x256xf32>
    tpu.vector_store %arg6[%c48_103, %c0_104], %276 {strides = array<i32>} : memref<64x256xf32, #tpu.memory_space<vmem>>, vector<8x256xf32>,
    %278 = vector.extract_strided_slice %248 {offsets = [0, 0], sizes = [8, 256], strides = [1, 1]} : vector<64x256xf32> to vector<8x256xf32>
    %279 = vector.extract_strided_slice %248 {offsets = [56, 0], sizes = [8, 256], strides = [1, 1]} : vector<64x256xf32> to vector<8x256xf32>
    %280 = arith.select %24, %278, %279 : vector<8x256xi1>, vector<8x256xf32>
    %c56_105 = arith.constant 56 : index
    %c0_106 = arith.constant 0 : index
    %281 = vector.load %arg6[%c56_105, %c0_106] : memref<64x256xf32, #tpu.memory_space<vmem>>, vector<8x256xf32>
    tpu.vector_store %arg6[%c56_105, %c0_106], %280 {strides = array<i32>} : memref<64x256xf32, #tpu.memory_space<vmem>>, vector<8x256xf32>,
    %cst_107 = arith.constant 0.000000e+00 : f32
    %282 = vector.broadcast %cst_107 : f32 to vector<8x64xf32>
    %cst_108 = arith.constant 0.000000e+00 : f32
    %283 = vector.broadcast %cst_108 : f32 to vector<8x64xf32>
    %c0_109 = arith.constant 0 : index
    %c0_110 = arith.constant 0 : index
    %284 = vector.load %arg6[%c0_109, %c0_110] : memref<64x256xf32, #tpu.memory_space<vmem>>, vector<8x256xf32>
    %285 = arith.truncf %282 : vector<8x64xf32> to vector<8x64xbf16>
    %cst_111 = arith.constant dense<0.000000e+00> : vector<8x256xf32>
    %286 = tpu.matmul %285, %249, %cst_111 {dimension_numbers = #tpu.dot_dimension_numbers<[1], [0], [0], [1], [0, 0, 1, 1], [], []>} : vector<8x64xbf16>, vector<64x256xbf16>, vector<8x256xf32> -> vector<8x256xf32>
    %287 = arith.addf %284, %286 : vector<8x256xf32>
    %288 = math.tanh %287 : vector<8x256xf32>
    %289 = arith.mulf %288, %32 : vector<8x256xf32>
    %290 = arith.addf %289, %35 : vector<8x256xf32>
    %291 = vector.extract_strided_slice %290 {offsets = [0, 0], sizes = [8, 64], strides = [1, 1]} : vector<8x256xf32> to vector<8x64xf32>
    %292 = vector.extract_strided_slice %290 {offsets = [0, 64], sizes = [8, 64], strides = [1, 1]} : vector<8x256xf32> to vector<8x64xf32>
    %293 = vector.extract_strided_slice %290 {offsets = [0, 128], sizes = [8, 64], strides = [1, 1]} : vector<8x256xf32> to vector<8x64xf32>
    %294 = vector.extract_strided_slice %290 {offsets = [0, 192], sizes = [8, 64], strides = [1, 1]} : vector<8x256xf32> to vector<8x64xf32>
    %295 = arith.mulf %292, %283 : vector<8x64xf32>
    %296 = arith.mulf %291, %293 : vector<8x64xf32>
    %297 = arith.addf %295, %296 : vector<8x64xf32>
    %298 = math.tanh %297 : vector<8x64xf32>
    %299 = arith.mulf %294, %298 : vector<8x64xf32>
    %300 = vector.extract_strided_slice %299 {offsets = [0, 0], sizes = [8, 32], strides = [1, 1]} : vector<8x64xf32> to vector<8x32xf32>
    %c0_112 = arith.constant 0 : index
    %c0_113 = arith.constant 0 : index
    %301 = vector.load %arg7[%c0_112, %c0_113] : memref<64x32xf32, #tpu.memory_space<vmem>>, vector<8x32xf32>
    tpu.vector_store %arg7[%c0_112, %c0_113], %300 {strides = array<i32>} : memref<64x32xf32, #tpu.memory_space<vmem>>, vector<8x32xf32>,
    %302 = vector.extract_strided_slice %299 {offsets = [0, 32], sizes = [8, 32], strides = [1, 1]} : vector<8x64xf32> to vector<8x32xf32>
    %c56_114 = arith.constant 56 : index
    %c0_115 = arith.constant 0 : index
    %303 = vector.load %arg8[%c56_114, %c0_115] : memref<64x32xf32, #tpu.memory_space<vmem>>, vector<8x32xf32>
    tpu.vector_store %arg8[%c56_114, %c0_115], %302 {strides = array<i32>} : memref<64x32xf32, #tpu.memory_space<vmem>>, vector<8x32xf32>,
    %c8_116 = arith.constant 8 : index
    %c0_117 = arith.constant 0 : index
    %304 = vector.load %arg6[%c8_116, %c0_117] : memref<64x256xf32, #tpu.memory_space<vmem>>, vector<8x256xf32>
    %305 = arith.truncf %299 : vector<8x64xf32> to vector<8x64xbf16>
    %cst_118 = arith.constant dense<0.000000e+00> : vector<8x256xf32>
    %306 = tpu.matmul %305, %249, %cst_118 {dimension_numbers = #tpu.dot_dimension_numbers<[1], [0], [0], [1], [0, 0, 1, 1], [], []>} : vector<8x64xbf16>, vector<64x256xbf16>, vector<8x256xf32> -> vector<8x256xf32>
    %307 = arith.addf %304, %306 : vector<8x256xf32>
    %308 = math.tanh %307 : vector<8x256xf32>
    %309 = arith.mulf %308, %32 : vector<8x256xf32>
    %310 = arith.addf %309, %35 : vector<8x256xf32>
    %311 = vector.extract_strided_slice %310 {offsets = [0, 0], sizes = [8, 64], strides = [1, 1]} : vector<8x256xf32> to vector<8x64xf32>
    %312 = vector.extract_strided_slice %310 {offsets = [0, 64], sizes = [8, 64], strides = [1, 1]} : vector<8x256xf32> to vector<8x64xf32>
    %313 = vector.extract_strided_slice %310 {offsets = [0, 128], sizes = [8, 64], strides = [1, 1]} : vector<8x256xf32> to vector<8x64xf32>
    %314 = vector.extract_strided_slice %310 {offsets = [0, 192], sizes = [8, 64], strides = [1, 1]} : vector<8x256xf32> to vector<8x64xf32>
    %315 = arith.mulf %312, %297 : vector<8x64xf32>
    %316 = arith.mulf %311, %313 : vector<8x64xf32>
    %317 = arith.addf %315, %316 : vector<8x64xf32>
    %318 = math.tanh %317 : vector<8x64xf32>
    %319 = arith.mulf %314, %318 : vector<8x64xf32>
    %320 = vector.extract_strided_slice %319 {offsets = [0, 0], sizes = [8, 32], strides = [1, 1]} : vector<8x64xf32> to vector<8x32xf32>
    %c8_119 = arith.constant 8 : index
    %c0_120 = arith.constant 0 : index
    %321 = vector.load %arg7[%c8_119, %c0_120] : memref<64x32xf32, #tpu.memory_space<vmem>>, vector<8x32xf32>
    tpu.vector_store %arg7[%c8_119, %c0_120], %320 {strides = array<i32>} : memref<64x32xf32, #tpu.memory_space<vmem>>, vector<8x32xf32>,
    %322 = vector.extract_strided_slice %319 {offsets = [0, 32], sizes = [8, 32], strides = [1, 1]} : vector<8x64xf32> to vector<8x32xf32>
    %c48_121 = arith.constant 48 : index
    %c0_122 = arith.constant 0 : index
    %323 = vector.load %arg8[%c48_121, %c0_122] : memref<64x32xf32, #tpu.memory_space<vmem>>, vector<8x32xf32>
    tpu.vector_store %arg8[%c48_121, %c0_122], %322 {strides = array<i32>} : memref<64x32xf32, #tpu.memory_space<vmem>>, vector<8x32xf32>,
    %c16_123 = arith.constant 16 : index
    %c0_124 = arith.constant 0 : index
    %324 = vector.load %arg6[%c16_123, %c0_124] : memref<64x256xf32, #tpu.memory_space<vmem>>, vector<8x256xf32>
    %325 = arith.truncf %319 : vector<8x64xf32> to vector<8x64xbf16>
    %cst_125 = arith.constant dense<0.000000e+00> : vector<8x256xf32>
    %326 = tpu.matmul %325, %249, %cst_125 {dimension_numbers = #tpu.dot_dimension_numbers<[1], [0], [0], [1], [0, 0, 1, 1], [], []>} : vector<8x64xbf16>, vector<64x256xbf16>, vector<8x256xf32> -> vector<8x256xf32>
    %327 = arith.addf %324, %326 : vector<8x256xf32>
    %328 = math.tanh %327 : vector<8x256xf32>
    %329 = arith.mulf %328, %32 : vector<8x256xf32>
    %330 = arith.addf %329, %35 : vector<8x256xf32>
    %331 = vector.extract_strided_slice %330 {offsets = [0, 0], sizes = [8, 64], strides = [1, 1]} : vector<8x256xf32> to vector<8x64xf32>
    %332 = vector.extract_strided_slice %330 {offsets = [0, 64], sizes = [8, 64], strides = [1, 1]} : vector<8x256xf32> to vector<8x64xf32>
    %333 = vector.extract_strided_slice %330 {offsets = [0, 128], sizes = [8, 64], strides = [1, 1]} : vector<8x256xf32> to vector<8x64xf32>
    %334 = vector.extract_strided_slice %330 {offsets = [0, 192], sizes = [8, 64], strides = [1, 1]} : vector<8x256xf32> to vector<8x64xf32>
    %335 = arith.mulf %332, %317 : vector<8x64xf32>
    %336 = arith.mulf %331, %333 : vector<8x64xf32>
    %337 = arith.addf %335, %336 : vector<8x64xf32>
    %338 = math.tanh %337 : vector<8x64xf32>
    %339 = arith.mulf %334, %338 : vector<8x64xf32>
    %340 = vector.extract_strided_slice %339 {offsets = [0, 0], sizes = [8, 32], strides = [1, 1]} : vector<8x64xf32> to vector<8x32xf32>
    %c16_126 = arith.constant 16 : index
    %c0_127 = arith.constant 0 : index
    %341 = vector.load %arg7[%c16_126, %c0_127] : memref<64x32xf32, #tpu.memory_space<vmem>>, vector<8x32xf32>
    tpu.vector_store %arg7[%c16_126, %c0_127], %340 {strides = array<i32>} : memref<64x32xf32, #tpu.memory_space<vmem>>, vector<8x32xf32>,
    %342 = vector.extract_strided_slice %339 {offsets = [0, 32], sizes = [8, 32], strides = [1, 1]} : vector<8x64xf32> to vector<8x32xf32>
    %c40_128 = arith.constant 40 : index
    %c0_129 = arith.constant 0 : index
    %343 = vector.load %arg8[%c40_128, %c0_129] : memref<64x32xf32, #tpu.memory_space<vmem>>, vector<8x32xf32>
    tpu.vector_store %arg8[%c40_128, %c0_129], %342 {strides = array<i32>} : memref<64x32xf32, #tpu.memory_space<vmem>>, vector<8x32xf32>,
    %c24_130 = arith.constant 24 : index
    %c0_131 = arith.constant 0 : index
    %344 = vector.load %arg6[%c24_130, %c0_131] : memref<64x256xf32, #tpu.memory_space<vmem>>, vector<8x256xf32>
    %345 = arith.truncf %339 : vector<8x64xf32> to vector<8x64xbf16>
    %cst_132 = arith.constant dense<0.000000e+00> : vector<8x256xf32>
    %346 = tpu.matmul %345, %249, %cst_132 {dimension_numbers = #tpu.dot_dimension_numbers<[1], [0], [0], [1], [0, 0, 1, 1], [], []>} : vector<8x64xbf16>, vector<64x256xbf16>, vector<8x256xf32> -> vector<8x256xf32>
    %347 = arith.addf %344, %346 : vector<8x256xf32>
    %348 = math.tanh %347 : vector<8x256xf32>
    %349 = arith.mulf %348, %32 : vector<8x256xf32>
    %350 = arith.addf %349, %35 : vector<8x256xf32>
    %351 = vector.extract_strided_slice %350 {offsets = [0, 0], sizes = [8, 64], strides = [1, 1]} : vector<8x256xf32> to vector<8x64xf32>
    %352 = vector.extract_strided_slice %350 {offsets = [0, 64], sizes = [8, 64], strides = [1, 1]} : vector<8x256xf32> to vector<8x64xf32>
    %353 = vector.extract_strided_slice %350 {offsets = [0, 128], sizes = [8, 64], strides = [1, 1]} : vector<8x256xf32> to vector<8x64xf32>
    %354 = vector.extract_strided_slice %350 {offsets = [0, 192], sizes = [8, 64], strides = [1, 1]} : vector<8x256xf32> to vector<8x64xf32>
    %355 = arith.mulf %352, %337 : vector<8x64xf32>
    %356 = arith.mulf %351, %353 : vector<8x64xf32>
    %357 = arith.addf %355, %356 : vector<8x64xf32>
    %358 = math.tanh %357 : vector<8x64xf32>
    %359 = arith.mulf %354, %358 : vector<8x64xf32>
    %360 = vector.extract_strided_slice %359 {offsets = [0, 0], sizes = [8, 32], strides = [1, 1]} : vector<8x64xf32> to vector<8x32xf32>
    %c24_133 = arith.constant 24 : index
    %c0_134 = arith.constant 0 : index
    %361 = vector.load %arg7[%c24_133, %c0_134] : memref<64x32xf32, #tpu.memory_space<vmem>>, vector<8x32xf32>
    tpu.vector_store %arg7[%c24_133, %c0_134], %360 {strides = array<i32>} : memref<64x32xf32, #tpu.memory_space<vmem>>, vector<8x32xf32>,
    %362 = vector.extract_strided_slice %359 {offsets = [0, 32], sizes = [8, 32], strides = [1, 1]} : vector<8x64xf32> to vector<8x32xf32>
    %c32_135 = arith.constant 32 : index
    %c0_136 = arith.constant 0 : index
    %363 = vector.load %arg8[%c32_135, %c0_136] : memref<64x32xf32, #tpu.memory_space<vmem>>, vector<8x32xf32>
    tpu.vector_store %arg8[%c32_135, %c0_136], %362 {strides = array<i32>} : memref<64x32xf32, #tpu.memory_space<vmem>>, vector<8x32xf32>,
    %c32_137 = arith.constant 32 : index
    %c0_138 = arith.constant 0 : index
    %364 = vector.load %arg6[%c32_137, %c0_138] : memref<64x256xf32, #tpu.memory_space<vmem>>, vector<8x256xf32>
    %365 = arith.truncf %359 : vector<8x64xf32> to vector<8x64xbf16>
    %cst_139 = arith.constant dense<0.000000e+00> : vector<8x256xf32>
    %366 = tpu.matmul %365, %249, %cst_139 {dimension_numbers = #tpu.dot_dimension_numbers<[1], [0], [0], [1], [0, 0, 1, 1], [], []>} : vector<8x64xbf16>, vector<64x256xbf16>, vector<8x256xf32> -> vector<8x256xf32>
    %367 = arith.addf %364, %366 : vector<8x256xf32>
    %368 = math.tanh %367 : vector<8x256xf32>
    %369 = arith.mulf %368, %32 : vector<8x256xf32>
    %370 = arith.addf %369, %35 : vector<8x256xf32>
    %371 = vector.extract_strided_slice %370 {offsets = [0, 0], sizes = [8, 64], strides = [1, 1]} : vector<8x256xf32> to vector<8x64xf32>
    %372 = vector.extract_strided_slice %370 {offsets = [0, 64], sizes = [8, 64], strides = [1, 1]} : vector<8x256xf32> to vector<8x64xf32>
    %373 = vector.extract_strided_slice %370 {offsets = [0, 128], sizes = [8, 64], strides = [1, 1]} : vector<8x256xf32> to vector<8x64xf32>
    %374 = vector.extract_strided_slice %370 {offsets = [0, 192], sizes = [8, 64], strides = [1, 1]} : vector<8x256xf32> to vector<8x64xf32>
    %375 = arith.mulf %372, %357 : vector<8x64xf32>
    %376 = arith.mulf %371, %373 : vector<8x64xf32>
    %377 = arith.addf %375, %376 : vector<8x64xf32>
    %378 = math.tanh %377 : vector<8x64xf32>
    %379 = arith.mulf %374, %378 : vector<8x64xf32>
    %380 = vector.extract_strided_slice %379 {offsets = [0, 0], sizes = [8, 32], strides = [1, 1]} : vector<8x64xf32> to vector<8x32xf32>
    %c32_140 = arith.constant 32 : index
    %c0_141 = arith.constant 0 : index
    %381 = vector.load %arg7[%c32_140, %c0_141] : memref<64x32xf32, #tpu.memory_space<vmem>>, vector<8x32xf32>
    tpu.vector_store %arg7[%c32_140, %c0_141], %380 {strides = array<i32>} : memref<64x32xf32, #tpu.memory_space<vmem>>, vector<8x32xf32>,
    %382 = vector.extract_strided_slice %379 {offsets = [0, 32], sizes = [8, 32], strides = [1, 1]} : vector<8x64xf32> to vector<8x32xf32>
    %c24_142 = arith.constant 24 : index
    %c0_143 = arith.constant 0 : index
    %383 = vector.load %arg8[%c24_142, %c0_143] : memref<64x32xf32, #tpu.memory_space<vmem>>, vector<8x32xf32>
    tpu.vector_store %arg8[%c24_142, %c0_143], %382 {strides = array<i32>} : memref<64x32xf32, #tpu.memory_space<vmem>>, vector<8x32xf32>,
    %c40_144 = arith.constant 40 : index
    %c0_145 = arith.constant 0 : index
    %384 = vector.load %arg6[%c40_144, %c0_145] : memref<64x256xf32, #tpu.memory_space<vmem>>, vector<8x256xf32>
    %385 = arith.truncf %379 : vector<8x64xf32> to vector<8x64xbf16>
    %cst_146 = arith.constant dense<0.000000e+00> : vector<8x256xf32>
    %386 = tpu.matmul %385, %249, %cst_146 {dimension_numbers = #tpu.dot_dimension_numbers<[1], [0], [0], [1], [0, 0, 1, 1], [], []>} : vector<8x64xbf16>, vector<64x256xbf16>, vector<8x256xf32> -> vector<8x256xf32>
    %387 = arith.addf %384, %386 : vector<8x256xf32>
    %388 = math.tanh %387 : vector<8x256xf32>
    %389 = arith.mulf %388, %32 : vector<8x256xf32>
    %390 = arith.addf %389, %35 : vector<8x256xf32>
    %391 = vector.extract_strided_slice %390 {offsets = [0, 0], sizes = [8, 64], strides = [1, 1]} : vector<8x256xf32> to vector<8x64xf32>
    %392 = vector.extract_strided_slice %390 {offsets = [0, 64], sizes = [8, 64], strides = [1, 1]} : vector<8x256xf32> to vector<8x64xf32>
    %393 = vector.extract_strided_slice %390 {offsets = [0, 128], sizes = [8, 64], strides = [1, 1]} : vector<8x256xf32> to vector<8x64xf32>
    %394 = vector.extract_strided_slice %390 {offsets = [0, 192], sizes = [8, 64], strides = [1, 1]} : vector<8x256xf32> to vector<8x64xf32>
    %395 = arith.mulf %392, %377 : vector<8x64xf32>
    %396 = arith.mulf %391, %393 : vector<8x64xf32>
    %397 = arith.addf %395, %396 : vector<8x64xf32>
    %398 = math.tanh %397 : vector<8x64xf32>
    %399 = arith.mulf %394, %398 : vector<8x64xf32>
    %400 = vector.extract_strided_slice %399 {offsets = [0, 0], sizes = [8, 32], strides = [1, 1]} : vector<8x64xf32> to vector<8x32xf32>
    %c40_147 = arith.constant 40 : index
    %c0_148 = arith.constant 0 : index
    %401 = vector.load %arg7[%c40_147, %c0_148] : memref<64x32xf32, #tpu.memory_space<vmem>>, vector<8x32xf32>
    tpu.vector_store %arg7[%c40_147, %c0_148], %400 {strides = array<i32>} : memref<64x32xf32, #tpu.memory_space<vmem>>, vector<8x32xf32>,
    %402 = vector.extract_strided_slice %399 {offsets = [0, 32], sizes = [8, 32], strides = [1, 1]} : vector<8x64xf32> to vector<8x32xf32>
    %c16_149 = arith.constant 16 : index
    %c0_150 = arith.constant 0 : index
    %403 = vector.load %arg8[%c16_149, %c0_150] : memref<64x32xf32, #tpu.memory_space<vmem>>, vector<8x32xf32>
    tpu.vector_store %arg8[%c16_149, %c0_150], %402 {strides = array<i32>} : memref<64x32xf32, #tpu.memory_space<vmem>>, vector<8x32xf32>,
    %c48_151 = arith.constant 48 : index
    %c0_152 = arith.constant 0 : index
    %404 = vector.load %arg6[%c48_151, %c0_152] : memref<64x256xf32, #tpu.memory_space<vmem>>, vector<8x256xf32>
    %405 = arith.truncf %399 : vector<8x64xf32> to vector<8x64xbf16>
    %cst_153 = arith.constant dense<0.000000e+00> : vector<8x256xf32>
    %406 = tpu.matmul %405, %249, %cst_153 {dimension_numbers = #tpu.dot_dimension_numbers<[1], [0], [0], [1], [0, 0, 1, 1], [], []>} : vector<8x64xbf16>, vector<64x256xbf16>, vector<8x256xf32> -> vector<8x256xf32>
    %407 = arith.addf %404, %406 : vector<8x256xf32>
    %408 = math.tanh %407 : vector<8x256xf32>
    %409 = arith.mulf %408, %32 : vector<8x256xf32>
    %410 = arith.addf %409, %35 : vector<8x256xf32>
    %411 = vector.extract_strided_slice %410 {offsets = [0, 0], sizes = [8, 64], strides = [1, 1]} : vector<8x256xf32> to vector<8x64xf32>
    %412 = vector.extract_strided_slice %410 {offsets = [0, 64], sizes = [8, 64], strides = [1, 1]} : vector<8x256xf32> to vector<8x64xf32>
    %413 = vector.extract_strided_slice %410 {offsets = [0, 128], sizes = [8, 64], strides = [1, 1]} : vector<8x256xf32> to vector<8x64xf32>
    %414 = vector.extract_strided_slice %410 {offsets = [0, 192], sizes = [8, 64], strides = [1, 1]} : vector<8x256xf32> to vector<8x64xf32>
    %415 = arith.mulf %412, %397 : vector<8x64xf32>
    %416 = arith.mulf %411, %413 : vector<8x64xf32>
    %417 = arith.addf %415, %416 : vector<8x64xf32>
    %418 = math.tanh %417 : vector<8x64xf32>
    %419 = arith.mulf %414, %418 : vector<8x64xf32>
    %420 = vector.extract_strided_slice %419 {offsets = [0, 0], sizes = [8, 32], strides = [1, 1]} : vector<8x64xf32> to vector<8x32xf32>
    %c48_154 = arith.constant 48 : index
    %c0_155 = arith.constant 0 : index
    %421 = vector.load %arg7[%c48_154, %c0_155] : memref<64x32xf32, #tpu.memory_space<vmem>>, vector<8x32xf32>
    tpu.vector_store %arg7[%c48_154, %c0_155], %420 {strides = array<i32>} : memref<64x32xf32, #tpu.memory_space<vmem>>, vector<8x32xf32>,
    %422 = vector.extract_strided_slice %419 {offsets = [0, 32], sizes = [8, 32], strides = [1, 1]} : vector<8x64xf32> to vector<8x32xf32>
    %c8_156 = arith.constant 8 : index
    %c0_157 = arith.constant 0 : index
    %423 = vector.load %arg8[%c8_156, %c0_157] : memref<64x32xf32, #tpu.memory_space<vmem>>, vector<8x32xf32>
    tpu.vector_store %arg8[%c8_156, %c0_157], %422 {strides = array<i32>} : memref<64x32xf32, #tpu.memory_space<vmem>>, vector<8x32xf32>,
    %c56_158 = arith.constant 56 : index
    %c0_159 = arith.constant 0 : index
    %424 = vector.load %arg6[%c56_158, %c0_159] : memref<64x256xf32, #tpu.memory_space<vmem>>, vector<8x256xf32>
    %425 = arith.truncf %419 : vector<8x64xf32> to vector<8x64xbf16>
    %cst_160 = arith.constant dense<0.000000e+00> : vector<8x256xf32>
    %426 = tpu.matmul %425, %249, %cst_160 {dimension_numbers = #tpu.dot_dimension_numbers<[1], [0], [0], [1], [0, 0, 1, 1], [], []>} : vector<8x64xbf16>, vector<64x256xbf16>, vector<8x256xf32> -> vector<8x256xf32>
    %427 = arith.addf %424, %426 : vector<8x256xf32>
    %428 = math.tanh %427 : vector<8x256xf32>
    %429 = arith.mulf %428, %32 : vector<8x256xf32>
    %430 = arith.addf %429, %35 : vector<8x256xf32>
    %431 = vector.extract_strided_slice %430 {offsets = [0, 0], sizes = [8, 64], strides = [1, 1]} : vector<8x256xf32> to vector<8x64xf32>
    %432 = vector.extract_strided_slice %430 {offsets = [0, 64], sizes = [8, 64], strides = [1, 1]} : vector<8x256xf32> to vector<8x64xf32>
    %433 = vector.extract_strided_slice %430 {offsets = [0, 128], sizes = [8, 64], strides = [1, 1]} : vector<8x256xf32> to vector<8x64xf32>
    %434 = vector.extract_strided_slice %430 {offsets = [0, 192], sizes = [8, 64], strides = [1, 1]} : vector<8x256xf32> to vector<8x64xf32>
    %435 = arith.mulf %432, %417 : vector<8x64xf32>
    %436 = arith.mulf %431, %433 : vector<8x64xf32>
    %437 = arith.addf %435, %436 : vector<8x64xf32>
    %438 = math.tanh %437 : vector<8x64xf32>
    %439 = arith.mulf %434, %438 : vector<8x64xf32>
    %440 = vector.extract_strided_slice %439 {offsets = [0, 0], sizes = [8, 32], strides = [1, 1]} : vector<8x64xf32> to vector<8x32xf32>
    %c56_161 = arith.constant 56 : index
    %c0_162 = arith.constant 0 : index
    %441 = vector.load %arg7[%c56_161, %c0_162] : memref<64x32xf32, #tpu.memory_space<vmem>>, vector<8x32xf32>
    tpu.vector_store %arg7[%c56_161, %c0_162], %440 {strides = array<i32>} : memref<64x32xf32, #tpu.memory_space<vmem>>, vector<8x32xf32>,
    %442 = vector.extract_strided_slice %439 {offsets = [0, 32], sizes = [8, 32], strides = [1, 1]} : vector<8x64xf32> to vector<8x32xf32>
    %c0_163 = arith.constant 0 : index
    %c0_164 = arith.constant 0 : index
    %443 = vector.load %arg8[%c0_163, %c0_164] : memref<64x32xf32, #tpu.memory_space<vmem>>, vector<8x32xf32>
    tpu.vector_store %arg8[%c0_163, %c0_164], %442 {strides = array<i32>} : memref<64x32xf32, #tpu.memory_space<vmem>>, vector<8x32xf32>,
    %444 = vector.extract_strided_slice %0 {offsets = [2, 0], sizes = [1, 256], strides = [1, 1]} : vector<4x256xf32> to vector<1x256xf32>
    %c0_165 = arith.constant 0 : index
    %c0_166 = arith.constant 0 : index
    %445 = vector.load %arg7[%c0_165, %c0_166] : memref<64x32xf32, #tpu.memory_space<vmem>>, vector<64x32xf32>
    %446 = arith.truncf %445 : vector<64x32xf32> to vector<64x32xbf16>
    %c0_167 = arith.constant 0 : index
    %c0_168 = arith.constant 0 : index
    %447 = vector.load %arg8[%c0_167, %c0_168] : memref<64x32xf32, #tpu.memory_space<vmem>>, vector<64x32xf32>
    %448 = arith.truncf %447 : vector<64x32xf32> to vector<64x32xbf16>
    %c0_169 = arith.constant 0 : index
    %c0_170 = arith.constant 0 : index
    %449 = vector.load %arg3[%c0_169, %c0_170] : memref<128x256xbf16, #tpu.memory_space<vmem>>, vector<32x256xbf16>
    %cst_171 = arith.constant dense<0.000000e+00> : vector<64x256xf32>
    %450 = tpu.matmul %446, %449, %cst_171 {dimension_numbers = #tpu.dot_dimension_numbers<[1], [0], [0], [1], [0, 0, 1, 1], [], []>} : vector<64x32xbf16>, vector<32x256xbf16>, vector<64x256xf32> -> vector<64x256xf32>
    %c32_172 = arith.constant 32 : index
    %c0_173 = arith.constant 0 : index
    %451 = vector.load %arg3[%c32_172, %c0_173] : memref<128x256xbf16, #tpu.memory_space<vmem>>, vector<32x256xbf16>
    %cst_174 = arith.constant dense<0.000000e+00> : vector<64x256xf32>
    %452 = tpu.matmul %448, %451, %cst_174 {dimension_numbers = #tpu.dot_dimension_numbers<[1], [0], [0], [1], [0, 0, 1, 1], [], []>} : vector<64x32xbf16>, vector<32x256xbf16>, vector<64x256xf32> -> vector<64x256xf32>
    %453 = arith.addf %450, %452 : vector<64x256xf32>
    %454 = vector.broadcast %444 : vector<1x256xf32> to vector<64x256xf32>
    %455 = arith.addf %453, %454 : vector<64x256xf32>
    %c64_175 = arith.constant 64 : index
    %c0_176 = arith.constant 0 : index
    %456 = vector.load %arg3[%c64_175, %c0_176] : memref<128x256xbf16, #tpu.memory_space<vmem>>, vector<64x256xbf16>
    %457 = vector.extract_strided_slice %455 {offsets = [56, 0], sizes = [8, 256], strides = [1, 1]} : vector<64x256xf32> to vector<8x256xf32>
    %458 = vector.extract_strided_slice %455 {offsets = [0, 0], sizes = [8, 256], strides = [1, 1]} : vector<64x256xf32> to vector<8x256xf32>
    %459 = arith.select %24, %457, %458 : vector<8x256xi1>, vector<8x256xf32>
    %c0_177 = arith.constant 0 : index
    %c0_178 = arith.constant 0 : index
    %460 = vector.load %arg6[%c0_177, %c0_178] : memref<64x256xf32, #tpu.memory_space<vmem>>, vector<8x256xf32>
    tpu.vector_store %arg6[%c0_177, %c0_178], %459 {strides = array<i32>} : memref<64x256xf32, #tpu.memory_space<vmem>>, vector<8x256xf32>,
    %461 = vector.extract_strided_slice %455 {offsets = [48, 0], sizes = [8, 256], strides = [1, 1]} : vector<64x256xf32> to vector<8x256xf32>
    %462 = vector.extract_strided_slice %455 {offsets = [8, 0], sizes = [8, 256], strides = [1, 1]} : vector<64x256xf32> to vector<8x256xf32>
    %463 = arith.select %24, %461, %462 : vector<8x256xi1>, vector<8x256xf32>
    %c8_179 = arith.constant 8 : index
    %c0_180 = arith.constant 0 : index
    %464 = vector.load %arg6[%c8_179, %c0_180] : memref<64x256xf32, #tpu.memory_space<vmem>>, vector<8x256xf32>
    tpu.vector_store %arg6[%c8_179, %c0_180], %463 {strides = array<i32>} : memref<64x256xf32, #tpu.memory_space<vmem>>, vector<8x256xf32>,
    %465 = vector.extract_strided_slice %455 {offsets = [40, 0], sizes = [8, 256], strides = [1, 1]} : vector<64x256xf32> to vector<8x256xf32>
    %466 = vector.extract_strided_slice %455 {offsets = [16, 0], sizes = [8, 256], strides = [1, 1]} : vector<64x256xf32> to vector<8x256xf32>
    %467 = arith.select %24, %465, %466 : vector<8x256xi1>, vector<8x256xf32>
    %c16_181 = arith.constant 16 : index
    %c0_182 = arith.constant 0 : index
    %468 = vector.load %arg6[%c16_181, %c0_182] : memref<64x256xf32, #tpu.memory_space<vmem>>, vector<8x256xf32>
    tpu.vector_store %arg6[%c16_181, %c0_182], %467 {strides = array<i32>} : memref<64x256xf32, #tpu.memory_space<vmem>>, vector<8x256xf32>,
    %469 = vector.extract_strided_slice %455 {offsets = [32, 0], sizes = [8, 256], strides = [1, 1]} : vector<64x256xf32> to vector<8x256xf32>
    %470 = vector.extract_strided_slice %455 {offsets = [24, 0], sizes = [8, 256], strides = [1, 1]} : vector<64x256xf32> to vector<8x256xf32>
    %471 = arith.select %24, %469, %470 : vector<8x256xi1>, vector<8x256xf32>
    %c24_183 = arith.constant 24 : index
    %c0_184 = arith.constant 0 : index
    %472 = vector.load %arg6[%c24_183, %c0_184] : memref<64x256xf32, #tpu.memory_space<vmem>>, vector<8x256xf32>
    tpu.vector_store %arg6[%c24_183, %c0_184], %471 {strides = array<i32>} : memref<64x256xf32, #tpu.memory_space<vmem>>, vector<8x256xf32>,
    %473 = vector.extract_strided_slice %455 {offsets = [24, 0], sizes = [8, 256], strides = [1, 1]} : vector<64x256xf32> to vector<8x256xf32>
    %474 = vector.extract_strided_slice %455 {offsets = [32, 0], sizes = [8, 256], strides = [1, 1]} : vector<64x256xf32> to vector<8x256xf32>
    %475 = arith.select %24, %473, %474 : vector<8x256xi1>, vector<8x256xf32>
    %c32_185 = arith.constant 32 : index
    %c0_186 = arith.constant 0 : index
    %476 = vector.load %arg6[%c32_185, %c0_186] : memref<64x256xf32, #tpu.memory_space<vmem>>, vector<8x256xf32>
    tpu.vector_store %arg6[%c32_185, %c0_186], %475 {strides = array<i32>} : memref<64x256xf32, #tpu.memory_space<vmem>>, vector<8x256xf32>,
    %477 = vector.extract_strided_slice %455 {offsets = [16, 0], sizes = [8, 256], strides = [1, 1]} : vector<64x256xf32> to vector<8x256xf32>
    %478 = vector.extract_strided_slice %455 {offsets = [40, 0], sizes = [8, 256], strides = [1, 1]} : vector<64x256xf32> to vector<8x256xf32>
    %479 = arith.select %24, %477, %478 : vector<8x256xi1>, vector<8x256xf32>
    %c40_187 = arith.constant 40 : index
    %c0_188 = arith.constant 0 : index
    %480 = vector.load %arg6[%c40_187, %c0_188] : memref<64x256xf32, #tpu.memory_space<vmem>>, vector<8x256xf32>
    tpu.vector_store %arg6[%c40_187, %c0_188], %479 {strides = array<i32>} : memref<64x256xf32, #tpu.memory_space<vmem>>, vector<8x256xf32>,
    %481 = vector.extract_strided_slice %455 {offsets = [8, 0], sizes = [8, 256], strides = [1, 1]} : vector<64x256xf32> to vector<8x256xf32>
    %482 = vector.extract_strided_slice %455 {offsets = [48, 0], sizes = [8, 256], strides = [1, 1]} : vector<64x256xf32> to vector<8x256xf32>
    %483 = arith.select %24, %481, %482 : vector<8x256xi1>, vector<8x256xf32>
    %c48_189 = arith.constant 48 : index
    %c0_190 = arith.constant 0 : index
    %484 = vector.load %arg6[%c48_189, %c0_190] : memref<64x256xf32, #tpu.memory_space<vmem>>, vector<8x256xf32>
    tpu.vector_store %arg6[%c48_189, %c0_190], %483 {strides = array<i32>} : memref<64x256xf32, #tpu.memory_space<vmem>>, vector<8x256xf32>,
    %485 = vector.extract_strided_slice %455 {offsets = [0, 0], sizes = [8, 256], strides = [1, 1]} : vector<64x256xf32> to vector<8x256xf32>
    %486 = vector.extract_strided_slice %455 {offsets = [56, 0], sizes = [8, 256], strides = [1, 1]} : vector<64x256xf32> to vector<8x256xf32>
    %487 = arith.select %24, %485, %486 : vector<8x256xi1>, vector<8x256xf32>
    %c56_191 = arith.constant 56 : index
    %c0_192 = arith.constant 0 : index
    %488 = vector.load %arg6[%c56_191, %c0_192] : memref<64x256xf32, #tpu.memory_space<vmem>>, vector<8x256xf32>
    tpu.vector_store %arg6[%c56_191, %c0_192], %487 {strides = array<i32>} : memref<64x256xf32, #tpu.memory_space<vmem>>, vector<8x256xf32>,
    %cst_193 = arith.constant 0.000000e+00 : f32
    %489 = vector.broadcast %cst_193 : f32 to vector<8x64xf32>
    %cst_194 = arith.constant 0.000000e+00 : f32
    %490 = vector.broadcast %cst_194 : f32 to vector<8x64xf32>
    %c0_195 = arith.constant 0 : index
    %c0_196 = arith.constant 0 : index
    %491 = vector.load %arg6[%c0_195, %c0_196] : memref<64x256xf32, #tpu.memory_space<vmem>>, vector<8x256xf32>
    %492 = arith.truncf %489 : vector<8x64xf32> to vector<8x64xbf16>
    %cst_197 = arith.constant dense<0.000000e+00> : vector<8x256xf32>
    %493 = tpu.matmul %492, %456, %cst_197 {dimension_numbers = #tpu.dot_dimension_numbers<[1], [0], [0], [1], [0, 0, 1, 1], [], []>} : vector<8x64xbf16>, vector<64x256xbf16>, vector<8x256xf32> -> vector<8x256xf32>
    %494 = arith.addf %491, %493 : vector<8x256xf32>
    %495 = math.tanh %494 : vector<8x256xf32>
    %496 = arith.mulf %495, %32 : vector<8x256xf32>
    %497 = arith.addf %496, %35 : vector<8x256xf32>
    %498 = vector.extract_strided_slice %497 {offsets = [0, 0], sizes = [8, 64], strides = [1, 1]} : vector<8x256xf32> to vector<8x64xf32>
    %499 = vector.extract_strided_slice %497 {offsets = [0, 64], sizes = [8, 64], strides = [1, 1]} : vector<8x256xf32> to vector<8x64xf32>
    %500 = vector.extract_strided_slice %497 {offsets = [0, 128], sizes = [8, 64], strides = [1, 1]} : vector<8x256xf32> to vector<8x64xf32>
    %501 = vector.extract_strided_slice %497 {offsets = [0, 192], sizes = [8, 64], strides = [1, 1]} : vector<8x256xf32> to vector<8x64xf32>
    %502 = arith.mulf %499, %490 : vector<8x64xf32>
    %503 = arith.mulf %498, %500 : vector<8x64xf32>
    %504 = arith.addf %502, %503 : vector<8x64xf32>
    %505 = math.tanh %504 : vector<8x64xf32>
    %506 = arith.mulf %501, %505 : vector<8x64xf32>
    %507 = vector.extract_strided_slice %506 {offsets = [0, 0], sizes = [8, 32], strides = [1, 1]} : vector<8x64xf32> to vector<8x32xf32>
    %c0_198 = arith.constant 0 : index
    %c0_199 = arith.constant 0 : index
    %508 = vector.load %arg7[%c0_198, %c0_199] : memref<64x32xf32, #tpu.memory_space<vmem>>, vector<8x32xf32>
    tpu.vector_store %arg7[%c0_198, %c0_199], %507 {strides = array<i32>} : memref<64x32xf32, #tpu.memory_space<vmem>>, vector<8x32xf32>,
    %509 = vector.extract_strided_slice %506 {offsets = [0, 32], sizes = [8, 32], strides = [1, 1]} : vector<8x64xf32> to vector<8x32xf32>
    %c56_200 = arith.constant 56 : index
    %c0_201 = arith.constant 0 : index
    %510 = vector.load %arg8[%c56_200, %c0_201] : memref<64x32xf32, #tpu.memory_space<vmem>>, vector<8x32xf32>
    tpu.vector_store %arg8[%c56_200, %c0_201], %509 {strides = array<i32>} : memref<64x32xf32, #tpu.memory_space<vmem>>, vector<8x32xf32>,
    %c8_202 = arith.constant 8 : index
    %c0_203 = arith.constant 0 : index
    %511 = vector.load %arg6[%c8_202, %c0_203] : memref<64x256xf32, #tpu.memory_space<vmem>>, vector<8x256xf32>
    %512 = arith.truncf %506 : vector<8x64xf32> to vector<8x64xbf16>
    %cst_204 = arith.constant dense<0.000000e+00> : vector<8x256xf32>
    %513 = tpu.matmul %512, %456, %cst_204 {dimension_numbers = #tpu.dot_dimension_numbers<[1], [0], [0], [1], [0, 0, 1, 1], [], []>} : vector<8x64xbf16>, vector<64x256xbf16>, vector<8x256xf32> -> vector<8x256xf32>
    %514 = arith.addf %511, %513 : vector<8x256xf32>
    %515 = math.tanh %514 : vector<8x256xf32>
    %516 = arith.mulf %515, %32 : vector<8x256xf32>
    %517 = arith.addf %516, %35 : vector<8x256xf32>
    %518 = vector.extract_strided_slice %517 {offsets = [0, 0], sizes = [8, 64], strides = [1, 1]} : vector<8x256xf32> to vector<8x64xf32>
    %519 = vector.extract_strided_slice %517 {offsets = [0, 64], sizes = [8, 64], strides = [1, 1]} : vector<8x256xf32> to vector<8x64xf32>
    %520 = vector.extract_strided_slice %517 {offsets = [0, 128], sizes = [8, 64], strides = [1, 1]} : vector<8x256xf32> to vector<8x64xf32>
    %521 = vector.extract_strided_slice %517 {offsets = [0, 192], sizes = [8, 64], strides = [1, 1]} : vector<8x256xf32> to vector<8x64xf32>
    %522 = arith.mulf %519, %504 : vector<8x64xf32>
    %523 = arith.mulf %518, %520 : vector<8x64xf32>
    %524 = arith.addf %522, %523 : vector<8x64xf32>
    %525 = math.tanh %524 : vector<8x64xf32>
    %526 = arith.mulf %521, %525 : vector<8x64xf32>
    %527 = vector.extract_strided_slice %526 {offsets = [0, 0], sizes = [8, 32], strides = [1, 1]} : vector<8x64xf32> to vector<8x32xf32>
    %c8_205 = arith.constant 8 : index
    %c0_206 = arith.constant 0 : index
    %528 = vector.load %arg7[%c8_205, %c0_206] : memref<64x32xf32, #tpu.memory_space<vmem>>, vector<8x32xf32>
    tpu.vector_store %arg7[%c8_205, %c0_206], %527 {strides = array<i32>} : memref<64x32xf32, #tpu.memory_space<vmem>>, vector<8x32xf32>,
    %529 = vector.extract_strided_slice %526 {offsets = [0, 32], sizes = [8, 32], strides = [1, 1]} : vector<8x64xf32> to vector<8x32xf32>
    %c48_207 = arith.constant 48 : index
    %c0_208 = arith.constant 0 : index
    %530 = vector.load %arg8[%c48_207, %c0_208] : memref<64x32xf32, #tpu.memory_space<vmem>>, vector<8x32xf32>
    tpu.vector_store %arg8[%c48_207, %c0_208], %529 {strides = array<i32>} : memref<64x32xf32, #tpu.memory_space<vmem>>, vector<8x32xf32>,
    %c16_209 = arith.constant 16 : index
    %c0_210 = arith.constant 0 : index
    %531 = vector.load %arg6[%c16_209, %c0_210] : memref<64x256xf32, #tpu.memory_space<vmem>>, vector<8x256xf32>
    %532 = arith.truncf %526 : vector<8x64xf32> to vector<8x64xbf16>
    %cst_211 = arith.constant dense<0.000000e+00> : vector<8x256xf32>
    %533 = tpu.matmul %532, %456, %cst_211 {dimension_numbers = #tpu.dot_dimension_numbers<[1], [0], [0], [1], [0, 0, 1, 1], [], []>} : vector<8x64xbf16>, vector<64x256xbf16>, vector<8x256xf32> -> vector<8x256xf32>
    %534 = arith.addf %531, %533 : vector<8x256xf32>
    %535 = math.tanh %534 : vector<8x256xf32>
    %536 = arith.mulf %535, %32 : vector<8x256xf32>
    %537 = arith.addf %536, %35 : vector<8x256xf32>
    %538 = vector.extract_strided_slice %537 {offsets = [0, 0], sizes = [8, 64], strides = [1, 1]} : vector<8x256xf32> to vector<8x64xf32>
    %539 = vector.extract_strided_slice %537 {offsets = [0, 64], sizes = [8, 64], strides = [1, 1]} : vector<8x256xf32> to vector<8x64xf32>
    %540 = vector.extract_strided_slice %537 {offsets = [0, 128], sizes = [8, 64], strides = [1, 1]} : vector<8x256xf32> to vector<8x64xf32>
    %541 = vector.extract_strided_slice %537 {offsets = [0, 192], sizes = [8, 64], strides = [1, 1]} : vector<8x256xf32> to vector<8x64xf32>
    %542 = arith.mulf %539, %524 : vector<8x64xf32>
    %543 = arith.mulf %538, %540 : vector<8x64xf32>
    %544 = arith.addf %542, %543 : vector<8x64xf32>
    %545 = math.tanh %544 : vector<8x64xf32>
    %546 = arith.mulf %541, %545 : vector<8x64xf32>
    %547 = vector.extract_strided_slice %546 {offsets = [0, 0], sizes = [8, 32], strides = [1, 1]} : vector<8x64xf32> to vector<8x32xf32>
    %c16_212 = arith.constant 16 : index
    %c0_213 = arith.constant 0 : index
    %548 = vector.load %arg7[%c16_212, %c0_213] : memref<64x32xf32, #tpu.memory_space<vmem>>, vector<8x32xf32>
    tpu.vector_store %arg7[%c16_212, %c0_213], %547 {strides = array<i32>} : memref<64x32xf32, #tpu.memory_space<vmem>>, vector<8x32xf32>,
    %549 = vector.extract_strided_slice %546 {offsets = [0, 32], sizes = [8, 32], strides = [1, 1]} : vector<8x64xf32> to vector<8x32xf32>
    %c40_214 = arith.constant 40 : index
    %c0_215 = arith.constant 0 : index
    %550 = vector.load %arg8[%c40_214, %c0_215] : memref<64x32xf32, #tpu.memory_space<vmem>>, vector<8x32xf32>
    tpu.vector_store %arg8[%c40_214, %c0_215], %549 {strides = array<i32>} : memref<64x32xf32, #tpu.memory_space<vmem>>, vector<8x32xf32>,
    %c24_216 = arith.constant 24 : index
    %c0_217 = arith.constant 0 : index
    %551 = vector.load %arg6[%c24_216, %c0_217] : memref<64x256xf32, #tpu.memory_space<vmem>>, vector<8x256xf32>
    %552 = arith.truncf %546 : vector<8x64xf32> to vector<8x64xbf16>
    %cst_218 = arith.constant dense<0.000000e+00> : vector<8x256xf32>
    %553 = tpu.matmul %552, %456, %cst_218 {dimension_numbers = #tpu.dot_dimension_numbers<[1], [0], [0], [1], [0, 0, 1, 1], [], []>} : vector<8x64xbf16>, vector<64x256xbf16>, vector<8x256xf32> -> vector<8x256xf32>
    %554 = arith.addf %551, %553 : vector<8x256xf32>
    %555 = math.tanh %554 : vector<8x256xf32>
    %556 = arith.mulf %555, %32 : vector<8x256xf32>
    %557 = arith.addf %556, %35 : vector<8x256xf32>
    %558 = vector.extract_strided_slice %557 {offsets = [0, 0], sizes = [8, 64], strides = [1, 1]} : vector<8x256xf32> to vector<8x64xf32>
    %559 = vector.extract_strided_slice %557 {offsets = [0, 64], sizes = [8, 64], strides = [1, 1]} : vector<8x256xf32> to vector<8x64xf32>
    %560 = vector.extract_strided_slice %557 {offsets = [0, 128], sizes = [8, 64], strides = [1, 1]} : vector<8x256xf32> to vector<8x64xf32>
    %561 = vector.extract_strided_slice %557 {offsets = [0, 192], sizes = [8, 64], strides = [1, 1]} : vector<8x256xf32> to vector<8x64xf32>
    %562 = arith.mulf %559, %544 : vector<8x64xf32>
    %563 = arith.mulf %558, %560 : vector<8x64xf32>
    %564 = arith.addf %562, %563 : vector<8x64xf32>
    %565 = math.tanh %564 : vector<8x64xf32>
    %566 = arith.mulf %561, %565 : vector<8x64xf32>
    %567 = vector.extract_strided_slice %566 {offsets = [0, 0], sizes = [8, 32], strides = [1, 1]} : vector<8x64xf32> to vector<8x32xf32>
    %c24_219 = arith.constant 24 : index
    %c0_220 = arith.constant 0 : index
    %568 = vector.load %arg7[%c24_219, %c0_220] : memref<64x32xf32, #tpu.memory_space<vmem>>, vector<8x32xf32>
    tpu.vector_store %arg7[%c24_219, %c0_220], %567 {strides = array<i32>} : memref<64x32xf32, #tpu.memory_space<vmem>>, vector<8x32xf32>,
    %569 = vector.extract_strided_slice %566 {offsets = [0, 32], sizes = [8, 32], strides = [1, 1]} : vector<8x64xf32> to vector<8x32xf32>
    %c32_221 = arith.constant 32 : index
    %c0_222 = arith.constant 0 : index
    %570 = vector.load %arg8[%c32_221, %c0_222] : memref<64x32xf32, #tpu.memory_space<vmem>>, vector<8x32xf32>
    tpu.vector_store %arg8[%c32_221, %c0_222], %569 {strides = array<i32>} : memref<64x32xf32, #tpu.memory_space<vmem>>, vector<8x32xf32>,
    %c32_223 = arith.constant 32 : index
    %c0_224 = arith.constant 0 : index
    %571 = vector.load %arg6[%c32_223, %c0_224] : memref<64x256xf32, #tpu.memory_space<vmem>>, vector<8x256xf32>
    %572 = arith.truncf %566 : vector<8x64xf32> to vector<8x64xbf16>
    %cst_225 = arith.constant dense<0.000000e+00> : vector<8x256xf32>
    %573 = tpu.matmul %572, %456, %cst_225 {dimension_numbers = #tpu.dot_dimension_numbers<[1], [0], [0], [1], [0, 0, 1, 1], [], []>} : vector<8x64xbf16>, vector<64x256xbf16>, vector<8x256xf32> -> vector<8x256xf32>
    %574 = arith.addf %571, %573 : vector<8x256xf32>
    %575 = math.tanh %574 : vector<8x256xf32>
    %576 = arith.mulf %575, %32 : vector<8x256xf32>
    %577 = arith.addf %576, %35 : vector<8x256xf32>
    %578 = vector.extract_strided_slice %577 {offsets = [0, 0], sizes = [8, 64], strides = [1, 1]} : vector<8x256xf32> to vector<8x64xf32>
    %579 = vector.extract_strided_slice %577 {offsets = [0, 64], sizes = [8, 64], strides = [1, 1]} : vector<8x256xf32> to vector<8x64xf32>
    %580 = vector.extract_strided_slice %577 {offsets = [0, 128], sizes = [8, 64], strides = [1, 1]} : vector<8x256xf32> to vector<8x64xf32>
    %581 = vector.extract_strided_slice %577 {offsets = [0, 192], sizes = [8, 64], strides = [1, 1]} : vector<8x256xf32> to vector<8x64xf32>
    %582 = arith.mulf %579, %564 : vector<8x64xf32>
    %583 = arith.mulf %578, %580 : vector<8x64xf32>
    %584 = arith.addf %582, %583 : vector<8x64xf32>
    %585 = math.tanh %584 : vector<8x64xf32>
    %586 = arith.mulf %581, %585 : vector<8x64xf32>
    %587 = vector.extract_strided_slice %586 {offsets = [0, 0], sizes = [8, 32], strides = [1, 1]} : vector<8x64xf32> to vector<8x32xf32>
    %c32_226 = arith.constant 32 : index
    %c0_227 = arith.constant 0 : index
    %588 = vector.load %arg7[%c32_226, %c0_227] : memref<64x32xf32, #tpu.memory_space<vmem>>, vector<8x32xf32>
    tpu.vector_store %arg7[%c32_226, %c0_227], %587 {strides = array<i32>} : memref<64x32xf32, #tpu.memory_space<vmem>>, vector<8x32xf32>,
    %589 = vector.extract_strided_slice %586 {offsets = [0, 32], sizes = [8, 32], strides = [1, 1]} : vector<8x64xf32> to vector<8x32xf32>
    %c24_228 = arith.constant 24 : index
    %c0_229 = arith.constant 0 : index
    %590 = vector.load %arg8[%c24_228, %c0_229] : memref<64x32xf32, #tpu.memory_space<vmem>>, vector<8x32xf32>
    tpu.vector_store %arg8[%c24_228, %c0_229], %589 {strides = array<i32>} : memref<64x32xf32, #tpu.memory_space<vmem>>, vector<8x32xf32>,
    %c40_230 = arith.constant 40 : index
    %c0_231 = arith.constant 0 : index
    %591 = vector.load %arg6[%c40_230, %c0_231] : memref<64x256xf32, #tpu.memory_space<vmem>>, vector<8x256xf32>
    %592 = arith.truncf %586 : vector<8x64xf32> to vector<8x64xbf16>
    %cst_232 = arith.constant dense<0.000000e+00> : vector<8x256xf32>
    %593 = tpu.matmul %592, %456, %cst_232 {dimension_numbers = #tpu.dot_dimension_numbers<[1], [0], [0], [1], [0, 0, 1, 1], [], []>} : vector<8x64xbf16>, vector<64x256xbf16>, vector<8x256xf32> -> vector<8x256xf32>
    %594 = arith.addf %591, %593 : vector<8x256xf32>
    %595 = math.tanh %594 : vector<8x256xf32>
    %596 = arith.mulf %595, %32 : vector<8x256xf32>
    %597 = arith.addf %596, %35 : vector<8x256xf32>
    %598 = vector.extract_strided_slice %597 {offsets = [0, 0], sizes = [8, 64], strides = [1, 1]} : vector<8x256xf32> to vector<8x64xf32>
    %599 = vector.extract_strided_slice %597 {offsets = [0, 64], sizes = [8, 64], strides = [1, 1]} : vector<8x256xf32> to vector<8x64xf32>
    %600 = vector.extract_strided_slice %597 {offsets = [0, 128], sizes = [8, 64], strides = [1, 1]} : vector<8x256xf32> to vector<8x64xf32>
    %601 = vector.extract_strided_slice %597 {offsets = [0, 192], sizes = [8, 64], strides = [1, 1]} : vector<8x256xf32> to vector<8x64xf32>
    %602 = arith.mulf %599, %584 : vector<8x64xf32>
    %603 = arith.mulf %598, %600 : vector<8x64xf32>
    %604 = arith.addf %602, %603 : vector<8x64xf32>
    %605 = math.tanh %604 : vector<8x64xf32>
    %606 = arith.mulf %601, %605 : vector<8x64xf32>
    %607 = vector.extract_strided_slice %606 {offsets = [0, 0], sizes = [8, 32], strides = [1, 1]} : vector<8x64xf32> to vector<8x32xf32>
    %c40_233 = arith.constant 40 : index
    %c0_234 = arith.constant 0 : index
    %608 = vector.load %arg7[%c40_233, %c0_234] : memref<64x32xf32, #tpu.memory_space<vmem>>, vector<8x32xf32>
    tpu.vector_store %arg7[%c40_233, %c0_234], %607 {strides = array<i32>} : memref<64x32xf32, #tpu.memory_space<vmem>>, vector<8x32xf32>,
    %609 = vector.extract_strided_slice %606 {offsets = [0, 32], sizes = [8, 32], strides = [1, 1]} : vector<8x64xf32> to vector<8x32xf32>
    %c16_235 = arith.constant 16 : index
    %c0_236 = arith.constant 0 : index
    %610 = vector.load %arg8[%c16_235, %c0_236] : memref<64x32xf32, #tpu.memory_space<vmem>>, vector<8x32xf32>
    tpu.vector_store %arg8[%c16_235, %c0_236], %609 {strides = array<i32>} : memref<64x32xf32, #tpu.memory_space<vmem>>, vector<8x32xf32>,
    %c48_237 = arith.constant 48 : index
    %c0_238 = arith.constant 0 : index
    %611 = vector.load %arg6[%c48_237, %c0_238] : memref<64x256xf32, #tpu.memory_space<vmem>>, vector<8x256xf32>
    %612 = arith.truncf %606 : vector<8x64xf32> to vector<8x64xbf16>
    %cst_239 = arith.constant dense<0.000000e+00> : vector<8x256xf32>
    %613 = tpu.matmul %612, %456, %cst_239 {dimension_numbers = #tpu.dot_dimension_numbers<[1], [0], [0], [1], [0, 0, 1, 1], [], []>} : vector<8x64xbf16>, vector<64x256xbf16>, vector<8x256xf32> -> vector<8x256xf32>
    %614 = arith.addf %611, %613 : vector<8x256xf32>
    %615 = math.tanh %614 : vector<8x256xf32>
    %616 = arith.mulf %615, %32 : vector<8x256xf32>
    %617 = arith.addf %616, %35 : vector<8x256xf32>
    %618 = vector.extract_strided_slice %617 {offsets = [0, 0], sizes = [8, 64], strides = [1, 1]} : vector<8x256xf32> to vector<8x64xf32>
    %619 = vector.extract_strided_slice %617 {offsets = [0, 64], sizes = [8, 64], strides = [1, 1]} : vector<8x256xf32> to vector<8x64xf32>
    %620 = vector.extract_strided_slice %617 {offsets = [0, 128], sizes = [8, 64], strides = [1, 1]} : vector<8x256xf32> to vector<8x64xf32>
    %621 = vector.extract_strided_slice %617 {offsets = [0, 192], sizes = [8, 64], strides = [1, 1]} : vector<8x256xf32> to vector<8x64xf32>
    %622 = arith.mulf %619, %604 : vector<8x64xf32>
    %623 = arith.mulf %618, %620 : vector<8x64xf32>
    %624 = arith.addf %622, %623 : vector<8x64xf32>
    %625 = math.tanh %624 : vector<8x64xf32>
    %626 = arith.mulf %621, %625 : vector<8x64xf32>
    %627 = vector.extract_strided_slice %626 {offsets = [0, 0], sizes = [8, 32], strides = [1, 1]} : vector<8x64xf32> to vector<8x32xf32>
    %c48_240 = arith.constant 48 : index
    %c0_241 = arith.constant 0 : index
    %628 = vector.load %arg7[%c48_240, %c0_241] : memref<64x32xf32, #tpu.memory_space<vmem>>, vector<8x32xf32>
    tpu.vector_store %arg7[%c48_240, %c0_241], %627 {strides = array<i32>} : memref<64x32xf32, #tpu.memory_space<vmem>>, vector<8x32xf32>,
    %629 = vector.extract_strided_slice %626 {offsets = [0, 32], sizes = [8, 32], strides = [1, 1]} : vector<8x64xf32> to vector<8x32xf32>
    %c8_242 = arith.constant 8 : index
    %c0_243 = arith.constant 0 : index
    %630 = vector.load %arg8[%c8_242, %c0_243] : memref<64x32xf32, #tpu.memory_space<vmem>>, vector<8x32xf32>
    tpu.vector_store %arg8[%c8_242, %c0_243], %629 {strides = array<i32>} : memref<64x32xf32, #tpu.memory_space<vmem>>, vector<8x32xf32>,
    %c56_244 = arith.constant 56 : index
    %c0_245 = arith.constant 0 : index
    %631 = vector.load %arg6[%c56_244, %c0_245] : memref<64x256xf32, #tpu.memory_space<vmem>>, vector<8x256xf32>
    %632 = arith.truncf %626 : vector<8x64xf32> to vector<8x64xbf16>
    %cst_246 = arith.constant dense<0.000000e+00> : vector<8x256xf32>
    %633 = tpu.matmul %632, %456, %cst_246 {dimension_numbers = #tpu.dot_dimension_numbers<[1], [0], [0], [1], [0, 0, 1, 1], [], []>} : vector<8x64xbf16>, vector<64x256xbf16>, vector<8x256xf32> -> vector<8x256xf32>
    %634 = arith.addf %631, %633 : vector<8x256xf32>
    %635 = math.tanh %634 : vector<8x256xf32>
    %636 = arith.mulf %635, %32 : vector<8x256xf32>
    %637 = arith.addf %636, %35 : vector<8x256xf32>
    %638 = vector.extract_strided_slice %637 {offsets = [0, 0], sizes = [8, 64], strides = [1, 1]} : vector<8x256xf32> to vector<8x64xf32>
    %639 = vector.extract_strided_slice %637 {offsets = [0, 64], sizes = [8, 64], strides = [1, 1]} : vector<8x256xf32> to vector<8x64xf32>
    %640 = vector.extract_strided_slice %637 {offsets = [0, 128], sizes = [8, 64], strides = [1, 1]} : vector<8x256xf32> to vector<8x64xf32>
    %641 = vector.extract_strided_slice %637 {offsets = [0, 192], sizes = [8, 64], strides = [1, 1]} : vector<8x256xf32> to vector<8x64xf32>
    %642 = arith.mulf %639, %624 : vector<8x64xf32>
    %643 = arith.mulf %638, %640 : vector<8x64xf32>
    %644 = arith.addf %642, %643 : vector<8x64xf32>
    %645 = math.tanh %644 : vector<8x64xf32>
    %646 = arith.mulf %641, %645 : vector<8x64xf32>
    %647 = vector.extract_strided_slice %646 {offsets = [0, 0], sizes = [8, 32], strides = [1, 1]} : vector<8x64xf32> to vector<8x32xf32>
    %c56_247 = arith.constant 56 : index
    %c0_248 = arith.constant 0 : index
    %648 = vector.load %arg7[%c56_247, %c0_248] : memref<64x32xf32, #tpu.memory_space<vmem>>, vector<8x32xf32>
    tpu.vector_store %arg7[%c56_247, %c0_248], %647 {strides = array<i32>} : memref<64x32xf32, #tpu.memory_space<vmem>>, vector<8x32xf32>,
    %649 = vector.extract_strided_slice %646 {offsets = [0, 32], sizes = [8, 32], strides = [1, 1]} : vector<8x64xf32> to vector<8x32xf32>
    %c0_249 = arith.constant 0 : index
    %c0_250 = arith.constant 0 : index
    %650 = vector.load %arg8[%c0_249, %c0_250] : memref<64x32xf32, #tpu.memory_space<vmem>>, vector<8x32xf32>
    tpu.vector_store %arg8[%c0_249, %c0_250], %649 {strides = array<i32>} : memref<64x32xf32, #tpu.memory_space<vmem>>, vector<8x32xf32>,
    %c56_251 = arith.constant 56 : index
    %c0_252 = arith.constant 0 : index
    %651 = vector.load %arg7[%c56_251, %c0_252] : memref<64x32xf32, #tpu.memory_space<vmem>>, vector<8x32xf32>
    %c56_253 = arith.constant 56 : index
    %c0_254 = arith.constant 0 : index
    %652 = vector.load %arg8[%c56_253, %c0_254] : memref<64x32xf32, #tpu.memory_space<vmem>>, vector<8x32xf32>
    %653 = arith.addf %651, %652 : vector<8x32xf32>
    %cst_255 = arith.constant 5.000000e-01 : f32
    %654 = vector.broadcast %cst_255 : f32 to vector<8x32xf32>
    %655 = arith.mulf %654, %653 : vector<8x32xf32>
    %656 = vector.extract_strided_slice %0 {offsets = [3, 0], sizes = [1, 32], strides = [1, 1]} : vector<4x256xf32> to vector<1x32xf32>
    %657 = vector.extract_strided_slice %0 {offsets = [3, 32], sizes = [1, 1], strides = [1, 1]} : vector<4x256xf32> to vector<1x1xf32>
    %658 = vector.broadcast %656 : vector<1x32xf32> to vector<8x32xf32>
    %659 = arith.mulf %655, %658 : vector<8x32xf32>
    %cst_256 = arith.constant dense<0.000000e+00> : vector<8xf32>
    %660 = vector.multi_reduction <add>, %659, %cst_256 [1] : vector<8x32xf32> to vector<8xf32>
    %661 = vector.shape_cast %660 : vector<8xf32> to vector<8x1xf32>
    %662 = vector.broadcast %657 : vector<1x1xf32> to vector<8x1xf32>
    %663 = arith.addf %661, %662 : vector<8x1xf32>
    %c0_257 = arith.constant 0 : index
    %c0_258 = arith.constant 0 : index
    %664 = vector.load %arg5[%c0_257, %c0_258] : memref<8x1xf32, #tpu.memory_space<vmem>>, vector<8x1xf32>
    tpu.vector_store %arg5[%c0_257, %c0_258], %663 {strides = array<i32>} : memref<8x1xf32, #tpu.memory_space<vmem>>, vector<8x1xf32>,
    return
  }
}

</mosaic_0001>

<llo_original>
// kernel: tpu_custom_call.1
$region0: #{tpu_custom_call.1}
  #allocation0 [shape = 'u32[]', space=smem, size = 0x4, offset = 0x4, fixed_abs, tag = 'smem constant byte address 0x4 - core index']
  #allocation1 [shape = 'u32[144,128]{1,0:T(1,128)}', space=vmem, size = 0x12000, scoped, tag = 'internal scratch']
  #allocation2 [shape = 'f32[64,256]{1,0:T(8,128)}', space=vmem, size = 0x10000, scoped, tag = 'scratch operand']
  #allocation3 [shape = 'f32[64,32]{1,0:T(8,128)}', space=vmem, size = 0x8000, scoped, tag = 'scratch operand']
  #allocation4 [shape = 'f32[64,32]{1,0:T(8,128)}', space=vmem, size = 0x8000, scoped, tag = 'scratch operand']
  %s0 = inlined_call_operand.vmem [shape: bf16[64,16], index: 0, kind: input, shape index: {}]
  %s1 = inlined_call_operand.hbm [shape: bf16[80,256], index: 1, kind: input, shape index: {}]
  %s2 = inlined_call_operand.hbm [shape: bf16[128,256], index: 2, kind: input, shape index: {}]
  %s3 = inlined_call_operand.hbm [shape: bf16[128,256], index: 3, kind: input, shape index: {}]
  %s4 = inlined_call_operand.vmem [shape: f32[4,256], index: 4, kind: input, shape index: {}]
  %s5 = inlined_call_operand.vmem [shape: f32[8,1], index: 5, kind: output, shape index: {}]
  %s6 = sld [smem:[#allocation0]]
  $region42: #{tpu_custom_call.1} parent=0
    _
  %s8 = ssub.s32 1, %s6
  %s9 = scalar_select 0, %s8, %s6
  $region1: #{tpu_custom_call.1} parent=0
    #allocation5 [shape = 'u8[40960]{0}', space=vmem, size = 0xa000, scoped, tag = 'input window, operand 1, single buffered']
    #allocation6 [shape = 's32[1]{0}', space=sflag, size = 0x4, scoped, tag = 'scoped memory for tpu_custom_call.1']
    #allocation7 [shape = 'u8[65536]{0}', space=vmem, size = 0x10000, scoped, tag = 'input window, operand 2, single buffered']
    #allocation8 [shape = 's32[1]{0}', space=sflag, size = 0x4, scoped, tag = 'scoped memory for tpu_custom_call.1']
    #allocation9 [shape = 'u8[65536]{0}', space=vmem, size = 0x10000, scoped, tag = 'input window, operand 3, single buffered']
    %10 = vsyncpa [#allocation6], 0
    %11 = vsyncpa [#allocation8], 0
    // Predicated region
    $region2: #{tpu_custom_call.1} parent=1 // pred_check
      _
    $region3: #{tpu_custom_call.1} parent=1 // pred_check_branch
      %13 = sbr.rel (0) target = $region5
    $region4: #{tpu_custom_call.1} parent=1 // pred_region
      _
    $region5: #{tpu_custom_call.1} parent=1 // pred_fallthru
      _
    // Predicated region
    $region6: #{tpu_custom_call.1} parent=1 // pred_check
      _
    $region7: #{tpu_custom_call.1} parent=1 // pred_check_branch
      %15 = sbr.rel (0) target = $region9
    $region8: #{tpu_custom_call.1} parent=1 // pred_region
      %s17 = ssub.s32 1280, 1280
      %18 = vsyncadd [#allocation6], %s17
      %s19 = sshll.u32 [#allocation5], 4
      %s20 = int_to_ptr.vmem [resolvable:$true] %s19
      %25 = dma.hbm_to_vmem [thread:$0]  %s1, 1280, %s20, [#allocation6], 128, 128, 8
    $region9: #{tpu_custom_call.1} parent=1 // pred_fallthru
      _
    // Predicated region
    $region10: #{tpu_custom_call.1} parent=1 // pred_check
      _
    $region11: #{tpu_custom_call.1} parent=1 // pred_check_branch
      %27 = sbr.rel (0) target = $region13
    $region12: #{tpu_custom_call.1} parent=1 // pred_region
      %s29 = ssub.s32 2048, 2048
      %30 = vsyncadd [#allocation8], %s29
      %s31 = sshll.u32 [#allocation7], 4
      %s32 = int_to_ptr.vmem [resolvable:$true] %s31
      %37 = dma.hbm_to_vmem [thread:$0]  %s2, 2048, %s32, [#allocation8], 128, 128, 8
    $region13: #{tpu_custom_call.1} parent=1 // pred_fallthru
      _
    // Predicated region
    $region14: #{tpu_custom_call.1} parent=1 // pred_check
      _
    $region15: #{tpu_custom_call.1} parent=1 // pred_check_branch
      %39 = sbr.rel (0) target = $region17
    $region16: #{tpu_custom_call.1} parent=1 // pred_region
      %s41 = ssub.s32 2048, 2048
      %42 = vsyncadd [#allocation8], %s41
      %s43 = sshll.u32 [#allocation9], 4
      %s44 = int_to_ptr.vmem [resolvable:$true] %s43
      %49 = dma.hbm_to_vmem [thread:$0]  %s3, 2048, %s44, [#allocation8], 128, 128, 8
    $region17: #{tpu_custom_call.1} parent=1 // pred_fallthru
      _
    // Predicated region
    $region18: #{tpu_custom_call.1} parent=1 // pred_check
      _
    $region19: #{tpu_custom_call.1} parent=1 // pred_check_branch
      %51 = sbr.rel (0) target = $region21
    $region20: #{tpu_custom_call.1} parent=1 // pred_region
      _
    $region21: #{tpu_custom_call.1} parent=1 // pred_fallthru
      _
    // Predicated region
    $region22: #{tpu_custom_call.1} parent=1 // pred_check
      _
    $region23: #{tpu_custom_call.1} parent=1 // pred_check_branch
      %53 = sbr.rel (0) target = $region25
    $region24: #{tpu_custom_call.1} parent=1 // pred_region
      %54 = dma.done [#allocation6], 1280
    $region25: #{tpu_custom_call.1} parent=1 // pred_fallthru
      _
    // Predicated region
    $region26: #{tpu_custom_call.1} parent=1 // pred_check
      _
    $region27: #{tpu_custom_call.1} parent=1 // pred_check_branch
      %56 = sbr.rel (0) target = $region29
    $region28: #{tpu_custom_call.1} parent=1 // pred_region
      %57 = dma.done [#allocation8], 2048
    $region29: #{tpu_custom_call.1} parent=1 // pred_fallthru
      _
    // Predicated region
    $region30: #{tpu_custom_call.1} parent=1 // pred_check
      _
    $region31: #{tpu_custom_call.1} parent=1 // pred_check_branch
      %59 = sbr.rel (0) target = $region33
    $region32: #{tpu_custom_call.1} parent=1 // pred_region
      %60 = dma.done [#allocation8], 2048
    $region33: #{tpu_custom_call.1} parent=1 // pred_fallthru
      _
    %v62 = vld [vmem:[%s4] sm:$0xff]
    %v63 = vlaneseq
    %v64 = vand.u32 %v63, 127
    %v65 = vadd.s32 %v64, 128
    %vm66 = vcmp.ge.s32.totalorder %v64, 32
    %vm67 = vcmp.ge.s32.totalorder %v65, 32
    %vm68 = vcmp.lt.s32.totalorder %v64, 64
    %vm69 = vcmp.lt.s32.totalorder %v65, 64
    %vm70 = vmand %vm66, %vm68
    %vm71 = vmand %vm67, %vm69
    %vm72 = vcmp.ge.s32.totalorder %v64, 96
    %vm73 = vcmp.ge.s32.totalorder %v65, 96
    %vm74 = vcmp.lt.s32.totalorder %v64, 128
    %vm75 = vcmp.lt.s32.totalorder %v65, 128
    %vm76 = vmand %vm72, %vm74
    %vm77 = vmand %vm73, %vm75
    %vm78 = vmor %vm70, %vm76
    %vm79 = vmor %vm71, %vm77
    %vm80 = vcmp.ge.s32.totalorder %v64, 160
    %vm81 = vcmp.ge.s32.totalorder %v65, 160
    %vm82 = vcmp.lt.s32.totalorder %v64, 192
    %vm83 = vcmp.lt.s32.totalorder %v65, 192
    %vm84 = vmand %vm80, %vm82
    %vm85 = vmand %vm81, %vm83
    %vm86 = vmor %vm78, %vm84
    %vm87 = vmor %vm79, %vm85
    %vm88 = vcmp.ge.s32.totalorder %v64, 224
    %vm89 = vcmp.ge.s32.totalorder %v65, 224
    %vm90 = vcmp.lt.s32.totalorder %v64, 256
    %vm91 = vcmp.lt.s32.totalorder %v65, 256
    %vm92 = vmand %vm88, %vm90
    %vm93 = vmand %vm89, %vm91
    %vm94 = vmor %vm86, %vm92
    %vm95 = vmor %vm87, %vm93
    %vm96 = vcmp.ge.s32.totalorder %v64, 128
    %vm97 = vcmp.ge.s32.totalorder %v65, 128
    %vm98 = vmand %vm96, %vm82
    %vm99 = vmand %vm97, %vm83
    %v100 = vsel %vm98, 1.0, 0.5
    %v101 = vsel %vm99, 1.0, 0.5
    %v102 = vsel %vm98, 0.0, 0.5
    %v103 = vsel %vm99, 0.0, 0.5
    %v104 = vld [vmem:[%s0] sm:$0xf]
    %v105 = vld [vmem:[%s0 + $0x4] sm:$0xf]
    %v106 = vld [vmem:[%s0 + $0x8] sm:$0xf]
    %v107 = vld [vmem:[%s0 + $0xc] sm:$0xf]
    %v108 = vld [vmem:[%s0 + $0x10] sm:$0xf]
    %v109 = vld [vmem:[%s0 + $0x14] sm:$0xf]
    %v110 = vld [vmem:[%s0 + $0x18] sm:$0xf]
    %v111 = vld [vmem:[%s0 + $0x1c] sm:$0xf]
    %v112 = vld [vmem:[#allocation5] sm:$0xff]
    %v113 = vld [vmem:[#allocation5 + $0x8] sm:$0xff]
    %v115 = vlaneseq
    %v116 = vshrl.u32 %v115, 7
    %v117 = vsub.s32 0, %v116
    %v118 = vrot.slane %v62, %v117
    %v119 = vlaneseq
    %v120 = vshrl.u32 %v119, 7
    %v121 = vsub.s32 4, %v120
    %v122 = vrot.slane %v62, %v121
    %v125 = vlaneseq
    %v126 = vshrl.u32 %v125, 7
    %v127 = vsub.s32 0, %v126
    %v128 = vrot.slane %v118, %v127
    %v129 = vlaneseq
    %v130 = vshrl.u32 %v129, 7
    %v131 = vsub.s32 0, %v130
    %v132 = vrot.slane %v122, %v131
    %v141 = vunpack.c.l.b16 %v104
    %v142 = vunpack.c.l.b16 %v105
    %v143 = vunpack.c.l.b16 %v106
    %v144 = vunpack.c.l.b16 %v107
    %v145 = vunpack.c.l.b16 %v108
    %v146 = vunpack.c.l.b16 %v109
    %v147 = vunpack.c.l.b16 %v110
    %v148 = vunpack.c.l.b16 %v111
    %v149 = vpack.c.b16 %v142, %v141
    %v150 = vpack.c.b16 %v144, %v143
    %v151 = vpack.c.b16 %v146, %v145
    %v152 = vpack.c.b16 %v148, %v147
    %v155 = vunpack.c.l.b16 %v112
    %v156 = vunpack.c.h.b16 %v112
    %v157 = vunpack.c.l.b16 %v113
    %v158 = vunpack.c.h.b16 %v113
    %v159 = vpack.c.b16 %v157, %v155
    %v160 = vpack.c.b16 %v158, %v156
    %vm163 = vcmask 130048
    %v165 = vsel %vm163, %v149, 0
    %v168 = vsel %vm163, %v150, 0
    %v171 = vsel %vm163, %v151, 0
    %v174 = vsel %vm163, %v152, 0
    %176 = vmatprep.subr.bf16.mxu0 %v160
    %177 = vmatpush1.bf16.msra.mxu0 %v159
    %178 = vmatprep.subr.bf16.mxu0 0
    %179 = vmatpush1.bf16.msra.mxu0 0
    %180 = vmatprep.subr.bf16.mxu0 0
    %181 = vmatpush1.bf16.msra.mxu0 0
    %182 = vmatprep.subr.bf16.mxu0 0
    %183 = vmatpush1.bf16.msra.mxu0 0
    %184 = vmatprep.subr.bf16.mxu0 0
    %185 = vmatpush1.bf16.msra.mxu0 0
    %186 = vmatprep.subr.bf16.mxu0 0
    %187 = vmatpush1.bf16.msra.mxu0 0
    %188 = vmatprep.subr.bf16.mxu0 0
    %189 = vmatpush1.bf16.msra.mxu0 0
    %190 = vmatprep.subr.bf16.mxu0 0
    %191 = vmatpush1.bf16.msra.mxu0 0
    %192 = vmatprep.subr.bf16.mxu0 0
    %193 = vmatpush1.bf16.msra.mxu0 0
    %194 = vmatprep.subr.bf16.mxu0 0
    %195 = vmatpush1.bf16.msra.mxu0 0
    %196 = vmatprep.subr.bf16.mxu0 0
    %197 = vmatpush1.bf16.msra.mxu0 0
    %198 = vmatprep.subr.bf16.mxu0 0
    %199 = vmatpush1.bf16.msra.mxu0 0
    %200 = vmatprep.subr.bf16.mxu0 0
    %201 = vmatpush1.bf16.msra.mxu0 0
    %202 = vmatprep.subr.bf16.mxu0 0
    %203 = vmatpush1.bf16.msra.mxu0 0
    %204 = vmatprep.subr.bf16.mxu0 0
    %205 = vmatpush1.bf16.msra.mxu0 0
    %206 = vmatprep.subr.bf16.mxu0 0
    %207 = vmatpush1.bf16.msra.mxu0 0
    %208 = vmatprep.mubr.bf16.mxu0 0
    %209 = vmatmul.mubr.bf16.gmra.mrb[0].mxu0 %v165
    %v210 = vpop.f32.mrb[0].mxu0
    %v211 = vadd.f32 %v128, %v210
    %v212 = vpop.f32.mrb[0].mxu0
    %v213 = vadd.f32 %v132, %v212
    %v214 = vpop.f32.mrb[0].mxu0
    %v215 = vadd.f32 %v128, %v214
    %v216 = vpop.f32.mrb[0].mxu0
    %v217 = vadd.f32 %v132, %v216
    %218 = vmatprep.mubr.bf16.mxu0 0
    %219 = vmatmul.mubr.bf16.gmra.mrb[0].mxu0 %v168
    %v220 = vpop.f32.mrb[0].mxu0
    %v221 = vadd.f32 %v128, %v220
    %v222 = vpop.f32.mrb[0].mxu0
    %v223 = vadd.f32 %v132, %v222
    %v224 = vpop.f32.mrb[0].mxu0
    %v225 = vadd.f32 %v128, %v224
    %v226 = vpop.f32.mrb[0].mxu0
    %v227 = vadd.f32 %v132, %v226
    %228 = vmatprep.mubr.bf16.mxu0 0
    %229 = vmatmul.mubr.bf16.gmra.mrb[0].mxu0 %v171
    %v230 = vpop.f32.mrb[0].mxu0
    %v231 = vadd.f32 %v128, %v230
    %v232 = vpop.f32.mrb[0].mxu0
    %v233 = vadd.f32 %v132, %v232
    %v234 = vpop.f32.mrb[0].mxu0
    %v235 = vadd.f32 %v128, %v234
    %v236 = vpop.f32.mrb[0].mxu0
    %v237 = vadd.f32 %v132, %v236
    %238 = vmatprep.mubr.bf16.mxu0 0
    %239 = vmatmul.mubr.bf16.gmra.mrb[0].mxu0 %v174
    %v240 = vpop.f32.mrb[0].mxu0
    %v241 = vadd.f32 %v128, %v240
    %v242 = vpop.f32.mrb[0].mxu0
    %v243 = vadd.f32 %v132, %v242
    %v244 = vpop.f32.mrb[0].mxu0
    %v245 = vadd.f32 %v128, %v244
    %v246 = vpop.f32.mrb[0].mxu0
    %v247 = vadd.f32 %v132, %v246
    %248 = vdwg.mxu0
    %v249 = vld [vmem:[#allocation5 + $0x10] sm:$0xff]
    %v250 = vld [vmem:[#allocation5 + $0x18] sm:$0xff]
    %v251 = vld [vmem:[#allocation5 + $0x20] sm:$0xff]
    %v252 = vld [vmem:[#allocation5 + $0x28] sm:$0xff]
    %v253 = vld [vmem:[#allocation5 + $0x30] sm:$0xff]
    %v254 = vld [vmem:[#allocation5 + $0x38] sm:$0xff]
    %v255 = vld [vmem:[#allocation5 + $0x40] sm:$0xff]
    %v256 = vld [vmem:[#allocation5 + $0x48] sm:$0xff]
    %v257 = vsel %vm94, %v245, %v211
    %v258 = vsel %vm95, %v247, %v213
    %259 = vst [vmem:[#allocation2] sm:$0xff] %v257
    %260 = vst [vmem:[#allocation2 + $0x8] sm:$0xff] %v258
    %v261 = vsel %vm94, %v241, %v215
    %v262 = vsel %vm95, %v243, %v217
    %263 = vst [vmem:[#allocation2 + $0x10] sm:$0xff] %v261
    %264 = vst [vmem:[#allocation2 + $0x18] sm:$0xff] %v262
    %v265 = vsel %vm94, %v235, %v221
    %v266 = vsel %vm95, %v237, %v223
    %267 = vst [vmem:[#allocation2 + $0x20] sm:$0xff] %v265
    %268 = vst [vmem:[#allocation2 + $0x28] sm:$0xff] %v266
    %v269 = vsel %vm94, %v231, %v225
    %v270 = vsel %vm95, %v233, %v227
    %271 = vst [vmem:[#allocation2 + $0x30] sm:$0xff] %v269
    %272 = vst [vmem:[#allocation2 + $0x38] sm:$0xff] %v270
    %v273 = vsel %vm94, %v225, %v231
    %v274 = vsel %vm95, %v227, %v233
    %275 = vst [vmem:[#allocation2 + $0x40] sm:$0xff] %v273
    %276 = vst [vmem:[#allocation2 + $0x48] sm:$0xff] %v274
    %v277 = vsel %vm94, %v221, %v235
    %v278 = vsel %vm95, %v223, %v237
    %279 = vst [vmem:[#allocation2 + $0x50] sm:$0xff] %v277
    %280 = vst [vmem:[#allocation2 + $0x58] sm:$0xff] %v278
    %v281 = vsel %vm94, %v215, %v241
    %v282 = vsel %vm95, %v217, %v243
    %283 = vst [vmem:[#allocation2 + $0x60] sm:$0xff] %v281
    %284 = vst [vmem:[#allocation2 + $0x68] sm:$0xff] %v282
    %v285 = vsel %vm94, %v211, %v245
    %v286 = vsel %vm95, %v213, %v247
    %287 = vst [vmem:[#allocation2 + $0x70] sm:$0xff] %v285
    %288 = vst [vmem:[#allocation2 + $0x78] sm:$0xff] %v286
    %v289 = vld [vmem:[#allocation2] sm:$0xff]
    %v290 = vld [vmem:[#allocation2 + $0x8] sm:$0xff]
    %v299 = vunpack.c.l.b16 %v249
    %v300 = vunpack.c.h.b16 %v249
    %v301 = vunpack.c.l.b16 %v250
    %v302 = vunpack.c.h.b16 %v250
    %v303 = vunpack.c.l.b16 %v251
    %v304 = vunpack.c.h.b16 %v251
    %v305 = vunpack.c.l.b16 %v252
    %v306 = vunpack.c.h.b16 %v252
    %v307 = vunpack.c.l.b16 %v253
    %v308 = vunpack.c.h.b16 %v253
    %v309 = vunpack.c.l.b16 %v254
    %v310 = vunpack.c.h.b16 %v254
    %v311 = vunpack.c.l.b16 %v255
    %v312 = vunpack.c.h.b16 %v255
    %v313 = vunpack.c.l.b16 %v256
    %v314 = vunpack.c.h.b16 %v256
    %v315 = vpack.c.b16 %v301, %v299
    %v316 = vpack.c.b16 %v302, %v300
    %v317 = vpack.c.b16 %v305, %v303
    %v318 = vpack.c.b16 %v306, %v304
    %v319 = vpack.c.b16 %v309, %v307
    %v320 = vpack.c.b16 %v310, %v308
    %v321 = vpack.c.b16 %v313, %v311
    %v322 = vpack.c.b16 %v314, %v312
    %vm331 = vcmask 523264
    %v333 = vsel %vm331, 0, 0
    %335 = vmatprep.subr.bf16.mxu0 %v316
    %336 = vmatpush1.bf16.msra.mxu0 %v315
    %337 = vmatprep.subr.bf16.mxu0 %v318
    %338 = vmatpush1.bf16.msra.mxu0 %v317
    %339 = vmatprep.subr.bf16.mxu0 %v320
    %340 = vmatpush1.bf16.msra.mxu0 %v319
    %341 = vmatprep.subr.bf16.mxu0 %v322
    %342 = vmatpush1.bf16.msra.mxu0 %v321
    %343 = vmatprep.subr.bf16.mxu0 0
    %344 = vmatpush1.bf16.msra.mxu0 0
    %345 = vmatprep.subr.bf16.mxu0 0
    %346 = vmatpush1.bf16.msra.mxu0 0
    %347 = vmatprep.subr.bf16.mxu0 0
    %348 = vmatpush1.bf16.msra.mxu0 0
    %349 = vmatprep.subr.bf16.mxu0 0
    %350 = vmatpush1.bf16.msra.mxu0 0
    %351 = vmatprep.subr.bf16.mxu0 0
    %352 = vmatpush1.bf16.msra.mxu0 0
    %353 = vmatprep.subr.bf16.mxu0 0
    %354 = vmatpush1.bf16.msra.mxu0 0
    %355 = vmatprep.subr.bf16.mxu0 0
    %356 = vmatpush1.bf16.msra.mxu0 0
    %357 = vmatprep.subr.bf16.mxu0 0
    %358 = vmatpush1.bf16.msra.mxu0 0
    %359 = vmatprep.subr.bf16.mxu0 0
    %360 = vmatpush1.bf16.msra.mxu0 0
    %361 = vmatprep.subr.bf16.mxu0 0
    %362 = vmatpush1.bf16.msra.mxu0 0
    %363 = vmatprep.subr.bf16.mxu0 0
    %364 = vmatpush1.bf16.msra.mxu0 0
    %365 = vmatprep.subr.bf16.mxu0 0
    %366 = vmatpush1.bf16.msra.mxu0 0
    %367 = vmatprep.mubr.bf16.mxu0 0
    %368 = vmatmul.mubr.bf16.gmra.mrb[0].mxu0 %v333
    %v369 = vpop.f32.mrb[0].mxu0
    %v370 = vadd.f32 0.0, %v369
    %v371 = vpop.f32.mrb[0].mxu0
    %v372 = vadd.f32 0.0, %v371
    %v373 = vpop.f32.mrb[0].mxu0
    %v374 = vpop.f32.mrb[0].mxu0
    %375 = vdwg.mxu0
    %v376 = vadd.f32 %v289, %v370
    %v377 = vadd.f32 %v290, %v372
    %v378 = vtanh.pop %v376
    %v379 = vtanh.pop %v377
    %v380 = vmul.f32 %v378, %v100
    %v381 = vmul.f32 %v379, %v101
    %v382 = vadd.f32 %v380, %v102
    %v383 = vadd.f32 %v381, %v103
    %v384 = vmul.f32 %v382, 0.0
    %v385 = vmul.f32 %v382, %v383
    %387 = vrot.lane.b32.xlu0 %v385, 64
    %v388 = vpop.permute.xlu0 %387
    %v390 = vadd.f32 %v384, %v388
    %v391 = vtanh.pop %v390
    %v392 = vmul.f32 %v383, %v391
    %394 = vrot.lane.b32.xlu0 %v392, 64
    %v395 = vpop.permute.xlu0 %394
    %vm397 = vcmask 261120
    %398 = vst.msk [vmem:[#allocation3] sm:$0xff] %vm397, %v395
    %399 = vrot.lane.b32.xlu0 %v392, 32
    %v400 = vpop.permute.xlu0 %399
    %402 = vst.msk [vmem:[#allocation4 + $0x38] sm:$0xff] %vm397, %v400
    %v403 = vld [vmem:[#allocation2 + $0x10] sm:$0xff]
    %v404 = vld [vmem:[#allocation2 + $0x18] sm:$0xff]
    %v405 = vpack.c.bf16 %v392, %v392
    %407 = vrot.lane.b32.xlu0 %v405, 64
    %v408 = vpop.permute.xlu0 %407
    %v410 = vsel %vm331, %v408, 0
    %412 = vmatprep.subr.bf16.mxu0 %v316
    %413 = vmatpush1.bf16.msra.mxu0 %v315
    %414 = vmatprep.subr.bf16.mxu0 %v318
    %415 = vmatpush1.bf16.msra.mxu0 %v317
    %416 = vmatprep.subr.bf16.mxu0 %v320
    %417 = vmatpush1.bf16.msra.mxu0 %v319
    %418 = vmatprep.subr.bf16.mxu0 %v322
    %419 = vmatpush1.bf16.msra.mxu0 %v321
    %420 = vmatprep.subr.bf16.mxu0 0
    %421 = vmatpush1.bf16.msra.mxu0 0
    %422 = vmatprep.subr.bf16.mxu0 0
    %423 = vmatpush1.bf16.msra.mxu0 0
    %424 = vmatprep.subr.bf16.mxu0 0
    %425 = vmatpush1.bf16.msra.mxu0 0
    %426 = vmatprep.subr.bf16.mxu0 0
    %427 = vmatpush1.bf16.msra.mxu0 0
    %428 = vmatprep.subr.bf16.mxu0 0
    %429 = vmatpush1.bf16.msra.mxu0 0
    %430 = vmatprep.subr.bf16.mxu0 0
    %431 = vmatpush1.bf16.msra.mxu0 0
    %432 = vmatprep.subr.bf16.mxu0 0
    %433 = vmatpush1.bf16.msra.mxu0 0
    %434 = vmatprep.subr.bf16.mxu0 0
    %435 = vmatpush1.bf16.msra.mxu0 0
    %436 = vmatprep.subr.bf16.mxu0 0
    %437 = vmatpush1.bf16.msra.mxu0 0
    %438 = vmatprep.subr.bf16.mxu0 0
    %439 = vmatpush1.bf16.msra.mxu0 0
    %440 = vmatprep.subr.bf16.mxu0 0
    %441 = vmatpush1.bf16.msra.mxu0 0
    %442 = vmatprep.subr.bf16.mxu0 0
    %443 = vmatpush1.bf16.msra.mxu0 0
    %444 = vmatprep.mubr.bf16.mxu0 0
    %445 = vmatmul.mubr.bf16.gmra.mrb[0].mxu0 %v410
    %v446 = vpop.f32.mrb[0].mxu0
    %v447 = vadd.f32 0.0, %v446
    %v448 = vpop.f32.mrb[0].mxu0
    %v449 = vadd.f32 0.0, %v448
    %v450 = vpop.f32.mrb[0].mxu0
    %v451 = vpop.f32.mrb[0].mxu0
    %452 = vdwg.mxu0
    %v453 = vadd.f32 %v403, %v447
    %v454 = vadd.f32 %v404, %v449
    %v455 = vtanh.pop %v453
    %v456 = vtanh.pop %v454
    %v457 = vmul.f32 %v455, %v100
    %v458 = vmul.f32 %v456, %v101
    %v459 = vadd.f32 %v457, %v102
    %v460 = vadd.f32 %v458, %v103
    %v461 = vmul.f32 %v459, %v390
    %v462 = vmul.f32 %v459, %v460
    %464 = vrot.lane.b32.xlu0 %v462, 64
    %v465 = vpop.permute.xlu0 %464
    %v467 = vadd.f32 %v461, %v465
    %v468 = vtanh.pop %v467
    %v469 = vmul.f32 %v460, %v468
    %471 = vrot.lane.b32.xlu0 %v469, 64
    %v472 = vpop.permute.xlu0 %471
    %474 = vst.msk [vmem:[#allocation3 + $0x8] sm:$0xff] %vm397, %v472
    %475 = vrot.lane.b32.xlu0 %v469, 32
    %v476 = vpop.permute.xlu0 %475
    %478 = vst.msk [vmem:[#allocation4 + $0x30] sm:$0xff] %vm397, %v476
    %v479 = vld [vmem:[#allocation2 + $0x20] sm:$0xff]
    %v480 = vld [vmem:[#allocation2 + $0x28] sm:$0xff]
    %v481 = vpack.c.bf16 %v469, %v469
    %483 = vrot.lane.b32.xlu0 %v481, 64
    %v484 = vpop.permute.xlu0 %483
    %v486 = vsel %vm331, %v484, 0
    %488 = vmatprep.subr.bf16.mxu0 %v316
    %489 = vmatpush1.bf16.msra.mxu0 %v315
    %490 = vmatprep.subr.bf16.mxu0 %v318
    %491 = vmatpush1.bf16.msra.mxu0 %v317
    %492 = vmatprep.subr.bf16.mxu0 %v320
    %493 = vmatpush1.bf16.msra.mxu0 %v319
    %494 = vmatprep.subr.bf16.mxu0 %v322
    %495 = vmatpush1.bf16.msra.mxu0 %v321
    %496 = vmatprep.subr.bf16.mxu0 0
    %497 = vmatpush1.bf16.msra.mxu0 0
    %498 = vmatprep.subr.bf16.mxu0 0
    %499 = vmatpush1.bf16.msra.mxu0 0
    %500 = vmatprep.subr.bf16.mxu0 0
    %501 = vmatpush1.bf16.msra.mxu0 0
    %502 = vmatprep.subr.bf16.mxu0 0
    %503 = vmatpush1.bf16.msra.mxu0 0
    %504 = vmatprep.subr.bf16.mxu0 0
    %505 = vmatpush1.bf16.msra.mxu0 0
    %506 = vmatprep.subr.bf16.mxu0 0
    %507 = vmatpush1.bf16.msra.mxu0 0
    %508 = vmatprep.subr.bf16.mxu0 0
    %509 = vmatpush1.bf16.msra.mxu0 0
    %510 = vmatprep.subr.bf16.mxu0 0
    %511 = vmatpush1.bf16.msra.mxu0 0
    %512 = vmatprep.subr.bf16.mxu0 0
    %513 = vmatpush1.bf16.msra.mxu0 0
    %514 = vmatprep.subr.bf16.mxu0 0
    %515 = vmatpush1.bf16.msra.mxu0 0
    %516 = vmatprep.subr.bf16.mxu0 0
    %517 = vmatpush1.bf16.msra.mxu0 0
    %518 = vmatprep.subr.bf16.mxu0 0
    %519 = vmatpush1.bf16.msra.mxu0 0
    %520 = vmatprep.mubr.bf16.mxu0 0
    %521 = vmatmul.mubr.bf16.gmra.mrb[0].mxu0 %v486
    %v522 = vpop.f32.mrb[0].mxu0
    %v523 = vadd.f32 0.0, %v522
    %v524 = vpop.f32.mrb[0].mxu0
    %v525 = vadd.f32 0.0, %v524
    %v526 = vpop.f32.mrb[0].mxu0
    %v527 = vpop.f32.mrb[0].mxu0
    %528 = vdwg.mxu0
    %v529 = vadd.f32 %v479, %v523
    %v530 = vadd.f32 %v480, %v525
    %v531 = vtanh.pop %v529
    %v532 = vtanh.pop %v530
    %v533 = vmul.f32 %v531, %v100
    %v534 = vmul.f32 %v532, %v101
    %v535 = vadd.f32 %v533, %v102
    %v536 = vadd.f32 %v534, %v103
    %v537 = vmul.f32 %v535, %v467
    %v538 = vmul.f32 %v535, %v536
    %540 = vrot.lane.b32.xlu0 %v538, 64
    %v541 = vpop.permute.xlu0 %540
    %v543 = vadd.f32 %v537, %v541
    %v544 = vtanh.pop %v543
    %v545 = vmul.f32 %v536, %v544
    %547 = vrot.lane.b32.xlu0 %v545, 64
    %v548 = vpop.permute.xlu0 %547
    %550 = vst.msk [vmem:[#allocation3 + $0x10] sm:$0xff] %vm397, %v548
    %551 = vrot.lane.b32.xlu0 %v545, 32
    %v552 = vpop.permute.xlu0 %551
    %554 = vst.msk [vmem:[#allocation4 + $0x28] sm:$0xff] %vm397, %v552
    %v555 = vld [vmem:[#allocation2 + $0x30] sm:$0xff]
    %v556 = vld [vmem:[#allocation2 + $0x38] sm:$0xff]
    %v557 = vpack.c.bf16 %v545, %v545
    %559 = vrot.lane.b32.xlu0 %v557, 64
    %v560 = vpop.permute.xlu0 %559
    %v562 = vsel %vm331, %v560, 0
    %564 = vmatprep.subr.bf16.mxu0 %v316
    %565 = vmatpush1.bf16.msra.mxu0 %v315
    %566 = vmatprep.subr.bf16.mxu0 %v318
    %567 = vmatpush1.bf16.msra.mxu0 %v317
    %568 = vmatprep.subr.bf16.mxu0 %v320
    %569 = vmatpush1.bf16.msra.mxu0 %v319
    %570 = vmatprep.subr.bf16.mxu0 %v322
    %571 = vmatpush1.bf16.msra.mxu0 %v321
    %572 = vmatprep.subr.bf16.mxu0 0
    %573 = vmatpush1.bf16.msra.mxu0 0
    %574 = vmatprep.subr.bf16.mxu0 0
    %575 = vmatpush1.bf16.msra.mxu0 0
    %576 = vmatprep.subr.bf16.mxu0 0
    %577 = vmatpush1.bf16.msra.mxu0 0
    %578 = vmatprep.subr.bf16.mxu0 0
    %579 = vmatpush1.bf16.msra.mxu0 0
    %580 = vmatprep.subr.bf16.mxu0 0
    %581 = vmatpush1.bf16.msra.mxu0 0
    %582 = vmatprep.subr.bf16.mxu0 0
    %583 = vmatpush1.bf16.msra.mxu0 0
    %584 = vmatprep.subr.bf16.mxu0 0
    %585 = vmatpush1.bf16.msra.mxu0 0
    %586 = vmatprep.subr.bf16.mxu0 0
    %587 = vmatpush1.bf16.msra.mxu0 0
    %588 = vmatprep.subr.bf16.mxu0 0
    %589 = vmatpush1.bf16.msra.mxu0 0
    %590 = vmatprep.subr.bf16.mxu0 0
    %591 = vmatpush1.bf16.msra.mxu0 0
    %592 = vmatprep.subr.bf16.mxu0 0
    %593 = vmatpush1.bf16.msra.mxu0 0
    %594 = vmatprep.subr.bf16.mxu0 0
    %595 = vmatpush1.bf16.msra.mxu0 0
    %596 = vmatprep.mubr.bf16.mxu0 0
    %597 = vmatmul.mubr.bf16.gmra.mrb[0].mxu0 %v562
    %v598 = vpop.f32.mrb[0].mxu0
    %v599 = vadd.f32 0.0, %v598
    %v600 = vpop.f32.mrb[0].mxu0
    %v601 = vadd.f32 0.0, %v600
    %v602 = vpop.f32.mrb[0].mxu0
    %v603 = vpop.f32.mrb[0].mxu0
    %604 = vdwg.mxu0
    %v605 = vadd.f32 %v555, %v599
    %v606 = vadd.f32 %v556, %v601
    %v607 = vtanh.pop %v605
    %v608 = vtanh.pop %v606
    %v609 = vmul.f32 %v607, %v100
    %v610 = vmul.f32 %v608, %v101
    %v611 = vadd.f32 %v609, %v102
    %v612 = vadd.f32 %v610, %v103
    %v613 = vmul.f32 %v611, %v543
    %v614 = vmul.f32 %v611, %v612
    %616 = vrot.lane.b32.xlu0 %v614, 64
    %v617 = vpop.permute.xlu0 %616
    %v619 = vadd.f32 %v613, %v617
    %v620 = vtanh.pop %v619
    %v621 = vmul.f32 %v612, %v620
    %623 = vrot.lane.b32.xlu0 %v621, 64
    %v624 = vpop.permute.xlu0 %623
    %626 = vst.msk [vmem:[#allocation3 + $0x18] sm:$0xff] %vm397, %v624
    %627 = vrot.lane.b32.xlu0 %v621, 32
    %v628 = vpop.permute.xlu0 %627
    %630 = vst.msk [vmem:[#allocation4 + $0x20] sm:$0xff] %vm397, %v628
    %v631 = vld [vmem:[#allocation2 + $0x40] sm:$0xff]
    %v632 = vld [vmem:[#allocation2 + $0x48] sm:$0xff]
    %v633 = vpack.c.bf16 %v621, %v621
    %635 = vrot.lane.b32.xlu0 %v633, 64
    %v636 = vpop.permute.xlu0 %635
    %v638 = vsel %vm331, %v636, 0
    %640 = vmatprep.subr.bf16.mxu0 %v316
    %641 = vmatpush1.bf16.msra.mxu0 %v315
    %642 = vmatprep.subr.bf16.mxu0 %v318
    %643 = vmatpush1.bf16.msra.mxu0 %v317
    %644 = vmatprep.subr.bf16.mxu0 %v320
    %645 = vmatpush1.bf16.msra.mxu0 %v319
    %646 = vmatprep.subr.bf16.mxu0 %v322
    %647 = vmatpush1.bf16.msra.mxu0 %v321
    %648 = vmatprep.subr.bf16.mxu0 0
    %649 = vmatpush1.bf16.msra.mxu0 0
    %650 = vmatprep.subr.bf16.mxu0 0
    %651 = vmatpush1.bf16.msra.mxu0 0
    %652 = vmatprep.subr.bf16.mxu0 0
    %653 = vmatpush1.bf16.msra.mxu0 0
    %654 = vmatprep.subr.bf16.mxu0 0
    %655 = vmatpush1.bf16.msra.mxu0 0
    %656 = vmatprep.subr.bf16.mxu0 0
    %657 = vmatpush1.bf16.msra.mxu0 0
    %658 = vmatprep.subr.bf16.mxu0 0
    %659 = vmatpush1.bf16.msra.mxu0 0
    %660 = vmatprep.subr.bf16.mxu0 0
    %661 = vmatpush1.bf16.msra.mxu0 0
    %662 = vmatprep.subr.bf16.mxu0 0
    %663 = vmatpush1.bf16.msra.mxu0 0
    %664 = vmatprep.subr.bf16.mxu0 0
    %665 = vmatpush1.bf16.msra.mxu0 0
    %666 = vmatprep.subr.bf16.mxu0 0
    %667 = vmatpush1.bf16.msra.mxu0 0
    %668 = vmatprep.subr.bf16.mxu0 0
    %669 = vmatpush1.bf16.msra.mxu0 0
    %670 = vmatprep.subr.bf16.mxu0 0
    %671 = vmatpush1.bf16.msra.mxu0 0
    %672 = vmatprep.mubr.bf16.mxu0 0
    %673 = vmatmul.mubr.bf16.gmra.mrb[0].mxu0 %v638
    %v674 = vpop.f32.mrb[0].mxu0
    %v675 = vadd.f32 0.0, %v674
    %v676 = vpop.f32.mrb[0].mxu0
    %v677 = vadd.f32 0.0, %v676
    %v678 = vpop.f32.mrb[0].mxu0
    %v679 = vpop.f32.mrb[0].mxu0
    %680 = vdwg.mxu0
    %v681 = vadd.f32 %v631, %v675
    %v682 = vadd.f32 %v632, %v677
    %v683 = vtanh.pop %v681
    %v684 = vtanh.pop %v682
    %v685 = vmul.f32 %v683, %v100
    %v686 = vmul.f32 %v684, %v101
    %v687 = vadd.f32 %v685, %v102
    %v688 = vadd.f32 %v686, %v103
    %v689 = vmul.f32 %v687, %v619
    %v690 = vmul.f32 %v687, %v688
    %692 = vrot.lane.b32.xlu0 %v690, 64
    %v693 = vpop.permute.xlu0 %692
    %v695 = vadd.f32 %v689, %v693
    %v696 = vtanh.pop %v695
    %v697 = vmul.f32 %v688, %v696
    %699 = vrot.lane.b32.xlu0 %v697, 64
    %v700 = vpop.permute.xlu0 %699
    %702 = vst.msk [vmem:[#allocation3 + $0x20] sm:$0xff] %vm397, %v700
    %703 = vrot.lane.b32.xlu0 %v697, 32
    %v704 = vpop.permute.xlu0 %703
    %706 = vst.msk [vmem:[#allocation4 + $0x18] sm:$0xff] %vm397, %v704
    %v707 = vld [vmem:[#allocation2 + $0x50] sm:$0xff]
    %v708 = vld [vmem:[#allocation2 + $0x58] sm:$0xff]
    %v709 = vpack.c.bf16 %v697, %v697
    %711 = vrot.lane.b32.xlu0 %v709, 64
    %v712 = vpop.permute.xlu0 %711
    %v714 = vsel %vm331, %v712, 0
    %716 = vmatprep.subr.bf16.mxu0 %v316
    %717 = vmatpush1.bf16.msra.mxu0 %v315
    %718 = vmatprep.subr.bf16.mxu0 %v318
    %719 = vmatpush1.bf16.msra.mxu0 %v317
    %720 = vmatprep.subr.bf16.mxu0 %v320
    %721 = vmatpush1.bf16.msra.mxu0 %v319
    %722 = vmatprep.subr.bf16.mxu0 %v322
    %723 = vmatpush1.bf16.msra.mxu0 %v321
    %724 = vmatprep.subr.bf16.mxu0 0
    %725 = vmatpush1.bf16.msra.mxu0 0
    %726 = vmatprep.subr.bf16.mxu0 0
    %727 = vmatpush1.bf16.msra.mxu0 0
    %728 = vmatprep.subr.bf16.mxu0 0
    %729 = vmatpush1.bf16.msra.mxu0 0
    %730 = vmatprep.subr.bf16.mxu0 0
    %731 = vmatpush1.bf16.msra.mxu0 0
    %732 = vmatprep.subr.bf16.mxu0 0
    %733 = vmatpush1.bf16.msra.mxu0 0
    %734 = vmatprep.subr.bf16.mxu0 0
    %735 = vmatpush1.bf16.msra.mxu0 0
    %736 = vmatprep.subr.bf16.mxu0 0
    %737 = vmatpush1.bf16.msra.mxu0 0
    %738 = vmatprep.subr.bf16.mxu0 0
    %739 = vmatpush1.bf16.msra.mxu0 0
    %740 = vmatprep.subr.bf16.mxu0 0
    %741 = vmatpush1.bf16.msra.mxu0 0
    %742 = vmatprep.subr.bf16.mxu0 0
    %743 = vmatpush1.bf16.msra.mxu0 0
    %744 = vmatprep.subr.bf16.mxu0 0
    %745 = vmatpush1.bf16.msra.mxu0 0
    %746 = vmatprep.subr.bf16.mxu0 0
    %747 = vmatpush1.bf16.msra.mxu0 0
    %748 = vmatprep.mubr.bf16.mxu0 0
    %749 = vmatmul.mubr.bf16.gmra.mrb[0].mxu0 %v714
    %v750 = vpop.f32.mrb[0].mxu0
    %v751 = vadd.f32 0.0, %v750
    %v752 = vpop.f32.mrb[0].mxu0
    %v753 = vadd.f32 0.0, %v752
    %v754 = vpop.f32.mrb[0].mxu0
    %v755 = vpop.f32.mrb[0].mxu0
    %756 = vdwg.mxu0
    %v757 = vadd.f32 %v707, %v751
    %v758 = vadd.f32 %v708, %v753
    %v759 = vtanh.pop %v757
    %v760 = vtanh.pop %v758
    %v761 = vmul.f32 %v759, %v100
    %v762 = vmul.f32 %v760, %v101
    %v763 = vadd.f32 %v761, %v102
    %v764 = vadd.f32 %v762, %v103
    %v765 = vmul.f32 %v763, %v695
    %v766 = vmul.f32 %v763, %v764
    %768 = vrot.lane.b32.xlu0 %v766, 64
    %v769 = vpop.permute.xlu0 %768
    %v771 = vadd.f32 %v765, %v769
    %v772 = vtanh.pop %v771
    %v773 = vmul.f32 %v764, %v772
    %775 = vrot.lane.b32.xlu0 %v773, 64
    %v776 = vpop.permute.xlu0 %775
    %778 = vst.msk [vmem:[#allocation3 + $0x28] sm:$0xff] %vm397, %v776
    %779 = vrot.lane.b32.xlu0 %v773, 32
    %v780 = vpop.permute.xlu0 %779
    %782 = vst.msk [vmem:[#allocation4 + $0x10] sm:$0xff] %vm397, %v780
    %v783 = vld [vmem:[#allocation2 + $0x60] sm:$0xff]
    %v784 = vld [vmem:[#allocation2 + $0x68] sm:$0xff]
    %v785 = vpack.c.bf16 %v773, %v773
    %787 = vrot.lane.b32.xlu0 %v785, 64
    %v788 = vpop.permute.xlu0 %787
    %v790 = vsel %vm331, %v788, 0
    %792 = vmatprep.subr.bf16.mxu0 %v316
    %793 = vmatpush1.bf16.msra.mxu0 %v315
    %794 = vmatprep.subr.bf16.mxu0 %v318
    %795 = vmatpush1.bf16.msra.mxu0 %v317
    %796 = vmatprep.subr.bf16.mxu0 %v320
    %797 = vmatpush1.bf16.msra.mxu0 %v319
    %798 = vmatprep.subr.bf16.mxu0 %v322
    %799 = vmatpush1.bf16.msra.mxu0 %v321
    %800 = vmatprep.subr.bf16.mxu0 0
    %801 = vmatpush1.bf16.msra.mxu0 0
    %802 = vmatprep.subr.bf16.mxu0 0
    %803 = vmatpush1.bf16.msra.mxu0 0
    %804 = vmatprep.subr.bf16.mxu0 0
    %805 = vmatpush1.bf16.msra.mxu0 0
    %806 = vmatprep.subr.bf16.mxu0 0
    %807 = vmatpush1.bf16.msra.mxu0 0
    %808 = vmatprep.subr.bf16.mxu0 0
    %809 = vmatpush1.bf16.msra.mxu0 0
    %810 = vmatprep.subr.bf16.mxu0 0
    %811 = vmatpush1.bf16.msra.mxu0 0
    %812 = vmatprep.subr.bf16.mxu0 0
    %813 = vmatpush1.bf16.msra.mxu0 0
    %814 = vmatprep.subr.bf16.mxu0 0
    %815 = vmatpush1.bf16.msra.mxu0 0
    %816 = vmatprep.subr.bf16.mxu0 0
    %817 = vmatpush1.bf16.msra.mxu0 0
    %818 = vmatprep.subr.bf16.mxu0 0
    %819 = vmatpush1.bf16.msra.mxu0 0
    %820 = vmatprep.subr.bf16.mxu0 0
    %821 = vmatpush1.bf16.msra.mxu0 0
    %822 = vmatprep.subr.bf16.mxu0 0
    %823 = vmatpush1.bf16.msra.mxu0 0
    %824 = vmatprep.mubr.bf16.mxu0 0
    %825 = vmatmul.mubr.bf16.gmra.mrb[0].mxu0 %v790
    %v826 = vpop.f32.mrb[0].mxu0
    %v827 = vadd.f32 0.0, %v826
    %v828 = vpop.f32.mrb[0].mxu0
    %v829 = vadd.f32 0.0, %v828
    %v830 = vpop.f32.mrb[0].mxu0
    %v831 = vpop.f32.mrb[0].mxu0
    %832 = vdwg.mxu0
    %v833 = vadd.f32 %v783, %v827
    %v834 = vadd.f32 %v784, %v829
    %v835 = vtanh.pop %v833
    %v836 = vtanh.pop %v834
    %v837 = vmul.f32 %v835, %v100
    %v838 = vmul.f32 %v836, %v101
    %v839 = vadd.f32 %v837, %v102
    %v840 = vadd.f32 %v838, %v103
    %v841 = vmul.f32 %v839, %v771
    %v842 = vmul.f32 %v839, %v840
    %844 = vrot.lane.b32.xlu0 %v842, 64
    %v845 = vpop.permute.xlu0 %844
    %v847 = vadd.f32 %v841, %v845
    %v848 = vtanh.pop %v847
    %v849 = vmul.f32 %v840, %v848
    %851 = vrot.lane.b32.xlu0 %v849, 64
    %v852 = vpop.permute.xlu0 %851
    %854 = vst.msk [vmem:[#allocation3 + $0x30] sm:$0xff] %vm397, %v852
    %855 = vrot.lane.b32.xlu0 %v849, 32
    %v856 = vpop.permute.xlu0 %855
    %858 = vst.msk [vmem:[#allocation4 + $0x8] sm:$0xff] %vm397, %v856
    %v859 = vld [vmem:[#allocation2 + $0x70] sm:$0xff]
    %v860 = vld [vmem:[#allocation2 + $0x78] sm:$0xff]
    %v861 = vpack.c.bf16 %v849, %v849
    %863 = vrot.lane.b32.xlu0 %v861, 64
    %v864 = vpop.permute.xlu0 %863
    %v866 = vsel %vm331, %v864, 0
    %868 = vmatprep.subr.bf16.mxu0 %v316
    %869 = vmatpush1.bf16.msra.mxu0 %v315
    %870 = vmatprep.subr.bf16.mxu0 %v318
    %871 = vmatpush1.bf16.msra.mxu0 %v317
    %872 = vmatprep.subr.bf16.mxu0 %v320
    %873 = vmatpush1.bf16.msra.mxu0 %v319
    %874 = vmatprep.subr.bf16.mxu0 %v322
    %875 = vmatpush1.bf16.msra.mxu0 %v321
    %876 = vmatprep.subr.bf16.mxu0 0
    %877 = vmatpush1.bf16.msra.mxu0 0
    %878 = vmatprep.subr.bf16.mxu0 0
    %879 = vmatpush1.bf16.msra.mxu0 0
    %880 = vmatprep.subr.bf16.mxu0 0
    %881 = vmatpush1.bf16.msra.mxu0 0
    %882 = vmatprep.subr.bf16.mxu0 0
    %883 = vmatpush1.bf16.msra.mxu0 0
    %884 = vmatprep.subr.bf16.mxu0 0
    %885 = vmatpush1.bf16.msra.mxu0 0
    %886 = vmatprep.subr.bf16.mxu0 0
    %887 = vmatpush1.bf16.msra.mxu0 0
    %888 = vmatprep.subr.bf16.mxu0 0
    %889 = vmatpush1.bf16.msra.mxu0 0
    %890 = vmatprep.subr.bf16.mxu0 0
    %891 = vmatpush1.bf16.msra.mxu0 0
    %892 = vmatprep.subr.bf16.mxu0 0
    %893 = vmatpush1.bf16.msra.mxu0 0
    %894 = vmatprep.subr.bf16.mxu0 0
    %895 = vmatpush1.bf16.msra.mxu0 0
    %896 = vmatprep.subr.bf16.mxu0 0
    %897 = vmatpush1.bf16.msra.mxu0 0
    %898 = vmatprep.subr.bf16.mxu0 0
    %899 = vmatpush1.bf16.msra.mxu0 0
    %900 = vmatprep.mubr.bf16.mxu0 0
    %901 = vmatmul.mubr.bf16.gmra.mrb[0].mxu0 %v866
    %v902 = vpop.f32.mrb[0].mxu0
    %v903 = vadd.f32 0.0, %v902
    %v904 = vpop.f32.mrb[0].mxu0
    %v905 = vadd.f32 0.0, %v904
    %v906 = vpop.f32.mrb[0].mxu0
    %v907 = vpop.f32.mrb[0].mxu0
    %908 = vdwg.mxu0
    %v909 = vadd.f32 %v859, %v903
    %v910 = vadd.f32 %v860, %v905
    %v911 = vtanh.pop %v909
    %v912 = vtanh.pop %v910
    %v913 = vmul.f32 %v911, %v100
    %v914 = vmul.f32 %v912, %v101
    %v915 = vadd.f32 %v913, %v102
    %v916 = vadd.f32 %v914, %v103
    %v917 = vmul.f32 %v915, %v847
    %v918 = vmul.f32 %v915, %v916
    %920 = vrot.lane.b32.xlu0 %v918, 64
    %v921 = vpop.permute.xlu0 %920
    %v923 = vadd.f32 %v917, %v921
    %v924 = vtanh.pop %v923
    %v925 = vmul.f32 %v916, %v924
    %927 = vrot.lane.b32.xlu0 %v925, 64
    %v928 = vpop.permute.xlu0 %927
    %930 = vst.msk [vmem:[#allocation3 + $0x38] sm:$0xff] %vm397, %v928
    %931 = vrot.lane.b32.xlu0 %v925, 32
    %v932 = vpop.permute.xlu0 %931
    %934 = vst.msk [vmem:[#allocation4] sm:$0xff] %vm397, %v932
    %v935 = vld [vmem:[#allocation3] sm:$0xff]
    %v936 = vld [vmem:[#allocation3 + $0x8] sm:$0xff]
    %v937 = vld [vmem:[#allocation3 + $0x10] sm:$0xff]
    %v938 = vld [vmem:[#allocation3 + $0x18] sm:$0xff]
    %v939 = vld [vmem:[#allocation3 + $0x20] sm:$0xff]
    %v940 = vld [vmem:[#allocation3 + $0x28] sm:$0xff]
    %v941 = vld [vmem:[#allocation3 + $0x30] sm:$0xff]
    %v942 = vld [vmem:[#allocation3 + $0x38] sm:$0xff]
    %v943 = vpack.c.bf16 %v936, %v935
    %v944 = vpack.c.bf16 %v938, %v937
    %v945 = vpack.c.bf16 %v940, %v939
    %v946 = vpack.c.bf16 %v942, %v941
    %v947 = vld [vmem:[#allocation4] sm:$0xff]
    %v948 = vld [vmem:[#allocation4 + $0x8] sm:$0xff]
    %v949 = vld [vmem:[#allocation4 + $0x10] sm:$0xff]
    %v950 = vld [vmem:[#allocation4 + $0x18] sm:$0xff]
    %v951 = vld [vmem:[#allocation4 + $0x20] sm:$0xff]
    %v952 = vld [vmem:[#allocation4 + $0x28] sm:$0xff]
    %v953 = vld [vmem:[#allocation4 + $0x30] sm:$0xff]
    %v954 = vld [vmem:[#allocation4 + $0x38] sm:$0xff]
    %v955 = vpack.c.bf16 %v948, %v947
    %v956 = vpack.c.bf16 %v950, %v949
    %v957 = vpack.c.bf16 %v952, %v951
    %v958 = vpack.c.bf16 %v954, %v953
    %v959 = vld [vmem:[#allocation7] sm:$0xff]
    %v960 = vld [vmem:[#allocation7 + $0x8] sm:$0xff]
    %v961 = vld [vmem:[#allocation7 + $0x10] sm:$0xff]
    %v962 = vld [vmem:[#allocation7 + $0x18] sm:$0xff]
    %v963 = vld [vmem:[#allocation7 + $0x20] sm:$0xff]
    %v964 = vld [vmem:[#allocation7 + $0x28] sm:$0xff]
    %v965 = vld [vmem:[#allocation7 + $0x30] sm:$0xff]
    %v966 = vld [vmem:[#allocation7 + $0x38] sm:$0xff]
    %v971 = vunpack.c.l.b16 %v963
    %v972 = vunpack.c.h.b16 %v963
    %v973 = vunpack.c.l.b16 %v964
    %v974 = vunpack.c.h.b16 %v964
    %v975 = vunpack.c.l.b16 %v965
    %v976 = vunpack.c.h.b16 %v965
    %v977 = vunpack.c.l.b16 %v966
    %v978 = vunpack.c.h.b16 %v966
    %v979 = vpack.c.b16 %v973, %v971
    %v980 = vpack.c.b16 %v974, %v972
    %v981 = vpack.c.b16 %v977, %v975
    %v982 = vpack.c.b16 %v978, %v976
    %v988 = vsel %vm397, %v955, 0
    %v991 = vsel %vm397, %v956, 0
    %v994 = vsel %vm397, %v957, 0
    %v997 = vsel %vm397, %v958, 0
    %999 = vmatprep.subr.bf16.mxu0 %v980
    %1000 = vmatpush1.bf16.msra.mxu0 %v979
    %1001 = vmatprep.subr.bf16.mxu0 %v982
    %1002 = vmatpush1.bf16.msra.mxu0 %v981
    %1003 = vmatprep.subr.bf16.mxu0 0
    %1004 = vmatpush1.bf16.msra.mxu0 0
    %1005 = vmatprep.subr.bf16.mxu0 0
    %1006 = vmatpush1.bf16.msra.mxu0 0
    %1007 = vmatprep.subr.bf16.mxu0 0
    %1008 = vmatpush1.bf16.msra.mxu0 0
    %1009 = vmatprep.subr.bf16.mxu0 0
    %1010 = vmatpush1.bf16.msra.mxu0 0
    %1011 = vmatprep.subr.bf16.mxu0 0
    %1012 = vmatpush1.bf16.msra.mxu0 0
    %1013 = vmatprep.subr.bf16.mxu0 0
    %1014 = vmatpush1.bf16.msra.mxu0 0
    %1015 = vmatprep.subr.bf16.mxu0 0
    %1016 = vmatpush1.bf16.msra.mxu0 0
    %1017 = vmatprep.subr.bf16.mxu0 0
    %1018 = vmatpush1.bf16.msra.mxu0 0
    %1019 = vmatprep.subr.bf16.mxu0 0
    %1020 = vmatpush1.bf16.msra.mxu0 0
    %1021 = vmatprep.subr.bf16.mxu0 0
    %1022 = vmatpush1.bf16.msra.mxu0 0
    %1023 = vmatprep.subr.bf16.mxu0 0
    %1024 = vmatpush1.bf16.msra.mxu0 0
    %1025 = vmatprep.subr.bf16.mxu0 0
    %1026 = vmatpush1.bf16.msra.mxu0 0
    %1027 = vmatprep.subr.bf16.mxu0 0
    %1028 = vmatpush1.bf16.msra.mxu0 0
    %1029 = vmatprep.subr.bf16.mxu0 0
    %1030 = vmatpush1.bf16.msra.mxu0 0
    %1031 = vmatprep.mubr.bf16.mxu0 0
    %1032 = vmatmul.mubr.bf16.gmra.mrb[0].mxu0 %v988
    %v1033 = vpop.f32.mrb[0].mxu0
    %v1034 = vadd.f32 0.0, %v1033
    %v1035 = vpop.f32.mrb[0].mxu0
    %v1036 = vadd.f32 0.0, %v1035
    %v1037 = vpop.f32.mrb[0].mxu0
    %v1038 = vadd.f32 0.0, %v1037
    %v1039 = vpop.f32.mrb[0].mxu0
    %v1040 = vadd.f32 0.0, %v1039
    %1041 = vmatprep.mubr.bf16.mxu0 0
    %1042 = vmatmul.mubr.bf16.gmra.mrb[0].mxu0 %v991
    %v1043 = vpop.f32.mrb[0].mxu0
    %v1044 = vadd.f32 0.0, %v1043
    %v1045 = vpop.f32.mrb[0].mxu0
    %v1046 = vadd.f32 0.0, %v1045
    %v1047 = vpop.f32.mrb[0].mxu0
    %v1048 = vadd.f32 0.0, %v1047
    %v1049 = vpop.f32.mrb[0].mxu0
    %v1050 = vadd.f32 0.0, %v1049
    %1051 = vmatprep.mubr.bf16.mxu0 0
    %1052 = vmatmul.mubr.bf16.gmra.mrb[0].mxu0 %v994
    %v1053 = vpop.f32.mrb[0].mxu0
    %v1054 = vadd.f32 0.0, %v1053
    %v1055 = vpop.f32.mrb[0].mxu0
    %v1056 = vadd.f32 0.0, %v1055
    %v1057 = vpop.f32.mrb[0].mxu0
    %v1058 = vadd.f32 0.0, %v1057
    %v1059 = vpop.f32.mrb[0].mxu0
    %v1060 = vadd.f32 0.0, %v1059
    %1061 = vmatprep.mubr.bf16.mxu0 0
    %1062 = vmatmul.mubr.bf16.gmra.mrb[0].mxu0 %v997
    %v1063 = vpop.f32.mrb[0].mxu0
    %v1064 = vadd.f32 0.0, %v1063
    %v1065 = vpop.f32.mrb[0].mxu0
    %v1066 = vadd.f32 0.0, %v1065
    %v1067 = vpop.f32.mrb[0].mxu0
    %v1068 = vadd.f32 0.0, %v1067
    %v1069 = vpop.f32.mrb[0].mxu0
    %v1070 = vadd.f32 0.0, %v1069
    %1071 = vdwg.mxu0
    %v1076 = vunpack.c.l.b16 %v959
    %v1077 = vunpack.c.h.b16 %v959
    %v1078 = vunpack.c.l.b16 %v960
    %v1079 = vunpack.c.h.b16 %v960
    %v1080 = vunpack.c.l.b16 %v961
    %v1081 = vunpack.c.h.b16 %v961
    %v1082 = vunpack.c.l.b16 %v962
    %v1083 = vunpack.c.h.b16 %v962
    %v1084 = vpack.c.b16 %v1078, %v1076
    %v1085 = vpack.c.b16 %v1079, %v1077
    %v1086 = vpack.c.b16 %v1082, %v1080
    %v1087 = vpack.c.b16 %v1083, %v1081
    %v1093 = vsel %vm397, %v943, 0
    %v1096 = vsel %vm397, %v944, 0
    %v1099 = vsel %vm397, %v945, 0
    %v1102 = vsel %vm397, %v946, 0
    %1104 = vmatprep.subr.bf16.mxu0 %v1085
    %1105 = vmatpush1.bf16.msra.mxu0 %v1084
    %1106 = vmatprep.subr.bf16.mxu0 %v1087
    %1107 = vmatpush1.bf16.msra.mxu0 %v1086
    %1108 = vmatprep.subr.bf16.mxu0 0
    %1109 = vmatpush1.bf16.msra.mxu0 0
    %1110 = vmatprep.subr.bf16.mxu0 0
    %1111 = vmatpush1.bf16.msra.mxu0 0
    %1112 = vmatprep.subr.bf16.mxu0 0
    %1113 = vmatpush1.bf16.msra.mxu0 0
    %1114 = vmatprep.subr.bf16.mxu0 0
    %1115 = vmatpush1.bf16.msra.mxu0 0
    %1116 = vmatprep.subr.bf16.mxu0 0
    %1117 = vmatpush1.bf16.msra.mxu0 0
    %1118 = vmatprep.subr.bf16.mxu0 0
    %1119 = vmatpush1.bf16.msra.mxu0 0
    %1120 = vmatprep.subr.bf16.mxu0 0
    %1121 = vmatpush1.bf16.msra.mxu0 0
    %1122 = vmatprep.subr.bf16.mxu0 0
    %1123 = vmatpush1.bf16.msra.mxu0 0
    %1124 = vmatprep.subr.bf16.mxu0 0
    %1125 = vmatpush1.bf16.msra.mxu0 0
    %1126 = vmatprep.subr.bf16.mxu0 0
    %1127 = vmatpush1.bf16.msra.mxu0 0
    %1128 = vmatprep.subr.bf16.mxu0 0
    %1129 = vmatpush1.bf16.msra.mxu0 0
    %1130 = vmatprep.subr.bf16.mxu0 0
    %1131 = vmatpush1.bf16.msra.mxu0 0
    %1132 = vmatprep.subr.bf16.mxu0 0
    %1133 = vmatpush1.bf16.msra.mxu0 0
    %1134 = vmatprep.subr.bf16.mxu0 0
    %1135 = vmatpush1.bf16.msra.mxu0 0
    %1136 = vmatprep.mubr.bf16.mxu0 0
    %1137 = vmatmul.mubr.bf16.gmra.mrb[0].mxu0 %v1093
    %v1138 = vpop.f32.mrb[0].mxu0
    %v1139 = vadd.f32 %v1034, %v1138
    %v1140 = vpop.f32.mrb[0].mxu0
    %v1141 = vadd.f32 %v1036, %v1140
    %v1142 = vpop.f32.mrb[0].mxu0
    %v1143 = vadd.f32 %v1038, %v1142
    %v1144 = vpop.f32.mrb[0].mxu0
    %v1145 = vadd.f32 %v1040, %v1144
    %1146 = vmatprep.mubr.bf16.mxu0 0
    %1147 = vmatmul.mubr.bf16.gmra.mrb[0].mxu0 %v1096
    %v1148 = vpop.f32.mrb[0].mxu0
    %v1149 = vadd.f32 %v1044, %v1148
    %v1150 = vpop.f32.mrb[0].mxu0
    %v1151 = vadd.f32 %v1046, %v1150
    %v1152 = vpop.f32.mrb[0].mxu0
    %v1153 = vadd.f32 %v1048, %v1152
    %v1154 = vpop.f32.mrb[0].mxu0
    %v1155 = vadd.f32 %v1050, %v1154
    %1156 = vmatprep.mubr.bf16.mxu0 0
    %1157 = vmatmul.mubr.bf16.gmra.mrb[0].mxu0 %v1099
    %v1158 = vpop.f32.mrb[0].mxu0
    %v1159 = vadd.f32 %v1054, %v1158
    %v1160 = vpop.f32.mrb[0].mxu0
    %v1161 = vadd.f32 %v1056, %v1160
    %v1162 = vpop.f32.mrb[0].mxu0
    %v1163 = vadd.f32 %v1058, %v1162
    %v1164 = vpop.f32.mrb[0].mxu0
    %v1165 = vadd.f32 %v1060, %v1164
    %1166 = vmatprep.mubr.bf16.mxu0 0
    %1167 = vmatmul.mubr.bf16.gmra.mrb[0].mxu0 %v1102
    %v1168 = vpop.f32.mrb[0].mxu0
    %v1169 = vadd.f32 %v1064, %v1168
    %v1170 = vpop.f32.mrb[0].mxu0
    %v1171 = vadd.f32 %v1066, %v1170
    %v1172 = vpop.f32.mrb[0].mxu0
    %v1173 = vadd.f32 %v1068, %v1172
    %v1174 = vpop.f32.mrb[0].mxu0
    %v1175 = vadd.f32 %v1070, %v1174
    %1176 = vdwg.mxu0
    %v1177 = vlaneseq
    %v1178 = vshrl.u32 %v1177, 7
    %v1179 = vsub.s32 1, %v1178
    %v1180 = vrot.slane %v62, %v1179
    %v1181 = vlaneseq
    %v1182 = vshrl.u32 %v1181, 7
    %v1183 = vsub.s32 5, %v1182
    %v1184 = vrot.slane %v62, %v1183
    %v1187 = vlaneseq
    %v1188 = vshrl.u32 %v1187, 7
    %v1189 = vsub.s32 1, %v1188
    %v1190 = vrot.slane %v1180, %v1189
    %v1191 = vlaneseq
    %v1192 = vshrl.u32 %v1191, 7
    %v1193 = vsub.s32 1, %v1192
    %v1194 = vrot.slane %v1184, %v1193
    %v1195 = vadd.f32 %v1139, %v1190
    %v1196 = vadd.f32 %v1141, %v1194
    %v1197 = vadd.f32 %v1143, %v1190
    %v1198 = vadd.f32 %v1145, %v1194
    %v1199 = vadd.f32 %v1149, %v1190
    %v1200 = vadd.f32 %v1151, %v1194
    %v1201 = vadd.f32 %v1153, %v1190
    %v1202 = vadd.f32 %v1155, %v1194
    %v1203 = vadd.f32 %v1159, %v1190
    %v1204 = vadd.f32 %v1161, %v1194
    %v1205 = vadd.f32 %v1163, %v1190
    %v1206 = vadd.f32 %v1165, %v1194
    %v1207 = vadd.f32 %v1169, %v1190
    %v1208 = vadd.f32 %v1171, %v1194
    %v1209 = vadd.f32 %v1173, %v1190
    %v1210 = vadd.f32 %v1175, %v1194
    %v1211 = vld [vmem:[#allocation7 + $0x40] sm:$0xff]
    %v1212 = vld [vmem:[#allocation7 + $0x48] sm:$0xff]
    %v1213 = vld [vmem:[#allocation7 + $0x50] sm:$0xff]
    %v1214 = vld [vmem:[#allocation7 + $0x58] sm:$0xff]
    %v1215 = vld [vmem:[#allocation7 + $0x60] sm:$0xff]
    %v1216 = vld [vmem:[#allocation7 + $0x68] sm:$0xff]
    %v1217 = vld [vmem:[#allocation7 + $0x70] sm:$0xff]
    %v1218 = vld [vmem:[#allocation7 + $0x78] sm:$0xff]
    %v1219 = vsel %vm94, %v1209, %v1195
    %v1220 = vsel %vm95, %v1210, %v1196
    %1221 = vst [vmem:[#allocation2] sm:$0xff] %v1219
    %1222 = vst [vmem:[#allocation2 + $0x8] sm:$0xff] %v1220
    %v1223 = vsel %vm94, %v1207, %v1197
    %v1224 = vsel %vm95, %v1208, %v1198
    %1225 = vst [vmem:[#allocation2 + $0x10] sm:$0xff] %v1223
    %1226 = vst [vmem:[#allocation2 + $0x18] sm:$0xff] %v1224
    %v1227 = vsel %vm94, %v1205, %v1199
    %v1228 = vsel %vm95, %v1206, %v1200
    %1229 = vst [vmem:[#allocation2 + $0x20] sm:$0xff] %v1227
    %1230 = vst [vmem:[#allocation2 + $0x28] sm:$0xff] %v1228
    %v1231 = vsel %vm94, %v1203, %v1201
    %v1232 = vsel %vm95, %v1204, %v1202
    %1233 = vst [vmem:[#allocation2 + $0x30] sm:$0xff] %v1231
    %1234 = vst [vmem:[#allocation2 + $0x38] sm:$0xff] %v1232
    %v1235 = vsel %vm94, %v1201, %v1203
    %v1236 = vsel %vm95, %v1202, %v1204
    %1237 = vst [vmem:[#allocation2 + $0x40] sm:$0xff] %v1235
    %1238 = vst [vmem:[#allocation2 + $0x48] sm:$0xff] %v1236
    %v1239 = vsel %vm94, %v1199, %v1205
    %v1240 = vsel %vm95, %v1200, %v1206
    %1241 = vst [vmem:[#allocation2 + $0x50] sm:$0xff] %v1239
    %1242 = vst [vmem:[#allocation2 + $0x58] sm:$0xff] %v1240
    %v1243 = vsel %vm94, %v1197, %v1207
    %v1244 = vsel %vm95, %v1198, %v1208
    %1245 = vst [vmem:[#allocation2 + $0x60] sm:$0xff] %v1243
    %1246 = vst [vmem:[#allocation2 + $0x68] sm:$0xff] %v1244
    %v1247 = vsel %vm94, %v1195, %v1209
    %v1248 = vsel %vm95, %v1196, %v1210
    %1249 = vst [vmem:[#allocation2 + $0x70] sm:$0xff] %v1247
    %1250 = vst [vmem:[#allocation2 + $0x78] sm:$0xff] %v1248
    %v1251 = vld [vmem:[#allocation2] sm:$0xff]
    %v1252 = vld [vmem:[#allocation2 + $0x8] sm:$0xff]
    %v1261 = vunpack.c.l.b16 %v1211
    %v1262 = vunpack.c.h.b16 %v1211
    %v1263 = vunpack.c.l.b16 %v1212
    %v1264 = vunpack.c.h.b16 %v1212
    %v1265 = vunpack.c.l.b16 %v1213
    %v1266 = vunpack.c.h.b16 %v1213
    %v1267 = vunpack.c.l.b16 %v1214
    %v1268 = vunpack.c.h.b16 %v1214
    %v1269 = vunpack.c.l.b16 %v1215
    %v1270 = vunpack.c.h.b16 %v1215
    %v1271 = vunpack.c.l.b16 %v1216
    %v1272 = vunpack.c.h.b16 %v1216
    %v1273 = vunpack.c.l.b16 %v1217
    %v1274 = vunpack.c.h.b16 %v1217
    %v1275 = vunpack.c.l.b16 %v1218
    %v1276 = vunpack.c.h.b16 %v1218
    %v1277 = vpack.c.b16 %v1263, %v1261
    %v1278 = vpack.c.b16 %v1264, %v1262
    %v1279 = vpack.c.b16 %v1267, %v1265
    %v1280 = vpack.c.b16 %v1268, %v1266
    %v1281 = vpack.c.b16 %v1271, %v1269
    %v1282 = vpack.c.b16 %v1272, %v1270
    %v1283 = vpack.c.b16 %v1275, %v1273
    %v1284 = vpack.c.b16 %v1276, %v1274
    %1293 = vmatprep.subr.bf16.mxu0 %v1278
    %1294 = vmatpush1.bf16.msra.mxu0 %v1277
    %1295 = vmatprep.subr.bf16.mxu0 %v1280
    %1296 = vmatpush1.bf16.msra.mxu0 %v1279
    %1297 = vmatprep.subr.bf16.mxu0 %v1282
    %1298 = vmatpush1.bf16.msra.mxu0 %v1281
    %1299 = vmatprep.subr.bf16.mxu0 %v1284
    %1300 = vmatpush1.bf16.msra.mxu0 %v1283
    %1301 = vmatprep.subr.bf16.mxu0 0
    %1302 = vmatpush1.bf16.msra.mxu0 0
    %1303 = vmatprep.subr.bf16.mxu0 0
    %1304 = vmatpush1.bf16.msra.mxu0 0
    %1305 = vmatprep.subr.bf16.mxu0 0
    %1306 = vmatpush1.bf16.msra.mxu0 0
    %1307 = vmatprep.subr.bf16.mxu0 0
    %1308 = vmatpush1.bf16.msra.mxu0 0
    %1309 = vmatprep.subr.bf16.mxu0 0
    %1310 = vmatpush1.bf16.msra.mxu0 0
    %1311 = vmatprep.subr.bf16.mxu0 0
    %1312 = vmatpush1.bf16.msra.mxu0 0
    %1313 = vmatprep.subr.bf16.mxu0 0
    %1314 = vmatpush1.bf16.msra.mxu0 0
    %1315 = vmatprep.subr.bf16.mxu0 0
    %1316 = vmatpush1.bf16.msra.mxu0 0
    %1317 = vmatprep.subr.bf16.mxu0 0
    %1318 = vmatpush1.bf16.msra.mxu0 0
    %1319 = vmatprep.subr.bf16.mxu0 0
    %1320 = vmatpush1.bf16.msra.mxu0 0
    %1321 = vmatprep.subr.bf16.mxu0 0
    %1322 = vmatpush1.bf16.msra.mxu0 0
    %1323 = vmatprep.subr.bf16.mxu0 0
    %1324 = vmatpush1.bf16.msra.mxu0 0
    %1325 = vmatprep.mubr.bf16.mxu0 0
    %1326 = vmatmul.mubr.bf16.gmra.mrb[0].mxu0 %v333
    %v1327 = vpop.f32.mrb[0].mxu0
    %v1328 = vadd.f32 0.0, %v1327
    %v1329 = vpop.f32.mrb[0].mxu0
    %v1330 = vadd.f32 0.0, %v1329
    %v1331 = vpop.f32.mrb[0].mxu0
    %v1332 = vpop.f32.mrb[0].mxu0
    %1333 = vdwg.mxu0
    %v1334 = vadd.f32 %v1251, %v1328
    %v1335 = vadd.f32 %v1252, %v1330
    %v1336 = vtanh.pop %v1334
    %v1337 = vtanh.pop %v1335
    %v1338 = vmul.f32 %v1336, %v100
    %v1339 = vmul.f32 %v1337, %v101
    %v1340 = vadd.f32 %v1338, %v102
    %v1341 = vadd.f32 %v1339, %v103
    %v1342 = vmul.f32 %v1340, 0.0
    %v1343 = vmul.f32 %v1340, %v1341
    %1345 = vrot.lane.b32.xlu0 %v1343, 64
    %v1346 = vpop.permute.xlu0 %1345
    %v1348 = vadd.f32 %v1342, %v1346
    %v1349 = vtanh.pop %v1348
    %v1350 = vmul.f32 %v1341, %v1349
    %1352 = vrot.lane.b32.xlu0 %v1350, 64
    %v1353 = vpop.permute.xlu0 %1352
    %1355 = vst.msk [vmem:[#allocation3] sm:$0xff] %vm397, %v1353
    %1356 = vrot.lane.b32.xlu0 %v1350, 32
    %v1357 = vpop.permute.xlu0 %1356
    %1359 = vst.msk [vmem:[#allocation4 + $0x38] sm:$0xff] %vm397, %v1357
    %v1360 = vld [vmem:[#allocation2 + $0x10] sm:$0xff]
    %v1361 = vld [vmem:[#allocation2 + $0x18] sm:$0xff]
    %v1362 = vpack.c.bf16 %v1350, %v1350
    %1364 = vrot.lane.b32.xlu0 %v1362, 64
    %v1365 = vpop.permute.xlu0 %1364
    %v1367 = vsel %vm331, %v1365, 0
    %1369 = vmatprep.subr.bf16.mxu0 %v1278
    %1370 = vmatpush1.bf16.msra.mxu0 %v1277
    %1371 = vmatprep.subr.bf16.mxu0 %v1280
    %1372 = vmatpush1.bf16.msra.mxu0 %v1279
    %1373 = vmatprep.subr.bf16.mxu0 %v1282
    %1374 = vmatpush1.bf16.msra.mxu0 %v1281
    %1375 = vmatprep.subr.bf16.mxu0 %v1284
    %1376 = vmatpush1.bf16.msra.mxu0 %v1283
    %1377 = vmatprep.subr.bf16.mxu0 0
    %1378 = vmatpush1.bf16.msra.mxu0 0
    %1379 = vmatprep.subr.bf16.mxu0 0
    %1380 = vmatpush1.bf16.msra.mxu0 0
    %1381 = vmatprep.subr.bf16.mxu0 0
    %1382 = vmatpush1.bf16.msra.mxu0 0
    %1383 = vmatprep.subr.bf16.mxu0 0
    %1384 = vmatpush1.bf16.msra.mxu0 0
    %1385 = vmatprep.subr.bf16.mxu0 0
    %1386 = vmatpush1.bf16.msra.mxu0 0
    %1387 = vmatprep.subr.bf16.mxu0 0
    %1388 = vmatpush1.bf16.msra.mxu0 0
    %1389 = vmatprep.subr.bf16.mxu0 0
    %1390 = vmatpush1.bf16.msra.mxu0 0
    %1391 = vmatprep.subr.bf16.mxu0 0
    %1392 = vmatpush1.bf16.msra.mxu0 0
    %1393 = vmatprep.subr.bf16.mxu0 0
    %1394 = vmatpush1.bf16.msra.mxu0 0
    %1395 = vmatprep.subr.bf16.mxu0 0
    %1396 = vmatpush1.bf16.msra.mxu0 0
    %1397 = vmatprep.subr.bf16.mxu0 0
    %1398 = vmatpush1.bf16.msra.mxu0 0
    %1399 = vmatprep.subr.bf16.mxu0 0
    %1400 = vmatpush1.bf16.msra.mxu0 0
    %1401 = vmatprep.mubr.bf16.mxu0 0
    %1402 = vmatmul.mubr.bf16.gmra.mrb[0].mxu0 %v1367
    %v1403 = vpop.f32.mrb[0].mxu0
    %v1404 = vadd.f32 0.0, %v1403
    %v1405 = vpop.f32.mrb[0].mxu0
    %v1406 = vadd.f32 0.0, %v1405
    %v1407 = vpop.f32.mrb[0].mxu0
    %v1408 = vpop.f32.mrb[0].mxu0
    %1409 = vdwg.mxu0
    %v1410 = vadd.f32 %v1360, %v1404
    %v1411 = vadd.f32 %v1361, %v1406
    %v1412 = vtanh.pop %v1410
    %v1413 = vtanh.pop %v1411
    %v1414 = vmul.f32 %v1412, %v100
    %v1415 = vmul.f32 %v1413, %v101
    %v1416 = vadd.f32 %v1414, %v102
    %v1417 = vadd.f32 %v1415, %v103
    %v1418 = vmul.f32 %v1416, %v1348
    %v1419 = vmul.f32 %v1416, %v1417
    %1421 = vrot.lane.b32.xlu0 %v1419, 64
    %v1422 = vpop.permute.xlu0 %1421
    %v1424 = vadd.f32 %v1418, %v1422
    %v1425 = vtanh.pop %v1424
    %v1426 = vmul.f32 %v1417, %v1425
    %1428 = vrot.lane.b32.xlu0 %v1426, 64
    %v1429 = vpop.permute.xlu0 %1428
    %1431 = vst.msk [vmem:[#allocation3 + $0x8] sm:$0xff] %vm397, %v1429
    %1432 = vrot.lane.b32.xlu0 %v1426, 32
    %v1433 = vpop.permute.xlu0 %1432
    %1435 = vst.msk [vmem:[#allocation4 + $0x30] sm:$0xff] %vm397, %v1433
    %v1436 = vld [vmem:[#allocation2 + $0x20] sm:$0xff]
    %v1437 = vld [vmem:[#allocation2 + $0x28] sm:$0xff]
    %v1438 = vpack.c.bf16 %v1426, %v1426
    %1440 = vrot.lane.b32.xlu0 %v1438, 64
    %v1441 = vpop.permute.xlu0 %1440
    %v1443 = vsel %vm331, %v1441, 0
    %1445 = vmatprep.subr.bf16.mxu0 %v1278
    %1446 = vmatpush1.bf16.msra.mxu0 %v1277
    %1447 = vmatprep.subr.bf16.mxu0 %v1280
    %1448 = vmatpush1.bf16.msra.mxu0 %v1279
    %1449 = vmatprep.subr.bf16.mxu0 %v1282
    %1450 = vmatpush1.bf16.msra.mxu0 %v1281
    %1451 = vmatprep.subr.bf16.mxu0 %v1284
    %1452 = vmatpush1.bf16.msra.mxu0 %v1283
    %1453 = vmatprep.subr.bf16.mxu0 0
    %1454 = vmatpush1.bf16.msra.mxu0 0
    %1455 = vmatprep.subr.bf16.mxu0 0
    %1456 = vmatpush1.bf16.msra.mxu0 0
    %1457 = vmatprep.subr.bf16.mxu0 0
    %1458 = vmatpush1.bf16.msra.mxu0 0
    %1459 = vmatprep.subr.bf16.mxu0 0
    %1460 = vmatpush1.bf16.msra.mxu0 0
    %1461 = vmatprep.subr.bf16.mxu0 0
    %1462 = vmatpush1.bf16.msra.mxu0 0
    %1463 = vmatprep.subr.bf16.mxu0 0
    %1464 = vmatpush1.bf16.msra.mxu0 0
    %1465 = vmatprep.subr.bf16.mxu0 0
    %1466 = vmatpush1.bf16.msra.mxu0 0
    %1467 = vmatprep.subr.bf16.mxu0 0
    %1468 = vmatpush1.bf16.msra.mxu0 0
    %1469 = vmatprep.subr.bf16.mxu0 0
    %1470 = vmatpush1.bf16.msra.mxu0 0
    %1471 = vmatprep.subr.bf16.mxu0 0
    %1472 = vmatpush1.bf16.msra.mxu0 0
    %1473 = vmatprep.subr.bf16.mxu0 0
    %1474 = vmatpush1.bf16.msra.mxu0 0
    %1475 = vmatprep.subr.bf16.mxu0 0
    %1476 = vmatpush1.bf16.msra.mxu0 0
    %1477 = vmatprep.mubr.bf16.mxu0 0
    %1478 = vmatmul.mubr.bf16.gmra.mrb[0].mxu0 %v1443
    %v1479 = vpop.f32.mrb[0].mxu0
    %v1480 = vadd.f32 0.0, %v1479
    %v1481 = vpop.f32.mrb[0].mxu0
    %v1482 = vadd.f32 0.0, %v1481
    %v1483 = vpop.f32.mrb[0].mxu0
    %v1484 = vpop.f32.mrb[0].mxu0
    %1485 = vdwg.mxu0
    %v1486 = vadd.f32 %v1436, %v1480
    %v1487 = vadd.f32 %v1437, %v1482
    %v1488 = vtanh.pop %v1486
    %v1489 = vtanh.pop %v1487
    %v1490 = vmul.f32 %v1488, %v100
    %v1491 = vmul.f32 %v1489, %v101
    %v1492 = vadd.f32 %v1490, %v102
    %v1493 = vadd.f32 %v1491, %v103
    %v1494 = vmul.f32 %v1492, %v1424
    %v1495 = vmul.f32 %v1492, %v1493
    %1497 = vrot.lane.b32.xlu0 %v1495, 64
    %v1498 = vpop.permute.xlu0 %1497
    %v1500 = vadd.f32 %v1494, %v1498
    %v1501 = vtanh.pop %v1500
    %v1502 = vmul.f32 %v1493, %v1501
    %1504 = vrot.lane.b32.xlu0 %v1502, 64
    %v1505 = vpop.permute.xlu0 %1504
    %1507 = vst.msk [vmem:[#allocation3 + $0x10] sm:$0xff] %vm397, %v1505
    %1508 = vrot.lane.b32.xlu0 %v1502, 32
    %v1509 = vpop.permute.xlu0 %1508
    %1511 = vst.msk [vmem:[#allocation4 + $0x28] sm:$0xff] %vm397, %v1509
    %v1512 = vld [vmem:[#allocation2 + $0x30] sm:$0xff]
    %v1513 = vld [vmem:[#allocation2 + $0x38] sm:$0xff]
    %v1514 = vpack.c.bf16 %v1502, %v1502
    %1516 = vrot.lane.b32.xlu0 %v1514, 64
    %v1517 = vpop.permute.xlu0 %1516
    %v1519 = vsel %vm331, %v1517, 0
    %1521 = vmatprep.subr.bf16.mxu0 %v1278
    %1522 = vmatpush1.bf16.msra.mxu0 %v1277
    %1523 = vmatprep.subr.bf16.mxu0 %v1280
    %1524 = vmatpush1.bf16.msra.mxu0 %v1279
    %1525 = vmatprep.subr.bf16.mxu0 %v1282
    %1526 = vmatpush1.bf16.msra.mxu0 %v1281
    %1527 = vmatprep.subr.bf16.mxu0 %v1284
    %1528 = vmatpush1.bf16.msra.mxu0 %v1283
    %1529 = vmatprep.subr.bf16.mxu0 0
    %1530 = vmatpush1.bf16.msra.mxu0 0
    %1531 = vmatprep.subr.bf16.mxu0 0
    %1532 = vmatpush1.bf16.msra.mxu0 0
    %1533 = vmatprep.subr.bf16.mxu0 0
    %1534 = vmatpush1.bf16.msra.mxu0 0
    %1535 = vmatprep.subr.bf16.mxu0 0
    %1536 = vmatpush1.bf16.msra.mxu0 0
    %1537 = vmatprep.subr.bf16.mxu0 0
    %1538 = vmatpush1.bf16.msra.mxu0 0
    %1539 = vmatprep.subr.bf16.mxu0 0
    %1540 = vmatpush1.bf16.msra.mxu0 0
    %1541 = vmatprep.subr.bf16.mxu0 0
    %1542 = vmatpush1.bf16.msra.mxu0 0
    %1543 = vmatprep.subr.bf16.mxu0 0
    %1544 = vmatpush1.bf16.msra.mxu0 0
    %1545 = vmatprep.subr.bf16.mxu0 0
    %1546 = vmatpush1.bf16.msra.mxu0 0
    %1547 = vmatprep.subr.bf16.mxu0 0
    %1548 = vmatpush1.bf16.msra.mxu0 0
    %1549 = vmatprep.subr.bf16.mxu0 0
    %1550 = vmatpush1.bf16.msra.mxu0 0
    %1551 = vmatprep.subr.bf16.mxu0 0
    %1552 = vmatpush1.bf16.msra.mxu0 0
    %1553 = vmatprep.mubr.bf16.mxu0 0
    %1554 = vmatmul.mubr.bf16.gmra.mrb[0].mxu0 %v1519
    %v1555 = vpop.f32.mrb[0].mxu0
    %v1556 = vadd.f32 0.0, %v1555
    %v1557 = vpop.f32.mrb[0].mxu0
    %v1558 = vadd.f32 0.0, %v1557
    %v1559 = vpop.f32.mrb[0].mxu0
    %v1560 = vpop.f32.mrb[0].mxu0
    %1561 = vdwg.mxu0
    %v1562 = vadd.f32 %v1512, %v1556
    %v1563 = vadd.f32 %v1513, %v1558
    %v1564 = vtanh.pop %v1562
    %v1565 = vtanh.pop %v1563
    %v1566 = vmul.f32 %v1564, %v100
    %v1567 = vmul.f32 %v1565, %v101
    %v1568 = vadd.f32 %v1566, %v102
    %v1569 = vadd.f32 %v1567, %v103
    %v1570 = vmul.f32 %v1568, %v1500
    %v1571 = vmul.f32 %v1568, %v1569
    %1573 = vrot.lane.b32.xlu0 %v1571, 64
    %v1574 = vpop.permute.xlu0 %1573
    %v1576 = vadd.f32 %v1570, %v1574
    %v1577 = vtanh.pop %v1576
    %v1578 = vmul.f32 %v1569, %v1577
    %1580 = vrot.lane.b32.xlu0 %v1578, 64
    %v1581 = vpop.permute.xlu0 %1580
    %1583 = vst.msk [vmem:[#allocation3 + $0x18] sm:$0xff] %vm397, %v1581
    %1584 = vrot.lane.b32.xlu0 %v1578, 32
    %v1585 = vpop.permute.xlu0 %1584
    %1587 = vst.msk [vmem:[#allocation4 + $0x20] sm:$0xff] %vm397, %v1585
    %v1588 = vld [vmem:[#allocation2 + $0x40] sm:$0xff]
    %v1589 = vld [vmem:[#allocation2 + $0x48] sm:$0xff]
    %v1590 = vpack.c.bf16 %v1578, %v1578
    %1592 = vrot.lane.b32.xlu0 %v1590, 64
    %v1593 = vpop.permute.xlu0 %1592
    %v1595 = vsel %vm331, %v1593, 0
    %1597 = vmatprep.subr.bf16.mxu0 %v1278
    %1598 = vmatpush1.bf16.msra.mxu0 %v1277
    %1599 = vmatprep.subr.bf16.mxu0 %v1280
    %1600 = vmatpush1.bf16.msra.mxu0 %v1279
    %1601 = vmatprep.subr.bf16.mxu0 %v1282
    %1602 = vmatpush1.bf16.msra.mxu0 %v1281
    %1603 = vmatprep.subr.bf16.mxu0 %v1284
    %1604 = vmatpush1.bf16.msra.mxu0 %v1283
    %1605 = vmatprep.subr.bf16.mxu0 0
    %1606 = vmatpush1.bf16.msra.mxu0 0
    %1607 = vmatprep.subr.bf16.mxu0 0
    %1608 = vmatpush1.bf16.msra.mxu0 0
    %1609 = vmatprep.subr.bf16.mxu0 0
    %1610 = vmatpush1.bf16.msra.mxu0 0
    %1611 = vmatprep.subr.bf16.mxu0 0
    %1612 = vmatpush1.bf16.msra.mxu0 0
    %1613 = vmatprep.subr.bf16.mxu0 0
    %1614 = vmatpush1.bf16.msra.mxu0 0
    %1615 = vmatprep.subr.bf16.mxu0 0
    %1616 = vmatpush1.bf16.msra.mxu0 0
    %1617 = vmatprep.subr.bf16.mxu0 0
    %1618 = vmatpush1.bf16.msra.mxu0 0
    %1619 = vmatprep.subr.bf16.mxu0 0
    %1620 = vmatpush1.bf16.msra.mxu0 0
    %1621 = vmatprep.subr.bf16.mxu0 0
    %1622 = vmatpush1.bf16.msra.mxu0 0
    %1623 = vmatprep.subr.bf16.mxu0 0
    %1624 = vmatpush1.bf16.msra.mxu0 0
    %1625 = vmatprep.subr.bf16.mxu0 0
    %1626 = vmatpush1.bf16.msra.mxu0 0
    %1627 = vmatprep.subr.bf16.mxu0 0
    %1628 = vmatpush1.bf16.msra.mxu0 0
    %1629 = vmatprep.mubr.bf16.mxu0 0
    %1630 = vmatmul.mubr.bf16.gmra.mrb[0].mxu0 %v1595
    %v1631 = vpop.f32.mrb[0].mxu0
    %v1632 = vadd.f32 0.0, %v1631
    %v1633 = vpop.f32.mrb[0].mxu0
    %v1634 = vadd.f32 0.0, %v1633
    %v1635 = vpop.f32.mrb[0].mxu0
    %v1636 = vpop.f32.mrb[0].mxu0
    %1637 = vdwg.mxu0
    %v1638 = vadd.f32 %v1588, %v1632
    %v1639 = vadd.f32 %v1589, %v1634
    %v1640 = vtanh.pop %v1638
    %v1641 = vtanh.pop %v1639
    %v1642 = vmul.f32 %v1640, %v100
    %v1643 = vmul.f32 %v1641, %v101
    %v1644 = vadd.f32 %v1642, %v102
    %v1645 = vadd.f32 %v1643, %v103
    %v1646 = vmul.f32 %v1644, %v1576
    %v1647 = vmul.f32 %v1644, %v1645
    %1649 = vrot.lane.b32.xlu0 %v1647, 64
    %v1650 = vpop.permute.xlu0 %1649
    %v1652 = vadd.f32 %v1646, %v1650
    %v1653 = vtanh.pop %v1652
    %v1654 = vmul.f32 %v1645, %v1653
    %1656 = vrot.lane.b32.xlu0 %v1654, 64
    %v1657 = vpop.permute.xlu0 %1656
    %1659 = vst.msk [vmem:[#allocation3 + $0x20] sm:$0xff] %vm397, %v1657
    %1660 = vrot.lane.b32.xlu0 %v1654, 32
    %v1661 = vpop.permute.xlu0 %1660
    %1663 = vst.msk [vmem:[#allocation4 + $0x18] sm:$0xff] %vm397, %v1661
    %v1664 = vld [vmem:[#allocation2 + $0x50] sm:$0xff]
    %v1665 = vld [vmem:[#allocation2 + $0x58] sm:$0xff]
    %v1666 = vpack.c.bf16 %v1654, %v1654
    %1668 = vrot.lane.b32.xlu0 %v1666, 64
    %v1669 = vpop.permute.xlu0 %1668
    %v1671 = vsel %vm331, %v1669, 0
    %1673 = vmatprep.subr.bf16.mxu0 %v1278
    %1674 = vmatpush1.bf16.msra.mxu0 %v1277
    %1675 = vmatprep.subr.bf16.mxu0 %v1280
    %1676 = vmatpush1.bf16.msra.mxu0 %v1279
    %1677 = vmatprep.subr.bf16.mxu0 %v1282
    %1678 = vmatpush1.bf16.msra.mxu0 %v1281
    %1679 = vmatprep.subr.bf16.mxu0 %v1284
    %1680 = vmatpush1.bf16.msra.mxu0 %v1283
    %1681 = vmatprep.subr.bf16.mxu0 0
    %1682 = vmatpush1.bf16.msra.mxu0 0
    %1683 = vmatprep.subr.bf16.mxu0 0
    %1684 = vmatpush1.bf16.msra.mxu0 0
    %1685 = vmatprep.subr.bf16.mxu0 0
    %1686 = vmatpush1.bf16.msra.mxu0 0
    %1687 = vmatprep.subr.bf16.mxu0 0
    %1688 = vmatpush1.bf16.msra.mxu0 0
    %1689 = vmatprep.subr.bf16.mxu0 0
    %1690 = vmatpush1.bf16.msra.mxu0 0
    %1691 = vmatprep.subr.bf16.mxu0 0
    %1692 = vmatpush1.bf16.msra.mxu0 0
    %1693 = vmatprep.subr.bf16.mxu0 0
    %1694 = vmatpush1.bf16.msra.mxu0 0
    %1695 = vmatprep.subr.bf16.mxu0 0
    %1696 = vmatpush1.bf16.msra.mxu0 0
    %1697 = vmatprep.subr.bf16.mxu0 0
    %1698 = vmatpush1.bf16.msra.mxu0 0
    %1699 = vmatprep.subr.bf16.mxu0 0
    %1700 = vmatpush1.bf16.msra.mxu0 0
    %1701 = vmatprep.subr.bf16.mxu0 0
    %1702 = vmatpush1.bf16.msra.mxu0 0
    %1703 = vmatprep.subr.bf16.mxu0 0
    %1704 = vmatpush1.bf16.msra.mxu0 0
    %1705 = vmatprep.mubr.bf16.mxu0 0
    %1706 = vmatmul.mubr.bf16.gmra.mrb[0].mxu0 %v1671
    %v1707 = vpop.f32.mrb[0].mxu0
    %v1708 = vadd.f32 0.0, %v1707
    %v1709 = vpop.f32.mrb[0].mxu0
    %v1710 = vadd.f32 0.0, %v1709
    %v1711 = vpop.f32.mrb[0].mxu0
    %v1712 = vpop.f32.mrb[0].mxu0
    %1713 = vdwg.mxu0
    %v1714 = vadd.f32 %v1664, %v1708
    %v1715 = vadd.f32 %v1665, %v1710
    %v1716 = vtanh.pop %v1714
    %v1717 = vtanh.pop %v1715
    %v1718 = vmul.f32 %v1716, %v100
    %v1719 = vmul.f32 %v1717, %v101
    %v1720 = vadd.f32 %v1718, %v102
    %v1721 = vadd.f32 %v1719, %v103
    %v1722 = vmul.f32 %v1720, %v1652
    %v1723 = vmul.f32 %v1720, %v1721
    %1725 = vrot.lane.b32.xlu0 %v1723, 64
    %v1726 = vpop.permute.xlu0 %1725
    %v1728 = vadd.f32 %v1722, %v1726
    %v1729 = vtanh.pop %v1728
    %v1730 = vmul.f32 %v1721, %v1729
    %1732 = vrot.lane.b32.xlu0 %v1730, 64
    %v1733 = vpop.permute.xlu0 %1732
    %1735 = vst.msk [vmem:[#allocation3 + $0x28] sm:$0xff] %vm397, %v1733
    %1736 = vrot.lane.b32.xlu0 %v1730, 32
    %v1737 = vpop.permute.xlu0 %1736
    %1739 = vst.msk [vmem:[#allocation4 + $0x10] sm:$0xff] %vm397, %v1737
    %v1740 = vld [vmem:[#allocation2 + $0x60] sm:$0xff]
    %v1741 = vld [vmem:[#allocation2 + $0x68] sm:$0xff]
    %v1742 = vpack.c.bf16 %v1730, %v1730
    %1744 = vrot.lane.b32.xlu0 %v1742, 64
    %v1745 = vpop.permute.xlu0 %1744
    %v1747 = vsel %vm331, %v1745, 0
    %1749 = vmatprep.subr.bf16.mxu0 %v1278
    %1750 = vmatpush1.bf16.msra.mxu0 %v1277
    %1751 = vmatprep.subr.bf16.mxu0 %v1280
    %1752 = vmatpush1.bf16.msra.mxu0 %v1279
    %1753 = vmatprep.subr.bf16.mxu0 %v1282
    %1754 = vmatpush1.bf16.msra.mxu0 %v1281
    %1755 = vmatprep.subr.bf16.mxu0 %v1284
    %1756 = vmatpush1.bf16.msra.mxu0 %v1283
    %1757 = vmatprep.subr.bf16.mxu0 0
    %1758 = vmatpush1.bf16.msra.mxu0 0
    %1759 = vmatprep.subr.bf16.mxu0 0
    %1760 = vmatpush1.bf16.msra.mxu0 0
    %1761 = vmatprep.subr.bf16.mxu0 0
    %1762 = vmatpush1.bf16.msra.mxu0 0
    %1763 = vmatprep.subr.bf16.mxu0 0
    %1764 = vmatpush1.bf16.msra.mxu0 0
    %1765 = vmatprep.subr.bf16.mxu0 0
    %1766 = vmatpush1.bf16.msra.mxu0 0
    %1767 = vmatprep.subr.bf16.mxu0 0
    %1768 = vmatpush1.bf16.msra.mxu0 0
    %1769 = vmatprep.subr.bf16.mxu0 0
    %1770 = vmatpush1.bf16.msra.mxu0 0
    %1771 = vmatprep.subr.bf16.mxu0 0
    %1772 = vmatpush1.bf16.msra.mxu0 0
    %1773 = vmatprep.subr.bf16.mxu0 0
    %1774 = vmatpush1.bf16.msra.mxu0 0
    %1775 = vmatprep.subr.bf16.mxu0 0
    %1776 = vmatpush1.bf16.msra.mxu0 0
    %1777 = vmatprep.subr.bf16.mxu0 0
    %1778 = vmatpush1.bf16.msra.mxu0 0
    %1779 = vmatprep.subr.bf16.mxu0 0
    %1780 = vmatpush1.bf16.msra.mxu0 0
    %1781 = vmatprep.mubr.bf16.mxu0 0
    %1782 = vmatmul.mubr.bf16.gmra.mrb[0].mxu0 %v1747
    %v1783 = vpop.f32.mrb[0].mxu0
    %v1784 = vadd.f32 0.0, %v1783
    %v1785 = vpop.f32.mrb[0].mxu0
    %v1786 = vadd.f32 0.0, %v1785
    %v1787 = vpop.f32.mrb[0].mxu0
    %v1788 = vpop.f32.mrb[0].mxu0
    %1789 = vdwg.mxu0
    %v1790 = vadd.f32 %v1740, %v1784
    %v1791 = vadd.f32 %v1741, %v1786
    %v1792 = vtanh.pop %v1790
    %v1793 = vtanh.pop %v1791
    %v1794 = vmul.f32 %v1792, %v100
    %v1795 = vmul.f32 %v1793, %v101
    %v1796 = vadd.f32 %v1794, %v102
    %v1797 = vadd.f32 %v1795, %v103
    %v1798 = vmul.f32 %v1796, %v1728
    %v1799 = vmul.f32 %v1796, %v1797
    %1801 = vrot.lane.b32.xlu0 %v1799, 64
    %v1802 = vpop.permute.xlu0 %1801
    %v1804 = vadd.f32 %v1798, %v1802
    %v1805 = vtanh.pop %v1804
    %v1806 = vmul.f32 %v1797, %v1805
    %1808 = vrot.lane.b32.xlu0 %v1806, 64
    %v1809 = vpop.permute.xlu0 %1808
    %1811 = vst.msk [vmem:[#allocation3 + $0x30] sm:$0xff] %vm397, %v1809
    %1812 = vrot.lane.b32.xlu0 %v1806, 32
    %v1813 = vpop.permute.xlu0 %1812
    %1815 = vst.msk [vmem:[#allocation4 + $0x8] sm:$0xff] %vm397, %v1813
    %v1816 = vld [vmem:[#allocation2 + $0x70] sm:$0xff]
    %v1817 = vld [vmem:[#allocation2 + $0x78] sm:$0xff]
    %v1818 = vpack.c.bf16 %v1806, %v1806
    %1820 = vrot.lane.b32.xlu0 %v1818, 64
    %v1821 = vpop.permute.xlu0 %1820
    %v1823 = vsel %vm331, %v1821, 0
    %1825 = vmatprep.subr.bf16.mxu0 %v1278
    %1826 = vmatpush1.bf16.msra.mxu0 %v1277
    %1827 = vmatprep.subr.bf16.mxu0 %v1280
    %1828 = vmatpush1.bf16.msra.mxu0 %v1279
    %1829 = vmatprep.subr.bf16.mxu0 %v1282
    %1830 = vmatpush1.bf16.msra.mxu0 %v1281
    %1831 = vmatprep.subr.bf16.mxu0 %v1284
    %1832 = vmatpush1.bf16.msra.mxu0 %v1283
    %1833 = vmatprep.subr.bf16.mxu0 0
    %1834 = vmatpush1.bf16.msra.mxu0 0
    %1835 = vmatprep.subr.bf16.mxu0 0
    %1836 = vmatpush1.bf16.msra.mxu0 0
    %1837 = vmatprep.subr.bf16.mxu0 0
    %1838 = vmatpush1.bf16.msra.mxu0 0
    %1839 = vmatprep.subr.bf16.mxu0 0
    %1840 = vmatpush1.bf16.msra.mxu0 0
    %1841 = vmatprep.subr.bf16.mxu0 0
    %1842 = vmatpush1.bf16.msra.mxu0 0
    %1843 = vmatprep.subr.bf16.mxu0 0
    %1844 = vmatpush1.bf16.msra.mxu0 0
    %1845 = vmatprep.subr.bf16.mxu0 0
    %1846 = vmatpush1.bf16.msra.mxu0 0
    %1847 = vmatprep.subr.bf16.mxu0 0
    %1848 = vmatpush1.bf16.msra.mxu0 0
    %1849 = vmatprep.subr.bf16.mxu0 0
    %1850 = vmatpush1.bf16.msra.mxu0 0
    %1851 = vmatprep.subr.bf16.mxu0 0
    %1852 = vmatpush1.bf16.msra.mxu0 0
    %1853 = vmatprep.subr.bf16.mxu0 0
    %1854 = vmatpush1.bf16.msra.mxu0 0
    %1855 = vmatprep.subr.bf16.mxu0 0
    %1856 = vmatpush1.bf16.msra.mxu0 0
    %1857 = vmatprep.mubr.bf16.mxu0 0
    %1858 = vmatmul.mubr.bf16.gmra.mrb[0].mxu0 %v1823
    %v1859 = vpop.f32.mrb[0].mxu0
    %v1860 = vadd.f32 0.0, %v1859
    %v1861 = vpop.f32.mrb[0].mxu0
    %v1862 = vadd.f32 0.0, %v1861
    %v1863 = vpop.f32.mrb[0].mxu0
    %v1864 = vpop.f32.mrb[0].mxu0
    %1865 = vdwg.mxu0
    %v1866 = vadd.f32 %v1816, %v1860
    %v1867 = vadd.f32 %v1817, %v1862
    %v1868 = vtanh.pop %v1866
    %v1869 = vtanh.pop %v1867
    %v1870 = vmul.f32 %v1868, %v100
    %v1871 = vmul.f32 %v1869, %v101
    %v1872 = vadd.f32 %v1870, %v102
    %v1873 = vadd.f32 %v1871, %v103
    %v1874 = vmul.f32 %v1872, %v1804
    %v1875 = vmul.f32 %v1872, %v1873
    %1877 = vrot.lane.b32.xlu0 %v1875, 64
    %v1878 = vpop.permute.xlu0 %1877
    %v1880 = vadd.f32 %v1874, %v1878
    %v1881 = vtanh.pop %v1880
    %v1882 = vmul.f32 %v1873, %v1881
    %1884 = vrot.lane.b32.xlu0 %v1882, 64
    %v1885 = vpop.permute.xlu0 %1884
    %1887 = vst.msk [vmem:[#allocation3 + $0x38] sm:$0xff] %vm397, %v1885
    %1888 = vrot.lane.b32.xlu0 %v1882, 32
    %v1889 = vpop.permute.xlu0 %1888
    %1891 = vst.msk [vmem:[#allocation4] sm:$0xff] %vm397, %v1889
    %v1892 = vld [vmem:[#allocation3] sm:$0xff]
    %v1893 = vld [vmem:[#allocation3 + $0x8] sm:$0xff]
    %v1894 = vld [vmem:[#allocation3 + $0x10] sm:$0xff]
    %v1895 = vld [vmem:[#allocation3 + $0x18] sm:$0xff]
    %v1896 = vld [vmem:[#allocation3 + $0x20] sm:$0xff]
    %v1897 = vld [vmem:[#allocation3 + $0x28] sm:$0xff]
    %v1898 = vld [vmem:[#allocation3 + $0x30] sm:$0xff]
    %v1899 = vld [vmem:[#allocation3 + $0x38] sm:$0xff]
    %v1900 = vpack.c.bf16 %v1893, %v1892
    %v1901 = vpack.c.bf16 %v1895, %v1894
    %v1902 = vpack.c.bf16 %v1897, %v1896
    %v1903 = vpack.c.bf16 %v1899, %v1898
    %v1904 = vld [vmem:[#allocation4] sm:$0xff]
    %v1905 = vld [vmem:[#allocation4 + $0x8] sm:$0xff]
    %v1906 = vld [vmem:[#allocation4 + $0x10] sm:$0xff]
    %v1907 = vld [vmem:[#allocation4 + $0x18] sm:$0xff]
    %v1908 = vld [vmem:[#allocation4 + $0x20] sm:$0xff]
    %v1909 = vld [vmem:[#allocation4 + $0x28] sm:$0xff]
    %v1910 = vld [vmem:[#allocation4 + $0x30] sm:$0xff]
    %v1911 = vld [vmem:[#allocation4 + $0x38] sm:$0xff]
    %v1912 = vpack.c.bf16 %v1905, %v1904
    %v1913 = vpack.c.bf16 %v1907, %v1906
    %v1914 = vpack.c.bf16 %v1909, %v1908
    %v1915 = vpack.c.bf16 %v1911, %v1910
    %v1916 = vld [vmem:[#allocation9] sm:$0xff]
    %v1917 = vld [vmem:[#allocation9 + $0x8] sm:$0xff]
    %v1918 = vld [vmem:[#allocation9 + $0x10] sm:$0xff]
    %v1919 = vld [vmem:[#allocation9 + $0x18] sm:$0xff]
    %v1920 = vld [vmem:[#allocation9 + $0x20] sm:$0xff]
    %v1921 = vld [vmem:[#allocation9 + $0x28] sm:$0xff]
    %v1922 = vld [vmem:[#allocation9 + $0x30] sm:$0xff]
    %v1923 = vld [vmem:[#allocation9 + $0x38] sm:$0xff]
    %v1928 = vunpack.c.l.b16 %v1920
    %v1929 = vunpack.c.h.b16 %v1920
    %v1930 = vunpack.c.l.b16 %v1921
    %v1931 = vunpack.c.h.b16 %v1921
    %v1932 = vunpack.c.l.b16 %v1922
    %v1933 = vunpack.c.h.b16 %v1922
    %v1934 = vunpack.c.l.b16 %v1923
    %v1935 = vunpack.c.h.b16 %v1923
    %v1936 = vpack.c.b16 %v1930, %v1928
    %v1937 = vpack.c.b16 %v1931, %v1929
    %v1938 = vpack.c.b16 %v1934, %v1932
    %v1939 = vpack.c.b16 %v1935, %v1933
    %v1945 = vsel %vm397, %v1912, 0
    %v1948 = vsel %vm397, %v1913, 0
    %v1951 = vsel %vm397, %v1914, 0
    %v1954 = vsel %vm397, %v1915, 0
    %1956 = vmatprep.subr.bf16.mxu0 %v1937
    %1957 = vmatpush1.bf16.msra.mxu0 %v1936
    %1958 = vmatprep.subr.bf16.mxu0 %v1939
    %1959 = vmatpush1.bf16.msra.mxu0 %v1938
    %1960 = vmatprep.subr.bf16.mxu0 0
    %1961 = vmatpush1.bf16.msra.mxu0 0
    %1962 = vmatprep.subr.bf16.mxu0 0
    %1963 = vmatpush1.bf16.msra.mxu0 0
    %1964 = vmatprep.subr.bf16.mxu0 0
    %1965 = vmatpush1.bf16.msra.mxu0 0
    %1966 = vmatprep.subr.bf16.mxu0 0
    %1967 = vmatpush1.bf16.msra.mxu0 0
    %1968 = vmatprep.subr.bf16.mxu0 0
    %1969 = vmatpush1.bf16.msra.mxu0 0
    %1970 = vmatprep.subr.bf16.mxu0 0
    %1971 = vmatpush1.bf16.msra.mxu0 0
    %1972 = vmatprep.subr.bf16.mxu0 0
    %1973 = vmatpush1.bf16.msra.mxu0 0
    %1974 = vmatprep.subr.bf16.mxu0 0
    %1975 = vmatpush1.bf16.msra.mxu0 0
    %1976 = vmatprep.subr.bf16.mxu0 0
    %1977 = vmatpush1.bf16.msra.mxu0 0
    %1978 = vmatprep.subr.bf16.mxu0 0
    %1979 = vmatpush1.bf16.msra.mxu0 0
    %1980 = vmatprep.subr.bf16.mxu0 0
    %1981 = vmatpush1.bf16.msra.mxu0 0
    %1982 = vmatprep.subr.bf16.mxu0 0
    %1983 = vmatpush1.bf16.msra.mxu0 0
    %1984 = vmatprep.subr.bf16.mxu0 0
    %1985 = vmatpush1.bf16.msra.mxu0 0
    %1986 = vmatprep.subr.bf16.mxu0 0
    %1987 = vmatpush1.bf16.msra.mxu0 0
    %1988 = vmatprep.mubr.bf16.mxu0 0
    %1989 = vmatmul.mubr.bf16.gmra.mrb[0].mxu0 %v1945
    %v1990 = vpop.f32.mrb[0].mxu0
    %v1991 = vadd.f32 0.0, %v1990
    %v1992 = vpop.f32.mrb[0].mxu0
    %v1993 = vadd.f32 0.0, %v1992
    %v1994 = vpop.f32.mrb[0].mxu0
    %v1995 = vadd.f32 0.0, %v1994
    %v1996 = vpop.f32.mrb[0].mxu0
    %v1997 = vadd.f32 0.0, %v1996
    %1998 = vmatprep.mubr.bf16.mxu0 0
    %1999 = vmatmul.mubr.bf16.gmra.mrb[0].mxu0 %v1948
    %v2000 = vpop.f32.mrb[0].mxu0
    %v2001 = vadd.f32 0.0, %v2000
    %v2002 = vpop.f32.mrb[0].mxu0
    %v2003 = vadd.f32 0.0, %v2002
    %v2004 = vpop.f32.mrb[0].mxu0
    %v2005 = vadd.f32 0.0, %v2004
    %v2006 = vpop.f32.mrb[0].mxu0
    %v2007 = vadd.f32 0.0, %v2006
    %2008 = vmatprep.mubr.bf16.mxu0 0
    %2009 = vmatmul.mubr.bf16.gmra.mrb[0].mxu0 %v1951
    %v2010 = vpop.f32.mrb[0].mxu0
    %v2011 = vadd.f32 0.0, %v2010
    %v2012 = vpop.f32.mrb[0].mxu0
    %v2013 = vadd.f32 0.0, %v2012
    %v2014 = vpop.f32.mrb[0].mxu0
    %v2015 = vadd.f32 0.0, %v2014
    %v2016 = vpop.f32.mrb[0].mxu0
    %v2017 = vadd.f32 0.0, %v2016
    %2018 = vmatprep.mubr.bf16.mxu0 0
    %2019 = vmatmul.mubr.bf16.gmra.mrb[0].mxu0 %v1954
    %v2020 = vpop.f32.mrb[0].mxu0
    %v2021 = vadd.f32 0.0, %v2020
    %v2022 = vpop.f32.mrb[0].mxu0
    %v2023 = vadd.f32 0.0, %v2022
    %v2024 = vpop.f32.mrb[0].mxu0
    %v2025 = vadd.f32 0.0, %v2024
    %v2026 = vpop.f32.mrb[0].mxu0
    %v2027 = vadd.f32 0.0, %v2026
    %2028 = vdwg.mxu0
    %v2033 = vunpack.c.l.b16 %v1916
    %v2034 = vunpack.c.h.b16 %v1916
    %v2035 = vunpack.c.l.b16 %v1917
    %v2036 = vunpack.c.h.b16 %v1917
    %v2037 = vunpack.c.l.b16 %v1918
    %v2038 = vunpack.c.h.b16 %v1918
    %v2039 = vunpack.c.l.b16 %v1919
    %v2040 = vunpack.c.h.b16 %v1919
    %v2041 = vpack.c.b16 %v2035, %v2033
    %v2042 = vpack.c.b16 %v2036, %v2034
    %v2043 = vpack.c.b16 %v2039, %v2037
    %v2044 = vpack.c.b16 %v2040, %v2038
    %v2050 = vsel %vm397, %v1900, 0
    %v2053 = vsel %vm397, %v1901, 0
    %v2056 = vsel %vm397, %v1902, 0
    %v2059 = vsel %vm397, %v1903, 0
    %2061 = vmatprep.subr.bf16.mxu0 %v2042
    %2062 = vmatpush1.bf16.msra.mxu0 %v2041
    %2063 = vmatprep.subr.bf16.mxu0 %v2044
    %2064 = vmatpush1.bf16.msra.mxu0 %v2043
    %2065 = vmatprep.subr.bf16.mxu0 0
    %2066 = vmatpush1.bf16.msra.mxu0 0
    %2067 = vmatprep.subr.bf16.mxu0 0
    %2068 = vmatpush1.bf16.msra.mxu0 0
    %2069 = vmatprep.subr.bf16.mxu0 0
    %2070 = vmatpush1.bf16.msra.mxu0 0
    %2071 = vmatprep.subr.bf16.mxu0 0
    %2072 = vmatpush1.bf16.msra.mxu0 0
    %2073 = vmatprep.subr.bf16.mxu0 0
    %2074 = vmatpush1.bf16.msra.mxu0 0
    %2075 = vmatprep.subr.bf16.mxu0 0
    %2076 = vmatpush1.bf16.msra.mxu0 0
    %2077 = vmatprep.subr.bf16.mxu0 0
    %2078 = vmatpush1.bf16.msra.mxu0 0
    %2079 = vmatprep.subr.bf16.mxu0 0
    %2080 = vmatpush1.bf16.msra.mxu0 0
    %2081 = vmatprep.subr.bf16.mxu0 0
    %2082 = vmatpush1.bf16.msra.mxu0 0
    %2083 = vmatprep.subr.bf16.mxu0 0
    %2084 = vmatpush1.bf16.msra.mxu0 0
    %2085 = vmatprep.subr.bf16.mxu0 0
    %2086 = vmatpush1.bf16.msra.mxu0 0
    %2087 = vmatprep.subr.bf16.mxu0 0
    %2088 = vmatpush1.bf16.msra.mxu0 0
    %2089 = vmatprep.subr.bf16.mxu0 0
    %2090 = vmatpush1.bf16.msra.mxu0 0
    %2091 = vmatprep.subr.bf16.mxu0 0
    %2092 = vmatpush1.bf16.msra.mxu0 0
    %2093 = vmatprep.mubr.bf16.mxu0 0
    %2094 = vmatmul.mubr.bf16.gmra.mrb[0].mxu0 %v2050
    %v2095 = vpop.f32.mrb[0].mxu0
    %v2096 = vadd.f32 %v1991, %v2095
    %v2097 = vpop.f32.mrb[0].mxu0
    %v2098 = vadd.f32 %v1993, %v2097
    %v2099 = vpop.f32.mrb[0].mxu0
    %v2100 = vadd.f32 %v1995, %v2099
    %v2101 = vpop.f32.mrb[0].mxu0
    %v2102 = vadd.f32 %v1997, %v2101
    %2103 = vmatprep.mubr.bf16.mxu0 0
    %2104 = vmatmul.mubr.bf16.gmra.mrb[0].mxu0 %v2053
    %v2105 = vpop.f32.mrb[0].mxu0
    %v2106 = vadd.f32 %v2001, %v2105
    %v2107 = vpop.f32.mrb[0].mxu0
    %v2108 = vadd.f32 %v2003, %v2107
    %v2109 = vpop.f32.mrb[0].mxu0
    %v2110 = vadd.f32 %v2005, %v2109
    %v2111 = vpop.f32.mrb[0].mxu0
    %v2112 = vadd.f32 %v2007, %v2111
    %2113 = vmatprep.mubr.bf16.mxu0 0
    %2114 = vmatmul.mubr.bf16.gmra.mrb[0].mxu0 %v2056
    %v2115 = vpop.f32.mrb[0].mxu0
    %v2116 = vadd.f32 %v2011, %v2115
    %v2117 = vpop.f32.mrb[0].mxu0
    %v2118 = vadd.f32 %v2013, %v2117
    %v2119 = vpop.f32.mrb[0].mxu0
    %v2120 = vadd.f32 %v2015, %v2119
    %v2121 = vpop.f32.mrb[0].mxu0
    %v2122 = vadd.f32 %v2017, %v2121
    %2123 = vmatprep.mubr.bf16.mxu0 0
    %2124 = vmatmul.mubr.bf16.gmra.mrb[0].mxu0 %v2059
    %v2125 = vpop.f32.mrb[0].mxu0
    %v2126 = vadd.f32 %v2021, %v2125
    %v2127 = vpop.f32.mrb[0].mxu0
    %v2128 = vadd.f32 %v2023, %v2127
    %v2129 = vpop.f32.mrb[0].mxu0
    %v2130 = vadd.f32 %v2025, %v2129
    %v2131 = vpop.f32.mrb[0].mxu0
    %v2132 = vadd.f32 %v2027, %v2131
    %2133 = vdwg.mxu0
    %v2134 = vlaneseq
    %v2135 = vshrl.u32 %v2134, 7
    %v2136 = vsub.s32 2, %v2135
    %v2137 = vrot.slane %v62, %v2136
    %v2138 = vlaneseq
    %v2139 = vshrl.u32 %v2138, 7
    %v2140 = vsub.s32 6, %v2139
    %v2141 = vrot.slane %v62, %v2140
    %v2144 = vlaneseq
    %v2145 = vshrl.u32 %v2144, 7
    %v2146 = vsub.s32 2, %v2145
    %v2147 = vrot.slane %v2137, %v2146
    %v2148 = vlaneseq
    %v2149 = vshrl.u32 %v2148, 7
    %v2150 = vsub.s32 2, %v2149
    %v2151 = vrot.slane %v2141, %v2150
    %v2152 = vadd.f32 %v2096, %v2147
    %v2153 = vadd.f32 %v2098, %v2151
    %v2154 = vadd.f32 %v2100, %v2147
    %v2155 = vadd.f32 %v2102, %v2151
    %v2156 = vadd.f32 %v2106, %v2147
    %v2157 = vadd.f32 %v2108, %v2151
    %v2158 = vadd.f32 %v2110, %v2147
    %v2159 = vadd.f32 %v2112, %v2151
    %v2160 = vadd.f32 %v2116, %v2147
    %v2161 = vadd.f32 %v2118, %v2151
    %v2162 = vadd.f32 %v2120, %v2147
    %v2163 = vadd.f32 %v2122, %v2151
    %v2164 = vadd.f32 %v2126, %v2147
    %v2165 = vadd.f32 %v2128, %v2151
    %v2166 = vadd.f32 %v2130, %v2147
    %v2167 = vadd.f32 %v2132, %v2151
    %v2168 = vld [vmem:[#allocation9 + $0x40] sm:$0xff]
    %v2169 = vld [vmem:[#allocation9 + $0x48] sm:$0xff]
    %v2170 = vld [vmem:[#allocation9 + $0x50] sm:$0xff]
    %v2171 = vld [vmem:[#allocation9 + $0x58] sm:$0xff]
    %v2172 = vld [vmem:[#allocation9 + $0x60] sm:$0xff]
    %v2173 = vld [vmem:[#allocation9 + $0x68] sm:$0xff]
    %v2174 = vld [vmem:[#allocation9 + $0x70] sm:$0xff]
    %v2175 = vld [vmem:[#allocation9 + $0x78] sm:$0xff]
    %v2176 = vsel %vm94, %v2166, %v2152
    %v2177 = vsel %vm95, %v2167, %v2153
    %2178 = vst [vmem:[#allocation2] sm:$0xff] %v2176
    %2179 = vst [vmem:[#allocation2 + $0x8] sm:$0xff] %v2177
    %v2180 = vsel %vm94, %v2164, %v2154
    %v2181 = vsel %vm95, %v2165, %v2155
    %2182 = vst [vmem:[#allocation2 + $0x10] sm:$0xff] %v2180
    %2183 = vst [vmem:[#allocation2 + $0x18] sm:$0xff] %v2181
    %v2184 = vsel %vm94, %v2162, %v2156
    %v2185 = vsel %vm95, %v2163, %v2157
    %2186 = vst [vmem:[#allocation2 + $0x20] sm:$0xff] %v2184
    %2187 = vst [vmem:[#allocation2 + $0x28] sm:$0xff] %v2185
    %v2188 = vsel %vm94, %v2160, %v2158
    %v2189 = vsel %vm95, %v2161, %v2159
    %2190 = vst [vmem:[#allocation2 + $0x30] sm:$0xff] %v2188
    %2191 = vst [vmem:[#allocation2 + $0x38] sm:$0xff] %v2189
    %v2192 = vsel %vm94, %v2158, %v2160
    %v2193 = vsel %vm95, %v2159, %v2161
    %2194 = vst [vmem:[#allocation2 + $0x40] sm:$0xff] %v2192
    %2195 = vst [vmem:[#allocation2 + $0x48] sm:$0xff] %v2193
    %v2196 = vsel %vm94, %v2156, %v2162
    %v2197 = vsel %vm95, %v2157, %v2163
    %2198 = vst [vmem:[#allocation2 + $0x50] sm:$0xff] %v2196
    %2199 = vst [vmem:[#allocation2 + $0x58] sm:$0xff] %v2197
    %v2200 = vsel %vm94, %v2154, %v2164
    %v2201 = vsel %vm95, %v2155, %v2165
    %2202 = vst [vmem:[#allocation2 + $0x60] sm:$0xff] %v2200
    %2203 = vst [vmem:[#allocation2 + $0x68] sm:$0xff] %v2201
    %v2204 = vsel %vm94, %v2152, %v2166
    %v2205 = vsel %vm95, %v2153, %v2167
    %2206 = vst [vmem:[#allocation2 + $0x70] sm:$0xff] %v2204
    %2207 = vst [vmem:[#allocation2 + $0x78] sm:$0xff] %v2205
    %v2208 = vld [vmem:[#allocation2] sm:$0xff]
    %v2209 = vld [vmem:[#allocation2 + $0x8] sm:$0xff]
    %v2218 = vunpack.c.l.b16 %v2168
    %v2219 = vunpack.c.h.b16 %v2168
    %v2220 = vunpack.c.l.b16 %v2169
    %v2221 = vunpack.c.h.b16 %v2169
    %v2222 = vunpack.c.l.b16 %v2170
    %v2223 = vunpack.c.h.b16 %v2170
    %v2224 = vunpack.c.l.b16 %v2171
    %v2225 = vunpack.c.h.b16 %v2171
    %v2226 = vunpack.c.l.b16 %v2172
    %v2227 = vunpack.c.h.b16 %v2172
    %v2228 = vunpack.c.l.b16 %v2173
    %v2229 = vunpack.c.h.b16 %v2173
    %v2230 = vunpack.c.l.b16 %v2174
    %v2231 = vunpack.c.h.b16 %v2174
    %v2232 = vunpack.c.l.b16 %v2175
    %v2233 = vunpack.c.h.b16 %v2175
    %v2234 = vpack.c.b16 %v2220, %v2218
    %v2235 = vpack.c.b16 %v2221, %v2219
    %v2236 = vpack.c.b16 %v2224, %v2222
    %v2237 = vpack.c.b16 %v2225, %v2223
    %v2238 = vpack.c.b16 %v2228, %v2226
    %v2239 = vpack.c.b16 %v2229, %v2227
    %v2240 = vpack.c.b16 %v2232, %v2230
    %v2241 = vpack.c.b16 %v2233, %v2231
    %2250 = vmatprep.subr.bf16.mxu0 %v2235
    %2251 = vmatpush1.bf16.msra.mxu0 %v2234
    %2252 = vmatprep.subr.bf16.mxu0 %v2237
    %2253 = vmatpush1.bf16.msra.mxu0 %v2236
    %2254 = vmatprep.subr.bf16.mxu0 %v2239
    %2255 = vmatpush1.bf16.msra.mxu0 %v2238
    %2256 = vmatprep.subr.bf16.mxu0 %v2241
    %2257 = vmatpush1.bf16.msra.mxu0 %v2240
    %2258 = vmatprep.subr.bf16.mxu0 0
    %2259 = vmatpush1.bf16.msra.mxu0 0
    %2260 = vmatprep.subr.bf16.mxu0 0
    %2261 = vmatpush1.bf16.msra.mxu0 0
    %2262 = vmatprep.subr.bf16.mxu0 0
    %2263 = vmatpush1.bf16.msra.mxu0 0
    %2264 = vmatprep.subr.bf16.mxu0 0
    %2265 = vmatpush1.bf16.msra.mxu0 0
    %2266 = vmatprep.subr.bf16.mxu0 0
    %2267 = vmatpush1.bf16.msra.mxu0 0
    %2268 = vmatprep.subr.bf16.mxu0 0
    %2269 = vmatpush1.bf16.msra.mxu0 0
    %2270 = vmatprep.subr.bf16.mxu0 0
    %2271 = vmatpush1.bf16.msra.mxu0 0
    %2272 = vmatprep.subr.bf16.mxu0 0
    %2273 = vmatpush1.bf16.msra.mxu0 0
    %2274 = vmatprep.subr.bf16.mxu0 0
    %2275 = vmatpush1.bf16.msra.mxu0 0
    %2276 = vmatprep.subr.bf16.mxu0 0
    %2277 = vmatpush1.bf16.msra.mxu0 0
    %2278 = vmatprep.subr.bf16.mxu0 0
    %2279 = vmatpush1.bf16.msra.mxu0 0
    %2280 = vmatprep.subr.bf16.mxu0 0
    %2281 = vmatpush1.bf16.msra.mxu0 0
    %2282 = vmatprep.mubr.bf16.mxu0 0
    %2283 = vmatmul.mubr.bf16.gmra.mrb[0].mxu0 %v333
    %v2284 = vpop.f32.mrb[0].mxu0
    %v2285 = vadd.f32 0.0, %v2284
    %v2286 = vpop.f32.mrb[0].mxu0
    %v2287 = vadd.f32 0.0, %v2286
    %v2288 = vpop.f32.mrb[0].mxu0
    %v2289 = vpop.f32.mrb[0].mxu0
    %2290 = vdwg.mxu0
    %v2291 = vadd.f32 %v2208, %v2285
    %v2292 = vadd.f32 %v2209, %v2287
    %v2293 = vtanh.pop %v2291
    %v2294 = vtanh.pop %v2292
    %v2295 = vmul.f32 %v2293, %v100
    %v2296 = vmul.f32 %v2294, %v101
    %v2297 = vadd.f32 %v2295, %v102
    %v2298 = vadd.f32 %v2296, %v103
    %v2299 = vmul.f32 %v2297, 0.0
    %v2300 = vmul.f32 %v2297, %v2298
    %2302 = vrot.lane.b32.xlu0 %v2300, 64
    %v2303 = vpop.permute.xlu0 %2302
    %v2305 = vadd.f32 %v2299, %v2303
    %v2306 = vtanh.pop %v2305
    %v2307 = vmul.f32 %v2298, %v2306
    %2309 = vrot.lane.b32.xlu0 %v2307, 64
    %v2310 = vpop.permute.xlu0 %2309
    %2312 = vst.msk [vmem:[#allocation3] sm:$0xff] %vm397, %v2310
    %2313 = vrot.lane.b32.xlu0 %v2307, 32
    %v2314 = vpop.permute.xlu0 %2313
    %2316 = vst.msk [vmem:[#allocation4 + $0x38] sm:$0xff] %vm397, %v2314
    %v2317 = vld [vmem:[#allocation2 + $0x10] sm:$0xff]
    %v2318 = vld [vmem:[#allocation2 + $0x18] sm:$0xff]
    %v2319 = vpack.c.bf16 %v2307, %v2307
    %2321 = vrot.lane.b32.xlu0 %v2319, 64
    %v2322 = vpop.permute.xlu0 %2321
    %v2324 = vsel %vm331, %v2322, 0
    %2326 = vmatprep.subr.bf16.mxu0 %v2235
    %2327 = vmatpush1.bf16.msra.mxu0 %v2234
    %2328 = vmatprep.subr.bf16.mxu0 %v2237
    %2329 = vmatpush1.bf16.msra.mxu0 %v2236
    %2330 = vmatprep.subr.bf16.mxu0 %v2239
    %2331 = vmatpush1.bf16.msra.mxu0 %v2238
    %2332 = vmatprep.subr.bf16.mxu0 %v2241
    %2333 = vmatpush1.bf16.msra.mxu0 %v2240
    %2334 = vmatprep.subr.bf16.mxu0 0
    %2335 = vmatpush1.bf16.msra.mxu0 0
    %2336 = vmatprep.subr.bf16.mxu0 0
    %2337 = vmatpush1.bf16.msra.mxu0 0
    %2338 = vmatprep.subr.bf16.mxu0 0
    %2339 = vmatpush1.bf16.msra.mxu0 0
    %2340 = vmatprep.subr.bf16.mxu0 0
    %2341 = vmatpush1.bf16.msra.mxu0 0
    %2342 = vmatprep.subr.bf16.mxu0 0
    %2343 = vmatpush1.bf16.msra.mxu0 0
    %2344 = vmatprep.subr.bf16.mxu0 0
    %2345 = vmatpush1.bf16.msra.mxu0 0
    %2346 = vmatprep.subr.bf16.mxu0 0
    %2347 = vmatpush1.bf16.msra.mxu0 0
    %2348 = vmatprep.subr.bf16.mxu0 0
    %2349 = vmatpush1.bf16.msra.mxu0 0
    %2350 = vmatprep.subr.bf16.mxu0 0
    %2351 = vmatpush1.bf16.msra.mxu0 0
    %2352 = vmatprep.subr.bf16.mxu0 0
    %2353 = vmatpush1.bf16.msra.mxu0 0
    %2354 = vmatprep.subr.bf16.mxu0 0
    %2355 = vmatpush1.bf16.msra.mxu0 0
    %2356 = vmatprep.subr.bf16.mxu0 0
    %2357 = vmatpush1.bf16.msra.mxu0 0
    %2358 = vmatprep.mubr.bf16.mxu0 0
    %2359 = vmatmul.mubr.bf16.gmra.mrb[0].mxu0 %v2324
    %v2360 = vpop.f32.mrb[0].mxu0
    %v2361 = vadd.f32 0.0, %v2360
    %v2362 = vpop.f32.mrb[0].mxu0
    %v2363 = vadd.f32 0.0, %v2362
    %v2364 = vpop.f32.mrb[0].mxu0
    %v2365 = vpop.f32.mrb[0].mxu0
    %2366 = vdwg.mxu0
    %v2367 = vadd.f32 %v2317, %v2361
    %v2368 = vadd.f32 %v2318, %v2363
    %v2369 = vtanh.pop %v2367
    %v2370 = vtanh.pop %v2368
    %v2371 = vmul.f32 %v2369, %v100
    %v2372 = vmul.f32 %v2370, %v101
    %v2373 = vadd.f32 %v2371, %v102
    %v2374 = vadd.f32 %v2372, %v103
    %v2375 = vmul.f32 %v2373, %v2305
    %v2376 = vmul.f32 %v2373, %v2374
    %2378 = vrot.lane.b32.xlu0 %v2376, 64
    %v2379 = vpop.permute.xlu0 %2378
    %v2381 = vadd.f32 %v2375, %v2379
    %v2382 = vtanh.pop %v2381
    %v2383 = vmul.f32 %v2374, %v2382
    %2385 = vrot.lane.b32.xlu0 %v2383, 64
    %v2386 = vpop.permute.xlu0 %2385
    %2388 = vst.msk [vmem:[#allocation3 + $0x8] sm:$0xff] %vm397, %v2386
    %2389 = vrot.lane.b32.xlu0 %v2383, 32
    %v2390 = vpop.permute.xlu0 %2389
    %2392 = vst.msk [vmem:[#allocation4 + $0x30] sm:$0xff] %vm397, %v2390
    %v2393 = vld [vmem:[#allocation2 + $0x20] sm:$0xff]
    %v2394 = vld [vmem:[#allocation2 + $0x28] sm:$0xff]
    %v2395 = vpack.c.bf16 %v2383, %v2383
    %2397 = vrot.lane.b32.xlu0 %v2395, 64
    %v2398 = vpop.permute.xlu0 %2397
    %v2400 = vsel %vm331, %v2398, 0
    %2402 = vmatprep.subr.bf16.mxu0 %v2235
    %2403 = vmatpush1.bf16.msra.mxu0 %v2234
    %2404 = vmatprep.subr.bf16.mxu0 %v2237
    %2405 = vmatpush1.bf16.msra.mxu0 %v2236
    %2406 = vmatprep.subr.bf16.mxu0 %v2239
    %2407 = vmatpush1.bf16.msra.mxu0 %v2238
    %2408 = vmatprep.subr.bf16.mxu0 %v2241
    %2409 = vmatpush1.bf16.msra.mxu0 %v2240
    %2410 = vmatprep.subr.bf16.mxu0 0
    %2411 = vmatpush1.bf16.msra.mxu0 0
    %2412 = vmatprep.subr.bf16.mxu0 0
    %2413 = vmatpush1.bf16.msra.mxu0 0
    %2414 = vmatprep.subr.bf16.mxu0 0
    %2415 = vmatpush1.bf16.msra.mxu0 0
    %2416 = vmatprep.subr.bf16.mxu0 0
    %2417 = vmatpush1.bf16.msra.mxu0 0
    %2418 = vmatprep.subr.bf16.mxu0 0
    %2419 = vmatpush1.bf16.msra.mxu0 0
    %2420 = vmatprep.subr.bf16.mxu0 0
    %2421 = vmatpush1.bf16.msra.mxu0 0
    %2422 = vmatprep.subr.bf16.mxu0 0
    %2423 = vmatpush1.bf16.msra.mxu0 0
    %2424 = vmatprep.subr.bf16.mxu0 0
    %2425 = vmatpush1.bf16.msra.mxu0 0
    %2426 = vmatprep.subr.bf16.mxu0 0
    %2427 = vmatpush1.bf16.msra.mxu0 0
    %2428 = vmatprep.subr.bf16.mxu0 0
    %2429 = vmatpush1.bf16.msra.mxu0 0
    %2430 = vmatprep.subr.bf16.mxu0 0
    %2431 = vmatpush1.bf16.msra.mxu0 0
    %2432 = vmatprep.subr.bf16.mxu0 0
    %2433 = vmatpush1.bf16.msra.mxu0 0
    %2434 = vmatprep.mubr.bf16.mxu0 0
    %2435 = vmatmul.mubr.bf16.gmra.mrb[0].mxu0 %v2400
    %v2436 = vpop.f32.mrb[0].mxu0
    %v2437 = vadd.f32 0.0, %v2436
    %v2438 = vpop.f32.mrb[0].mxu0
    %v2439 = vadd.f32 0.0, %v2438
    %v2440 = vpop.f32.mrb[0].mxu0
    %v2441 = vpop.f32.mrb[0].mxu0
    %2442 = vdwg.mxu0
    %v2443 = vadd.f32 %v2393, %v2437
    %v2444 = vadd.f32 %v2394, %v2439
    %v2445 = vtanh.pop %v2443
    %v2446 = vtanh.pop %v2444
    %v2447 = vmul.f32 %v2445, %v100
    %v2448 = vmul.f32 %v2446, %v101
    %v2449 = vadd.f32 %v2447, %v102
    %v2450 = vadd.f32 %v2448, %v103
    %v2451 = vmul.f32 %v2449, %v2381
    %v2452 = vmul.f32 %v2449, %v2450
    %2454 = vrot.lane.b32.xlu0 %v2452, 64
    %v2455 = vpop.permute.xlu0 %2454
    %v2457 = vadd.f32 %v2451, %v2455
    %v2458 = vtanh.pop %v2457
    %v2459 = vmul.f32 %v2450, %v2458
    %2461 = vrot.lane.b32.xlu0 %v2459, 64
    %v2462 = vpop.permute.xlu0 %2461
    %2464 = vst.msk [vmem:[#allocation3 + $0x10] sm:$0xff] %vm397, %v2462
    %2465 = vrot.lane.b32.xlu0 %v2459, 32
    %v2466 = vpop.permute.xlu0 %2465
    %2468 = vst.msk [vmem:[#allocation4 + $0x28] sm:$0xff] %vm397, %v2466
    %v2469 = vld [vmem:[#allocation2 + $0x30] sm:$0xff]
    %v2470 = vld [vmem:[#allocation2 + $0x38] sm:$0xff]
    %v2471 = vpack.c.bf16 %v2459, %v2459
    %2473 = vrot.lane.b32.xlu0 %v2471, 64
    %v2474 = vpop.permute.xlu0 %2473
    %v2476 = vsel %vm331, %v2474, 0
    %2478 = vmatprep.subr.bf16.mxu0 %v2235
    %2479 = vmatpush1.bf16.msra.mxu0 %v2234
    %2480 = vmatprep.subr.bf16.mxu0 %v2237
    %2481 = vmatpush1.bf16.msra.mxu0 %v2236
    %2482 = vmatprep.subr.bf16.mxu0 %v2239
    %2483 = vmatpush1.bf16.msra.mxu0 %v2238
    %2484 = vmatprep.subr.bf16.mxu0 %v2241
    %2485 = vmatpush1.bf16.msra.mxu0 %v2240
    %2486 = vmatprep.subr.bf16.mxu0 0
    %2487 = vmatpush1.bf16.msra.mxu0 0
    %2488 = vmatprep.subr.bf16.mxu0 0
    %2489 = vmatpush1.bf16.msra.mxu0 0
    %2490 = vmatprep.subr.bf16.mxu0 0
    %2491 = vmatpush1.bf16.msra.mxu0 0
    %2492 = vmatprep.subr.bf16.mxu0 0
    %2493 = vmatpush1.bf16.msra.mxu0 0
    %2494 = vmatprep.subr.bf16.mxu0 0
    %2495 = vmatpush1.bf16.msra.mxu0 0
    %2496 = vmatprep.subr.bf16.mxu0 0
    %2497 = vmatpush1.bf16.msra.mxu0 0
    %2498 = vmatprep.subr.bf16.mxu0 0
    %2499 = vmatpush1.bf16.msra.mxu0 0
    %2500 = vmatprep.subr.bf16.mxu0 0
    %2501 = vmatpush1.bf16.msra.mxu0 0
    %2502 = vmatprep.subr.bf16.mxu0 0
    %2503 = vmatpush1.bf16.msra.mxu0 0
    %2504 = vmatprep.subr.bf16.mxu0 0
    %2505 = vmatpush1.bf16.msra.mxu0 0
    %2506 = vmatprep.subr.bf16.mxu0 0
    %2507 = vmatpush1.bf16.msra.mxu0 0
    %2508 = vmatprep.subr.bf16.mxu0 0
    %2509 = vmatpush1.bf16.msra.mxu0 0
    %2510 = vmatprep.mubr.bf16.mxu0 0
    %2511 = vmatmul.mubr.bf16.gmra.mrb[0].mxu0 %v2476
    %v2512 = vpop.f32.mrb[0].mxu0
    %v2513 = vadd.f32 0.0, %v2512
    %v2514 = vpop.f32.mrb[0].mxu0
    %v2515 = vadd.f32 0.0, %v2514
    %v2516 = vpop.f32.mrb[0].mxu0
    %v2517 = vpop.f32.mrb[0].mxu0
    %2518 = vdwg.mxu0
    %v2519 = vadd.f32 %v2469, %v2513
    %v2520 = vadd.f32 %v2470, %v2515
    %v2521 = vtanh.pop %v2519
    %v2522 = vtanh.pop %v2520
    %v2523 = vmul.f32 %v2521, %v100
    %v2524 = vmul.f32 %v2522, %v101
    %v2525 = vadd.f32 %v2523, %v102
    %v2526 = vadd.f32 %v2524, %v103
    %v2527 = vmul.f32 %v2525, %v2457
    %v2528 = vmul.f32 %v2525, %v2526
    %2530 = vrot.lane.b32.xlu0 %v2528, 64
    %v2531 = vpop.permute.xlu0 %2530
    %v2533 = vadd.f32 %v2527, %v2531
    %v2534 = vtanh.pop %v2533
    %v2535 = vmul.f32 %v2526, %v2534
    %2537 = vrot.lane.b32.xlu0 %v2535, 64
    %v2538 = vpop.permute.xlu0 %2537
    %2540 = vst.msk [vmem:[#allocation3 + $0x18] sm:$0xff] %vm397, %v2538
    %2541 = vrot.lane.b32.xlu0 %v2535, 32
    %v2542 = vpop.permute.xlu0 %2541
    %2544 = vst.msk [vmem:[#allocation4 + $0x20] sm:$0xff] %vm397, %v2542
    %v2545 = vld [vmem:[#allocation2 + $0x40] sm:$0xff]
    %v2546 = vld [vmem:[#allocation2 + $0x48] sm:$0xff]
    %v2547 = vpack.c.bf16 %v2535, %v2535
    %2549 = vrot.lane.b32.xlu0 %v2547, 64
    %v2550 = vpop.permute.xlu0 %2549
    %v2552 = vsel %vm331, %v2550, 0
    %2554 = vmatprep.subr.bf16.mxu0 %v2235
    %2555 = vmatpush1.bf16.msra.mxu0 %v2234
    %2556 = vmatprep.subr.bf16.mxu0 %v2237
    %2557 = vmatpush1.bf16.msra.mxu0 %v2236
    %2558 = vmatprep.subr.bf16.mxu0 %v2239
    %2559 = vmatpush1.bf16.msra.mxu0 %v2238
    %2560 = vmatprep.subr.bf16.mxu0 %v2241
    %2561 = vmatpush1.bf16.msra.mxu0 %v2240
    %2562 = vmatprep.subr.bf16.mxu0 0
    %2563 = vmatpush1.bf16.msra.mxu0 0
    %2564 = vmatprep.subr.bf16.mxu0 0
    %2565 = vmatpush1.bf16.msra.mxu0 0
    %2566 = vmatprep.subr.bf16.mxu0 0
    %2567 = vmatpush1.bf16.msra.mxu0 0
    %2568 = vmatprep.subr.bf16.mxu0 0
    %2569 = vmatpush1.bf16.msra.mxu0 0
    %2570 = vmatprep.subr.bf16.mxu0 0
    %2571 = vmatpush1.bf16.msra.mxu0 0
    %2572 = vmatprep.subr.bf16.mxu0 0
    %2573 = vmatpush1.bf16.msra.mxu0 0
    %2574 = vmatprep.subr.bf16.mxu0 0
    %2575 = vmatpush1.bf16.msra.mxu0 0
    %2576 = vmatprep.subr.bf16.mxu0 0
    %2577 = vmatpush1.bf16.msra.mxu0 0
    %2578 = vmatprep.subr.bf16.mxu0 0
    %2579 = vmatpush1.bf16.msra.mxu0 0
    %2580 = vmatprep.subr.bf16.mxu0 0
    %2581 = vmatpush1.bf16.msra.mxu0 0
    %2582 = vmatprep.subr.bf16.mxu0 0
    %2583 = vmatpush1.bf16.msra.mxu0 0
    %2584 = vmatprep.subr.bf16.mxu0 0
    %2585 = vmatpush1.bf16.msra.mxu0 0
    %2586 = vmatprep.mubr.bf16.mxu0 0
    %2587 = vmatmul.mubr.bf16.gmra.mrb[0].mxu0 %v2552
    %v2588 = vpop.f32.mrb[0].mxu0
    %v2589 = vadd.f32 0.0, %v2588
    %v2590 = vpop.f32.mrb[0].mxu0
    %v2591 = vadd.f32 0.0, %v2590
    %v2592 = vpop.f32.mrb[0].mxu0
    %v2593 = vpop.f32.mrb[0].mxu0
    %2594 = vdwg.mxu0
    %v2595 = vadd.f32 %v2545, %v2589
    %v2596 = vadd.f32 %v2546, %v2591
    %v2597 = vtanh.pop %v2595
    %v2598 = vtanh.pop %v2596
    %v2599 = vmul.f32 %v2597, %v100
    %v2600 = vmul.f32 %v2598, %v101
    %v2601 = vadd.f32 %v2599, %v102
    %v2602 = vadd.f32 %v2600, %v103
    %v2603 = vmul.f32 %v2601, %v2533
    %v2604 = vmul.f32 %v2601, %v2602
    %2606 = vrot.lane.b32.xlu0 %v2604, 64
    %v2607 = vpop.permute.xlu0 %2606
    %v2609 = vadd.f32 %v2603, %v2607
    %v2610 = vtanh.pop %v2609
    %v2611 = vmul.f32 %v2602, %v2610
    %2613 = vrot.lane.b32.xlu0 %v2611, 64
    %v2614 = vpop.permute.xlu0 %2613
    %2616 = vst.msk [vmem:[#allocation3 + $0x20] sm:$0xff] %vm397, %v2614
    %2617 = vrot.lane.b32.xlu0 %v2611, 32
    %v2618 = vpop.permute.xlu0 %2617
    %2620 = vst.msk [vmem:[#allocation4 + $0x18] sm:$0xff] %vm397, %v2618
    %v2621 = vld [vmem:[#allocation2 + $0x50] sm:$0xff]
    %v2622 = vld [vmem:[#allocation2 + $0x58] sm:$0xff]
    %v2623 = vpack.c.bf16 %v2611, %v2611
    %2625 = vrot.lane.b32.xlu0 %v2623, 64
    %v2626 = vpop.permute.xlu0 %2625
    %v2628 = vsel %vm331, %v2626, 0
    %2630 = vmatprep.subr.bf16.mxu0 %v2235
    %2631 = vmatpush1.bf16.msra.mxu0 %v2234
    %2632 = vmatprep.subr.bf16.mxu0 %v2237
    %2633 = vmatpush1.bf16.msra.mxu0 %v2236
    %2634 = vmatprep.subr.bf16.mxu0 %v2239
    %2635 = vmatpush1.bf16.msra.mxu0 %v2238
    %2636 = vmatprep.subr.bf16.mxu0 %v2241
    %2637 = vmatpush1.bf16.msra.mxu0 %v2240
    %2638 = vmatprep.subr.bf16.mxu0 0
    %2639 = vmatpush1.bf16.msra.mxu0 0
    %2640 = vmatprep.subr.bf16.mxu0 0
    %2641 = vmatpush1.bf16.msra.mxu0 0
    %2642 = vmatprep.subr.bf16.mxu0 0
    %2643 = vmatpush1.bf16.msra.mxu0 0
    %2644 = vmatprep.subr.bf16.mxu0 0
    %2645 = vmatpush1.bf16.msra.mxu0 0
    %2646 = vmatprep.subr.bf16.mxu0 0
    %2647 = vmatpush1.bf16.msra.mxu0 0
    %2648 = vmatprep.subr.bf16.mxu0 0
    %2649 = vmatpush1.bf16.msra.mxu0 0
    %2650 = vmatprep.subr.bf16.mxu0 0
    %2651 = vmatpush1.bf16.msra.mxu0 0
    %2652 = vmatprep.subr.bf16.mxu0 0
    %2653 = vmatpush1.bf16.msra.mxu0 0
    %2654 = vmatprep.subr.bf16.mxu0 0
    %2655 = vmatpush1.bf16.msra.mxu0 0
    %2656 = vmatprep.subr.bf16.mxu0 0
    %2657 = vmatpush1.bf16.msra.mxu0 0
    %2658 = vmatprep.subr.bf16.mxu0 0
    %2659 = vmatpush1.bf16.msra.mxu0 0
    %2660 = vmatprep.subr.bf16.mxu0 0
    %2661 = vmatpush1.bf16.msra.mxu0 0
    %2662 = vmatprep.mubr.bf16.mxu0 0
    %2663 = vmatmul.mubr.bf16.gmra.mrb[0].mxu0 %v2628
    %v2664 = vpop.f32.mrb[0].mxu0
    %v2665 = vadd.f32 0.0, %v2664
    %v2666 = vpop.f32.mrb[0].mxu0
    %v2667 = vadd.f32 0.0, %v2666
    %v2668 = vpop.f32.mrb[0].mxu0
    %v2669 = vpop.f32.mrb[0].mxu0
    %2670 = vdwg.mxu0
    %v2671 = vadd.f32 %v2621, %v2665
    %v2672 = vadd.f32 %v2622, %v2667
    %v2673 = vtanh.pop %v2671
    %v2674 = vtanh.pop %v2672
    %v2675 = vmul.f32 %v2673, %v100
    %v2676 = vmul.f32 %v2674, %v101
    %v2677 = vadd.f32 %v2675, %v102
    %v2678 = vadd.f32 %v2676, %v103
    %v2679 = vmul.f32 %v2677, %v2609
    %v2680 = vmul.f32 %v2677, %v2678
    %2682 = vrot.lane.b32.xlu0 %v2680, 64
    %v2683 = vpop.permute.xlu0 %2682
    %v2685 = vadd.f32 %v2679, %v2683
    %v2686 = vtanh.pop %v2685
    %v2687 = vmul.f32 %v2678, %v2686
    %2689 = vrot.lane.b32.xlu0 %v2687, 64
    %v2690 = vpop.permute.xlu0 %2689
    %2692 = vst.msk [vmem:[#allocation3 + $0x28] sm:$0xff] %vm397, %v2690
    %2693 = vrot.lane.b32.xlu0 %v2687, 32
    %v2694 = vpop.permute.xlu0 %2693
    %2696 = vst.msk [vmem:[#allocation4 + $0x10] sm:$0xff] %vm397, %v2694
    %v2697 = vld [vmem:[#allocation2 + $0x60] sm:$0xff]
    %v2698 = vld [vmem:[#allocation2 + $0x68] sm:$0xff]
    %v2699 = vpack.c.bf16 %v2687, %v2687
    %2701 = vrot.lane.b32.xlu0 %v2699, 64
    %v2702 = vpop.permute.xlu0 %2701
    %v2704 = vsel %vm331, %v2702, 0
    %2706 = vmatprep.subr.bf16.mxu0 %v2235
    %2707 = vmatpush1.bf16.msra.mxu0 %v2234
    %2708 = vmatprep.subr.bf16.mxu0 %v2237
    %2709 = vmatpush1.bf16.msra.mxu0 %v2236
    %2710 = vmatprep.subr.bf16.mxu0 %v2239
    %2711 = vmatpush1.bf16.msra.mxu0 %v2238
    %2712 = vmatprep.subr.bf16.mxu0 %v2241
    %2713 = vmatpush1.bf16.msra.mxu0 %v2240
    %2714 = vmatprep.subr.bf16.mxu0 0
    %2715 = vmatpush1.bf16.msra.mxu0 0
    %2716 = vmatprep.subr.bf16.mxu0 0
    %2717 = vmatpush1.bf16.msra.mxu0 0
    %2718 = vmatprep.subr.bf16.mxu0 0
    %2719 = vmatpush1.bf16.msra.mxu0 0
    %2720 = vmatprep.subr.bf16.mxu0 0
    %2721 = vmatpush1.bf16.msra.mxu0 0
    %2722 = vmatprep.subr.bf16.mxu0 0
    %2723 = vmatpush1.bf16.msra.mxu0 0
    %2724 = vmatprep.subr.bf16.mxu0 0
    %2725 = vmatpush1.bf16.msra.mxu0 0
    %2726 = vmatprep.subr.bf16.mxu0 0
    %2727 = vmatpush1.bf16.msra.mxu0 0
    %2728 = vmatprep.subr.bf16.mxu0 0
    %2729 = vmatpush1.bf16.msra.mxu0 0
    %2730 = vmatprep.subr.bf16.mxu0 0
    %2731 = vmatpush1.bf16.msra.mxu0 0
    %2732 = vmatprep.subr.bf16.mxu0 0
    %2733 = vmatpush1.bf16.msra.mxu0 0
    %2734 = vmatprep.subr.bf16.mxu0 0
    %2735 = vmatpush1.bf16.msra.mxu0 0
    %2736 = vmatprep.subr.bf16.mxu0 0
    %2737 = vmatpush1.bf16.msra.mxu0 0
    %2738 = vmatprep.mubr.bf16.mxu0 0
    %2739 = vmatmul.mubr.bf16.gmra.mrb[0].mxu0 %v2704
    %v2740 = vpop.f32.mrb[0].mxu0
    %v2741 = vadd.f32 0.0, %v2740
    %v2742 = vpop.f32.mrb[0].mxu0
    %v2743 = vadd.f32 0.0, %v2742
    %v2744 = vpop.f32.mrb[0].mxu0
    %v2745 = vpop.f32.mrb[0].mxu0
    %2746 = vdwg.mxu0
    %v2747 = vadd.f32 %v2697, %v2741
    %v2748 = vadd.f32 %v2698, %v2743
    %v2749 = vtanh.pop %v2747
    %v2750 = vtanh.pop %v2748
    %v2751 = vmul.f32 %v2749, %v100
    %v2752 = vmul.f32 %v2750, %v101
    %v2753 = vadd.f32 %v2751, %v102
    %v2754 = vadd.f32 %v2752, %v103
    %v2755 = vmul.f32 %v2753, %v2685
    %v2756 = vmul.f32 %v2753, %v2754
    %2758 = vrot.lane.b32.xlu0 %v2756, 64
    %v2759 = vpop.permute.xlu0 %2758
    %v2761 = vadd.f32 %v2755, %v2759
    %v2762 = vtanh.pop %v2761
    %v2763 = vmul.f32 %v2754, %v2762
    %2765 = vrot.lane.b32.xlu0 %v2763, 64
    %v2766 = vpop.permute.xlu0 %2765
    %2768 = vst.msk [vmem:[#allocation3 + $0x30] sm:$0xff] %vm397, %v2766
    %2769 = vrot.lane.b32.xlu0 %v2763, 32
    %v2770 = vpop.permute.xlu0 %2769
    %2772 = vst.msk [vmem:[#allocation4 + $0x8] sm:$0xff] %vm397, %v2770
    %v2773 = vld [vmem:[#allocation2 + $0x70] sm:$0xff]
    %v2774 = vld [vmem:[#allocation2 + $0x78] sm:$0xff]
    %v2775 = vpack.c.bf16 %v2763, %v2763
    %2777 = vrot.lane.b32.xlu0 %v2775, 64
    %v2778 = vpop.permute.xlu0 %2777
    %v2780 = vsel %vm331, %v2778, 0
    %2782 = vmatprep.subr.bf16.mxu0 %v2235
    %2783 = vmatpush1.bf16.msra.mxu0 %v2234
    %2784 = vmatprep.subr.bf16.mxu0 %v2237
    %2785 = vmatpush1.bf16.msra.mxu0 %v2236
    %2786 = vmatprep.subr.bf16.mxu0 %v2239
    %2787 = vmatpush1.bf16.msra.mxu0 %v2238
    %2788 = vmatprep.subr.bf16.mxu0 %v2241
    %2789 = vmatpush1.bf16.msra.mxu0 %v2240
    %2790 = vmatprep.subr.bf16.mxu0 0
    %2791 = vmatpush1.bf16.msra.mxu0 0
    %2792 = vmatprep.subr.bf16.mxu0 0
    %2793 = vmatpush1.bf16.msra.mxu0 0
    %2794 = vmatprep.subr.bf16.mxu0 0
    %2795 = vmatpush1.bf16.msra.mxu0 0
    %2796 = vmatprep.subr.bf16.mxu0 0
    %2797 = vmatpush1.bf16.msra.mxu0 0
    %2798 = vmatprep.subr.bf16.mxu0 0
    %2799 = vmatpush1.bf16.msra.mxu0 0
    %2800 = vmatprep.subr.bf16.mxu0 0
    %2801 = vmatpush1.bf16.msra.mxu0 0
    %2802 = vmatprep.subr.bf16.mxu0 0
    %2803 = vmatpush1.bf16.msra.mxu0 0
    %2804 = vmatprep.subr.bf16.mxu0 0
    %2805 = vmatpush1.bf16.msra.mxu0 0
    %2806 = vmatprep.subr.bf16.mxu0 0
    %2807 = vmatpush1.bf16.msra.mxu0 0
    %2808 = vmatprep.subr.bf16.mxu0 0
    %2809 = vmatpush1.bf16.msra.mxu0 0
    %2810 = vmatprep.subr.bf16.mxu0 0
    %2811 = vmatpush1.bf16.msra.mxu0 0
    %2812 = vmatprep.subr.bf16.mxu0 0
    %2813 = vmatpush1.bf16.msra.mxu0 0
    %2814 = vmatprep.mubr.bf16.mxu0 0
    %2815 = vmatmul.mubr.bf16.gmra.mrb[0].mxu0 %v2780
    %v2816 = vpop.f32.mrb[0].mxu0
    %v2817 = vadd.f32 0.0, %v2816
    %v2818 = vpop.f32.mrb[0].mxu0
    %v2819 = vadd.f32 0.0, %v2818
    %v2820 = vpop.f32.mrb[0].mxu0
    %v2821 = vpop.f32.mrb[0].mxu0
    %2822 = vdwg.mxu0
    %v2823 = vadd.f32 %v2773, %v2817
    %v2824 = vadd.f32 %v2774, %v2819
    %v2825 = vtanh.pop %v2823
    %v2826 = vtanh.pop %v2824
    %v2827 = vmul.f32 %v2825, %v100
    %v2828 = vmul.f32 %v2826, %v101
    %v2829 = vadd.f32 %v2827, %v102
    %v2830 = vadd.f32 %v2828, %v103
    %v2831 = vmul.f32 %v2829, %v2761
    %v2832 = vmul.f32 %v2829, %v2830
    %2834 = vrot.lane.b32.xlu0 %v2832, 64
    %v2835 = vpop.permute.xlu0 %2834
    %v2837 = vadd.f32 %v2831, %v2835
    %v2838 = vtanh.pop %v2837
    %v2839 = vmul.f32 %v2830, %v2838
    %2841 = vrot.lane.b32.xlu0 %v2839, 64
    %v2842 = vpop.permute.xlu0 %2841
    %2844 = vst.msk [vmem:[#allocation3 + $0x38] sm:$0xff] %vm397, %v2842
    %2845 = vrot.lane.b32.xlu0 %v2839, 32
    %v2846 = vpop.permute.xlu0 %2845
    %2848 = vst.msk [vmem:[#allocation4] sm:$0xff] %vm397, %v2846
    %v2849 = vld [vmem:[#allocation3 + $0x38] sm:$0xff]
    %v2850 = vld [vmem:[#allocation4 + $0x38] sm:$0xff]
    %v2851 = vadd.f32 %v2849, %v2850
    %v2852 = vmul.f32 %v2851, 0.5
    %v2853 = vlaneseq
    %v2854 = vshrl.u32 %v2853, 7
    %v2855 = vsub.s32 3, %v2854
    %v2856 = vrot.slane %v62, %v2855
    %v2857 = vmul.f32 %v2852, %v2856
    %v2858 = vsel %vm397, %v2857, 0.0
    %2859 = vadd.xlane.f32.xlu0 %v2858
    %v2860 = vpop.xlane.xlu0 %2859
    %v2861 = vadd.f32 %v2860, %v2856
    %2863 = vrot.lane.b32.xlu0 %v2861, 96
    %v2864 = vpop.permute.xlu0 %2863
    %vm2866 = vcmask 7168
    %2867 = vst.msk [vmem:[%s5] sm:$0xff] %vm2866, %v2864
    // Predicated region
    $region34: #{tpu_custom_call.1} parent=1 // pred_check
      _
    $region35: #{tpu_custom_call.1} parent=1 // pred_check_branch
      %2869 = sbr.rel (0) target = $region37
    $region36: #{tpu_custom_call.1} parent=1 // pred_region
      _
    $region37: #{tpu_custom_call.1} parent=1 // pred_fallthru
      _
    // Predicated region
    $region38: #{tpu_custom_call.1} parent=1 // pred_check
      _
    $region39: #{tpu_custom_call.1} parent=1 // pred_check_branch
      %2871 = sbr.rel (0) target = $region41
    $region40: #{tpu_custom_call.1} parent=1 // pred_region
      _
    $region41: #{tpu_custom_call.1} parent=1 // pred_fallthru
      _
    %2872 = vsyncpa [#allocation6], 1
    %2873 = vsyncpa [#allocation8], 1

</llo_original>
